<compile_context>
chip_gen: v6e
topology: v6e:2x2x1
jax: 0.10.0
libtpu: 0.0.40
codegen_flags: <defaults>
</compile_context>

<pallas_src>
import numpy as np
import jax
import jax.numpy as jnp
from jax import lax
from jax.experimental import pallas as pl
from jax.experimental.pallas import tpu as pltpu  # noqa: F401  (kept for parity / future tuning)

FEAT_DIM = 64
MASK_HID = 64            # hidden width of each per-instance mask head
MAX_INSTANCES = 20
N_POINTS = 128           # multiple of 128 keeps the (I, N) mask store fully lane-dense
HEAD_OUT = 128           # fused centroid+bbox output slab width (lane-dense)

# lane offsets inside row 2 of the f32 "misc" slab (128-aligned where easy)
_B1_OFF, _B2_OFF, _B3_OFF = 0, 128, 256
_BCB1_OFF, _BCB2_OFF = 384, 640


# ----------------------------------------------------------------------------
# Fused kernel: backbone MLP + batched mask heads + fused centroid/bbox heads
# ----------------------------------------------------------------------------
def _fused_kernel(pc_ref, misc_ref, wm1_ref, w2_ref, w3_ref, wcb1_ref, wcb2_ref,
                  mask_ref, head_ref):
    f32 = jnp.float32
    n_inst = mask_ref.shape[0]          # static (= max_instances)
    ic = wm1_ref.shape[1]               # n_inst * MASK_HID

    # ---- backbone layer 1 (K=3): 3 broadcast FMAs on the VPU (no MXU load) ----
    x1 = (pc_ref[:, 0:1] * misc_ref[4:5, 0:FEAT_DIM]
          + pc_ref[:, 1:2] * misc_ref[5:6, 0:FEAT_DIM]
          + pc_ref[:, 2:3] * misc_ref[6:7, 0:FEAT_DIM]
          + misc_ref[2:3, _B1_OFF:_B1_OFF + 64])
    x1 = jnp.maximum(x1, 0.0)                                              # (N, 64)

    # ---- backbone layers 2-3 on the MXU (bf16 weights -> f32 in-register) ----
    x2 = jnp.dot(x1, w2_ref[...].astype(f32), preferred_element_type=f32) \
        + misc_ref[2:3, _B2_OFF:_B2_OFF + 128]
    x2 = jnp.maximum(x2, 0.0)                                              # (N, 128)
    feats = jnp.dot(x2, w3_ref[...].astype(f32), preferred_element_type=f32) \
        + misc_ref[2:3, _B3_OFF:_B3_OFF + FEAT_DIM]                        # (N, 64)
    # torch also computes global_feat = max(features, dim=0) but never uses it -> dropped.

    # ---- all mask heads, layer 1 batched: (N,64) @ (64, I*64) ----
    h = jnp.dot(feats, wm1_ref[...].astype(f32), preferred_element_type=f32) \
        + misc_ref[0:1, :]
    h = jnp.maximum(h, 0.0)                                                # (N, I*64)

    # ---- mask layer 2: block-diagonal selection built in-kernel from the
    #      compact (1, I*64) wm2 row via iota masks (no 640 KiB HBM operand),
    #      NT-contracted against h -> logits directly lane-dense (I, N). ----
    col = lax.broadcasted_iota(jnp.int32, (n_inst, ic), 1)
    row0 = lax.broadcasted_iota(jnp.int32, (n_inst, ic), 0) * MASK_HID
    sel = (col >= row0) & (col < row0 + MASK_HID)                          # (I, I*64)
    sel_w = jnp.where(sel, jnp.broadcast_to(misc_ref[1:2, :], (n_inst, ic)), 0.0)
    bm2 = jnp.sum(
        jnp.where(sel, jnp.broadcast_to(misc_ref[3:4, :], (n_inst, ic)), 0.0),
        axis=1, keepdims=True)                                             # (I, 1)
    logits = lax.dot_general(sel_w, h, (((1,), (1,)), ((), ())),
                             preferred_element_type=f32) + bm2             # (I, N)
    mask_ref[...] = logits                                                 # full-lane stores

    # ---- soft-mask weighted feature pooling, all instances at once ----
    sig = jax.nn.sigmoid(logits)                                           # (I, N)
    denom = jnp.sum(sig, axis=1, keepdims=True) + 1e-6                     # (I, 1)
    pooled = jnp.dot(sig, feats, preferred_element_type=f32)               # (I, 64)
    mf = pooled * pl.reciprocal(denom, approx=True)

    # ---- fused centroid + bbox heads -> one lane-dense (I, 128) output slab ----
    hcb = jnp.dot(mf, wcb1_ref[...].astype(f32), preferred_element_type=f32) \
        + misc_ref[2:3, _BCB1_OFF:_BCB1_OFF + 192]
    hcb = jnp.maximum(hcb, 0.0)                                            # (I, 192)
    head_ref[...] = jnp.dot(hcb, wcb2_ref[...].astype(f32),
                            preferred_element_type=f32) \
        + misc_ref[2:3, _BCB2_OFF:_BCB2_OFF + HEAD_OUT]                    # (I, 128)


# ----------------------------------------------------------------------------
# One-time host-side packing: bf16 MXU weights + a single f32 misc slab
# ----------------------------------------------------------------------------
def pack_params(p, max_instances=MAX_INSTANCES):
    ni = max_instances
    ic = ni * MASK_HID
    assert ic >= _BCB2_OFF + HEAD_OUT, "misc slab too narrow for bias layout"
    bf16 = jnp.bfloat16

    misc = np.zeros((8, ic), np.float32)
    misc[0, :] = np.asarray(p["bm1"]).reshape(ic)              # mask layer-1 biases
    misc[1, :] = np.asarray(p["wm2"]).reshape(ic)              # compact mask layer-2 weights
    misc[2, _B1_OFF:_B1_OFF + 64] = np.asarray(p["b1"])[0]
    misc[2, _B2_OFF:_B2_OFF + 128] = np.asarray(p["b2"])[0]
    misc[2, _B3_OFF:_B3_OFF + FEAT_DIM] = np.asarray(p["b3"])[0]
    misc[2, _BCB1_OFF:_BCB1_OFF + 64] = np.asarray(p["bc1"])[0]
    misc[2, _BCB1_OFF + 64:_BCB1_OFF + 192] = np.asarray(p["bb1"])[0]
    misc[2, _BCB2_OFF:_BCB2_OFF + 3] = np.asarray(p["bc2"])[0]
    misc[2, _BCB2_OFF + 3:_BCB2_OFF + 27] = np.asarray(p["bb2"])[0]
    misc[3, 0:ic:MASK_HID] = np.asarray(p["bm2"]).reshape(ni)  # bm2[i] at lane i*64
    misc[4:7, 0:FEAT_DIM] = np.asarray(p["w1"])                # (3, 64) first layer

    wm1_flat = jnp.transpose(p["wm1"], (1, 0, 2)).reshape(FEAT_DIM, ic)   # (64, I*64)

    wcb1 = jnp.concatenate([p["wc1"], p["wb1"]], axis=1)                  # (64, 192)
    wcb2 = np.zeros((192, HEAD_OUT), np.float32)
    wcb2[0:64, 0:3] = np.asarray(p["wc2"])                                # centroid cols 0:3
    wcb2[64:192, 3:27] = np.asarray(p["wb2"])                             # bbox cols 3:27

    return {
        "misc": jnp.asarray(misc),
        "wm1": wm1_flat.astype(bf16),
        "w2": p["w2"].astype(bf16),
        "w3": p["w3"].astype(bf16),
        "wcb1": wcb1.astype(bf16),
        "wcb2": jnp.asarray(wcb2).astype(bf16),
    }


# ----------------------------------------------------------------------------
# Forward (Pallas) -- single fused pallas_call, stacked outputs
# ----------------------------------------------------------------------------
def instance_pointnet_forward(pc, packed, max_instances=MAX_INSTANCES):
    n = pc.shape[0]
    assert n % 8 == 0, "point count must be a multiple of 8 (sublane tile)"
    mask, head = pl.pallas_call(
        _fused_kernel,
        out_shape=(
            jax.ShapeDtypeStruct((max_instances, n), jnp.float32),        # (I, N) logits
            jax.ShapeDtypeStruct((max_instances, HEAD_OUT), jnp.float32),  # [centroid|bbox|pad]
        ),
    )(pc, packed["misc"], packed["wm1"], packed["w2"], packed["w3"],
      packed["wcb1"], packed["wcb2"])
    return {
        "mask_logits": mask,                                    # (I, N)
        "centroids": head[:, 0:3],                              # (I, 3)
        "bboxes": head[:, 3:27].reshape(max_instances, 8, 3),   # (I, 8, 3)
    }


# ----------------------------------------------------------------------------
# Parameter init (deterministic, PyTorch nn.Linear-style uniform bounds)
# ----------------------------------------------------------------------------
def _init_linear(key, fan_in, fan_out):
    kw, kb = jax.random.split(key)
    bound = 1.0 / np.sqrt(fan_in)
    w = jax.random.uniform(kw, (fan_in, fan_out), jnp.float32, -bound, bound)
    b = jax.random.uniform(kb, (1, fan_out), jnp.float32, -bound, bound)
    return w, b


def init_params(key, feat_dim=FEAT_DIM, max_instances=MAX_INSTANCES):
    keys = jax.random.split(key, 7 + max_instances)
    p = {}
    p["w1"], p["b1"] = _init_linear(keys[0], 3, 64)
    p["w2"], p["b2"] = _init_linear(keys[1], 64, 128)
    p["w3"], p["b3"] = _init_linear(keys[2], 128, feat_dim)
    p["wc1"], p["bc1"] = _init_linear(keys[3], feat_dim, 64)
    p["wc2"], p["bc2"] = _init_linear(keys[4], 64, 3)
    p["wb1"], p["bb1"] = _init_linear(keys[5], feat_dim, 128)
    p["wb2"], p["bb2"] = _init_linear(keys[6], 128, 24)
    wm1, bm1, wm2, bm2 = [], [], [], []
    for i in range(max_instances):
        k1, k2 = jax.random.split(keys[7 + i])
        w, b = _init_linear(k1, feat_dim, MASK_HID); wm1.append(w); bm1.append(b)
        w, b = _init_linear(k2, MASK_HID, 1); wm2.append(w); bm2.append(b)
    p["wm1"] = jnp.stack(wm1)        # (I, D, 64)
    p["bm1"] = jnp.stack(bm1)        # (I, 1, 64)
    p["wm2"] = jnp.stack(wm2)        # (I, 64, 1)
    p["bm2"] = jnp.stack(bm2)        # (I, 1, 1)
    return p


# ----------------------------------------------------------------------------
# Pure-JAX reference (mirrors the PyTorch forward).  The kernel ships the MXU
# weights as bf16, so the reference uses the identical bf16-rounded values.
# ----------------------------------------------------------------------------
def _bf16w(w):
    return w.astype(jnp.bfloat16).astype(jnp.float32)


def reference_forward(pc, p, max_instances=MAX_INSTANCES):
    x = jax.nn.relu(pc @ p["w1"] + p["b1"])
    x = jax.nn.relu(x @ _bf16w(p["w2"]) + p["b2"])
    feats = x @ _bf16w(p["w3"]) + p["b3"]
    masks, cents, bboxes = [], [], []
    for i in range(max_instances):
        h = jax.nn.relu(feats @ _bf16w(p["wm1"][i]) + p["bm1"][i])
        logits = (h @ p["wm2"][i] + p["bm2"][i])[:, 0]
        sig = jax.nn.sigmoid(logits)
        mf = jnp.sum(feats * sig[:, None], axis=0, keepdims=True) / (jnp.sum(sig) + 1e-6)
        cent = jax.nn.relu(mf @ _bf16w(p["wc1"]) + p["bc1"]) @ _bf16w(p["wc2"]) + p["bc2"]
        bbox = jax.nn.relu(mf @ _bf16w(p["wb1"]) + p["bb1"]) @ _bf16w(p["wb2"]) + p["bb2"]
        masks.append(logits)
        cents.append(cent[0])
        bboxes.append(bbox.reshape(8, 3))
    return {"mask_logits": jnp.stack(masks),
            "centroids": jnp.stack(cents),
            "bboxes": jnp.stack(bboxes)}


if __name__ == "__main__":
    key = jax.random.PRNGKey(0)
    kp, kx = jax.random.split(key)
    params = init_params(kp)
    packed = pack_params(params)
    pc = jax.random.normal(kx, (N_POINTS, 3), jnp.float32)

    out = instance_pointnet_forward(pc, packed)
    jax.block_until_ready(out)

    ref = reference_forward(pc, params)
    for k in ("mask_logits", "centroids", "bboxes"):
        np.testing.assert_allclose(np.asarray(out[k]), np.asarray(ref[k]),
                                   rtol=2e-2, atol=1e-2)

    print("KERNEL_OK")
</pallas_src>

<mosaic_0001>
module attributes {stable_mosaic.version = 11 : i64} {
  func.func @_fused_kernel(%arg0: memref<128x3xf32, #tpu.memory_space<vmem>>, %arg1: memref<8x1280xf32, #tpu.memory_space<vmem>>, %arg2: memref<64x1280xbf16, #tpu.memory_space<vmem>>, %arg3: memref<64x128xbf16, #tpu.memory_space<vmem>>, %arg4: memref<128x64xbf16, #tpu.memory_space<vmem>>, %arg5: memref<64x192xbf16, #tpu.memory_space<vmem>>, %arg6: memref<192x128xbf16, #tpu.memory_space<vmem>>, %arg7: memref<20x128xf32, #tpu.memory_space<vmem>>, %arg8: memref<20x128xf32, #tpu.memory_space<vmem>>) attributes {dimension_semantics = [], scalar_prefetch = 0 : i64, scratch_operands = 0 : i64, tpu.core_type = #tpu.core_type<tc>} {
    %c0 = arith.constant 0 : index
    %c0_0 = arith.constant 0 : index
    %0 = vector.load %arg0[%c0, %c0_0] : memref<128x3xf32, #tpu.memory_space<vmem>>, vector<128x1xf32>
    %c4 = arith.constant 4 : index
    %c0_1 = arith.constant 0 : index
    %1 = vector.load %arg1[%c4, %c0_1] : memref<8x1280xf32, #tpu.memory_space<vmem>>, vector<1x64xf32>
    %2 = vector.broadcast %0 : vector<128x1xf32> to vector<128x64xf32>
    %3 = vector.broadcast %1 : vector<1x64xf32> to vector<128x64xf32>
    %4 = arith.mulf %2, %3 : vector<128x64xf32>
    %c0_2 = arith.constant 0 : index
    %c1 = arith.constant 1 : index
    %5 = vector.load %arg0[%c0_2, %c1] : memref<128x3xf32, #tpu.memory_space<vmem>>, vector<128x1xf32>
    %c5 = arith.constant 5 : index
    %c0_3 = arith.constant 0 : index
    %6 = vector.load %arg1[%c5, %c0_3] : memref<8x1280xf32, #tpu.memory_space<vmem>>, vector<1x64xf32>
    %7 = vector.broadcast %5 : vector<128x1xf32> to vector<128x64xf32>
    %8 = vector.broadcast %6 : vector<1x64xf32> to vector<128x64xf32>
    %9 = arith.mulf %7, %8 : vector<128x64xf32>
    %10 = arith.addf %4, %9 : vector<128x64xf32>
    %c0_4 = arith.constant 0 : index
    %c2 = arith.constant 2 : index
    %11 = vector.load %arg0[%c0_4, %c2] : memref<128x3xf32, #tpu.memory_space<vmem>>, vector<128x1xf32>
    %c6 = arith.constant 6 : index
    %c0_5 = arith.constant 0 : index
    %12 = vector.load %arg1[%c6, %c0_5] : memref<8x1280xf32, #tpu.memory_space<vmem>>, vector<1x64xf32>
    %13 = vector.broadcast %11 : vector<128x1xf32> to vector<128x64xf32>
    %14 = vector.broadcast %12 : vector<1x64xf32> to vector<128x64xf32>
    %15 = arith.mulf %13, %14 : vector<128x64xf32>
    %16 = arith.addf %10, %15 : vector<128x64xf32>
    %c2_6 = arith.constant 2 : index
    %c0_7 = arith.constant 0 : index
    %17 = vector.load %arg1[%c2_6, %c0_7] : memref<8x1280xf32, #tpu.memory_space<vmem>>, vector<1x64xf32>
    %18 = vector.broadcast %17 : vector<1x64xf32> to vector<128x64xf32>
    %19 = arith.addf %16, %18 : vector<128x64xf32>
    %cst = arith.constant 0.000000e+00 : f32
    %20 = vector.broadcast %cst : f32 to vector<128x64xf32>
    %21 = arith.maximumf %19, %20 : vector<128x64xf32>
    %c0_8 = arith.constant 0 : index
    %c0_9 = arith.constant 0 : index
    %22 = vector.load %arg3[%c0_8, %c0_9] : memref<64x128xbf16, #tpu.memory_space<vmem>>, vector<64x128xbf16>
    %23 = arith.extf %22 : vector<64x128xbf16> to vector<64x128xf32>
    %cst_10 = arith.constant dense<0.000000e+00> : vector<128x128xf32>
    %24 = tpu.matmul %21, %23, %cst_10 {dimension_numbers = #tpu.dot_dimension_numbers<[1], [0], [0], [1], [0, 0, 1, 1], [], []>} : vector<128x64xf32>, vector<64x128xf32>, vector<128x128xf32> -> vector<128x128xf32>
    %c2_11 = arith.constant 2 : index
    %c128 = arith.constant 128 : index
    %25 = vector.load %arg1[%c2_11, %c128] : memref<8x1280xf32, #tpu.memory_space<vmem>>, vector<1x128xf32>
    %26 = vector.broadcast %25 : vector<1x128xf32> to vector<128x128xf32>
    %27 = arith.addf %24, %26 : vector<128x128xf32>
    %cst_12 = arith.constant 0.000000e+00 : f32
    %28 = vector.broadcast %cst_12 : f32 to vector<128x128xf32>
    %29 = arith.maximumf %27, %28 : vector<128x128xf32>
    %c0_13 = arith.constant 0 : index
    %c0_14 = arith.constant 0 : index
    %30 = vector.load %arg4[%c0_13, %c0_14] : memref<128x64xbf16, #tpu.memory_space<vmem>>, vector<128x64xbf16>
    %31 = arith.extf %30 : vector<128x64xbf16> to vector<128x64xf32>
    %cst_15 = arith.constant dense<0.000000e+00> : vector<128x64xf32>
    %32 = tpu.matmul %29, %31, %cst_15 {dimension_numbers = #tpu.dot_dimension_numbers<[1], [0], [0], [1], [0, 0, 1, 1], [], []>} : vector<128x128xf32>, vector<128x64xf32>, vector<128x64xf32> -> vector<128x64xf32>
    %c2_16 = arith.constant 2 : index
    %c256 = arith.constant 256 : index
    %33 = vector.load %arg1[%c2_16, %c256] : memref<8x1280xf32, #tpu.memory_space<vmem>>, vector<1x64xf32>
    %34 = vector.broadcast %33 : vector<1x64xf32> to vector<128x64xf32>
    %35 = arith.addf %32, %34 : vector<128x64xf32>
    %c0_17 = arith.constant 0 : index
    %c0_18 = arith.constant 0 : index
    %36 = vector.load %arg2[%c0_17, %c0_18] : memref<64x1280xbf16, #tpu.memory_space<vmem>>, vector<64x1280xbf16>
    %37 = arith.extf %36 : vector<64x1280xbf16> to vector<64x1280xf32>
    %cst_19 = arith.constant dense<0.000000e+00> : vector<128x1280xf32>
    %38 = tpu.matmul %35, %37, %cst_19 {dimension_numbers = #tpu.dot_dimension_numbers<[1], [0], [0], [1], [0, 0, 1, 1], [], []>} : vector<128x64xf32>, vector<64x1280xf32>, vector<128x1280xf32> -> vector<128x1280xf32>
    %c0_20 = arith.constant 0 : index
    %c0_21 = arith.constant 0 : index
    %39 = vector.load %arg1[%c0_20, %c0_21] : memref<8x1280xf32, #tpu.memory_space<vmem>>, vector<1x1280xf32>
    %40 = vector.broadcast %39 : vector<1x1280xf32> to vector<128x1280xf32>
    %41 = arith.addf %38, %40 : vector<128x1280xf32>
    %cst_22 = arith.constant 0.000000e+00 : f32
    %42 = vector.broadcast %cst_22 : f32 to vector<128x1280xf32>
    %43 = arith.maximumf %41, %42 : vector<128x1280xf32>
    %44 = tpu.iota {dimensions = array<i32: 1>} : vector<20x1280xi32>
    %45 = tpu.iota {dimensions = array<i32: 0>} : vector<20x1280xi32>
    %c64_i32 = arith.constant 64 : i32
    %46 = vector.broadcast %c64_i32 : i32 to vector<20x1280xi32>
    %47 = arith.muli %45, %46 : vector<20x1280xi32>
    %48 = arith.cmpi sge, %44, %47 : vector<20x1280xi32>
    %c64_i32_23 = arith.constant 64 : i32
    %49 = vector.broadcast %c64_i32_23 : i32 to vector<20x1280xi32>
    %50 = arith.addi %47, %49 : vector<20x1280xi32>
    %51 = arith.cmpi slt, %44, %50 : vector<20x1280xi32>
    %52 = arith.andi %48, %51 : vector<20x1280xi1>
    %c1_24 = arith.constant 1 : index
    %c0_25 = arith.constant 0 : index
    %53 = vector.load %arg1[%c1_24, %c0_25] : memref<8x1280xf32, #tpu.memory_space<vmem>>, vector<1x1280xf32>
    %54 = vector.shape_cast %53 : vector<1x1280xf32> to vector<1x1280xf32>
    %55 = vector.broadcast %54 : vector<1x1280xf32> to vector<20x1280xf32>
    %cst_26 = arith.constant 0.000000e+00 : f32
    %56 = vector.broadcast %cst_26 : f32 to vector<20x1280xf32>
    %57 = arith.select %52, %55, %56 : vector<20x1280xi1>, vector<20x1280xf32>
    %c3 = arith.constant 3 : index
    %c0_27 = arith.constant 0 : index
    %58 = vector.load %arg1[%c3, %c0_27] : memref<8x1280xf32, #tpu.memory_space<vmem>>, vector<1x1280xf32>
    %59 = vector.shape_cast %58 : vector<1x1280xf32> to vector<1x1280xf32>
    %60 = vector.broadcast %59 : vector<1x1280xf32> to vector<20x1280xf32>
    %cst_28 = arith.constant 0.000000e+00 : f32
    %61 = vector.broadcast %cst_28 : f32 to vector<20x1280xf32>
    %62 = arith.select %52, %60, %61 : vector<20x1280xi1>, vector<20x1280xf32>
    %cst_29 = arith.constant dense<0.000000e+00> : vector<20xf32>
    %63 = vector.multi_reduction <add>, %62, %cst_29 [1] : vector<20x1280xf32> to vector<20xf32>
    %64 = vector.shape_cast %63 : vector<20xf32> to vector<20x1xf32>
    %cst_30 = arith.constant dense<0.000000e+00> : vector<20x128xf32>
    %65 = tpu.matmul %57, %43, %cst_30 {dimension_numbers = #tpu.dot_dimension_numbers<[1], [1], [0], [0], [0, 0, 1, 0], [], []>} : vector<20x1280xf32>, vector<128x1280xf32>, vector<20x128xf32> -> vector<20x128xf32>
    %66 = vector.broadcast %64 : vector<20x1xf32> to vector<20x128xf32>
    %67 = arith.addf %65, %66 : vector<20x128xf32>
    %c0_31 = arith.constant 0 : index
    %c0_32 = arith.constant 0 : index
    %68 = vector.load %arg7[%c0_31, %c0_32] : memref<20x128xf32, #tpu.memory_space<vmem>>, vector<20x128xf32>
    tpu.vector_store %arg7[%c0_31, %c0_32], %67 {strides = array<i32>} : memref<20x128xf32, #tpu.memory_space<vmem>>, vector<20x128xf32>,
    %69 = arith.negf %67 : vector<20x128xf32>
    %70 = math.exp %69 : vector<20x128xf32>
    %cst_33 = arith.constant 1.000000e+00 : f32
    %71 = vector.broadcast %cst_33 : f32 to vector<20x128xf32>
    %72 = arith.addf %71, %70 : vector<20x128xf32>
    %73 = arith.divf %71, %72 : vector<20x128xf32>
    %cst_34 = arith.constant dense<0.000000e+00> : vector<20xf32>
    %74 = vector.multi_reduction <add>, %73, %cst_34 [1] : vector<20x128xf32> to vector<20xf32>
    %75 = vector.shape_cast %74 : vector<20xf32> to vector<20x1xf32>
    %cst_35 = arith.constant 9.99999997E-7 : f32
    %76 = vector.broadcast %cst_35 : f32 to vector<20x1xf32>
    %77 = arith.addf %75, %76 : vector<20x1xf32>
    %cst_36 = arith.constant dense<0.000000e+00> : vector<20x64xf32>
    %78 = tpu.matmul %73, %35, %cst_36 {dimension_numbers = #tpu.dot_dimension_numbers<[1], [0], [0], [1], [0, 0, 1, 1], [], []>} : vector<20x128xf32>, vector<128x64xf32>, vector<20x64xf32> -> vector<20x64xf32>
    %79 = tpu.reciprocal %77 {approx = true} : vector<20x1xf32> -> vector<20x1xf32>
    %80 = vector.broadcast %79 : vector<20x1xf32> to vector<20x64xf32>
    %81 = arith.mulf %78, %80 : vector<20x64xf32>
    %c0_37 = arith.constant 0 : index
    %c0_38 = arith.constant 0 : index
    %82 = vector.load %arg5[%c0_37, %c0_38] : memref<64x192xbf16, #tpu.memory_space<vmem>>, vector<64x192xbf16>
    %83 = arith.extf %82 : vector<64x192xbf16> to vector<64x192xf32>
    %cst_39 = arith.constant dense<0.000000e+00> : vector<20x192xf32>
    %84 = tpu.matmul %81, %83, %cst_39 {dimension_numbers = #tpu.dot_dimension_numbers<[1], [0], [0], [1], [0, 0, 1, 1], [], []>} : vector<20x64xf32>, vector<64x192xf32>, vector<20x192xf32> -> vector<20x192xf32>
    %c2_40 = arith.constant 2 : index
    %c384 = arith.constant 384 : index
    %85 = vector.load %arg1[%c2_40, %c384] : memref<8x1280xf32, #tpu.memory_space<vmem>>, vector<1x192xf32>
    %86 = vector.broadcast %85 : vector<1x192xf32> to vector<20x192xf32>
    %87 = arith.addf %84, %86 : vector<20x192xf32>
    %cst_41 = arith.constant 0.000000e+00 : f32
    %88 = vector.broadcast %cst_41 : f32 to vector<20x192xf32>
    %89 = arith.maximumf %87, %88 : vector<20x192xf32>
    %c0_42 = arith.constant 0 : index
    %c0_43 = arith.constant 0 : index
    %90 = vector.load %arg6[%c0_42, %c0_43] : memref<192x128xbf16, #tpu.memory_space<vmem>>, vector<192x128xbf16>
    %91 = arith.extf %90 : vector<192x128xbf16> to vector<192x128xf32>
    %cst_44 = arith.constant dense<0.000000e+00> : vector<20x128xf32>
    %92 = tpu.matmul %89, %91, %cst_44 {dimension_numbers = #tpu.dot_dimension_numbers<[1], [0], [0], [1], [0, 0, 1, 1], [], []>} : vector<20x192xf32>, vector<192x128xf32>, vector<20x128xf32> -> vector<20x128xf32>
    %c2_45 = arith.constant 2 : index
    %c640 = arith.constant 640 : index
    %93 = vector.load %arg1[%c2_45, %c640] : memref<8x1280xf32, #tpu.memory_space<vmem>>, vector<1x128xf32>
    %94 = vector.broadcast %93 : vector<1x128xf32> to vector<20x128xf32>
    %95 = arith.addf %92, %94 : vector<20x128xf32>
    %c0_46 = arith.constant 0 : index
    %c0_47 = arith.constant 0 : index
    %96 = vector.load %arg8[%c0_46, %c0_47] : memref<20x128xf32, #tpu.memory_space<vmem>>, vector<20x128xf32>
    tpu.vector_store %arg8[%c0_46, %c0_47], %95 {strides = array<i32>} : memref<20x128xf32, #tpu.memory_space<vmem>>, vector<20x128xf32>,
    return
  }
}

</mosaic_0001>

<llo_original>
// kernel: tpu_custom_call.1
$region0: #{tpu_custom_call.1}
  #allocation0 [shape = 'u32[]', space=smem, size = 0x4, offset = 0x4, fixed_abs, tag = 'smem constant byte address 0x4 - core index']
  #allocation1 [shape = 'u32[144,128]{1,0:T(1,128)}', space=vmem, size = 0x12000, scoped, tag = 'internal scratch']
  %s0 = inlined_call_operand.vmem [shape: f32[128,3], index: 0, kind: input, shape index: {}]
  %s1 = inlined_call_operand.vmem [shape: f32[8,1280], index: 1, kind: input, shape index: {}]
  %s2 = inlined_call_operand.hbm [shape: bf16[64,1280], index: 2, kind: input, shape index: {}]
  %s3 = inlined_call_operand.vmem [shape: bf16[64,128], index: 3, kind: input, shape index: {}]
  %s4 = inlined_call_operand.vmem [shape: bf16[128,64], index: 4, kind: input, shape index: {}]
  %s5 = inlined_call_operand.hbm [shape: bf16[64,192], index: 5, kind: input, shape index: {}]
  %s6 = inlined_call_operand.vmem [shape: bf16[192,128], index: 6, kind: input, shape index: {}]
  %s7 = inlined_call_operand.hbm [shape: f32[20,128], index: 7, kind: output, shape index: {0}]
  %s8 = inlined_call_operand.hbm [shape: f32[20,128], index: 8, kind: output, shape index: {1}]
  %9 = xla_tuple %s7, %s8
  %s10 = sld [smem:[#allocation0]]
  $region54: #{tpu_custom_call.1} parent=0
    _
  %s12 = ssub.s32 1, %s10
  %s13 = scalar_select 0, %s12, %s10
  $region1: #{tpu_custom_call.1} parent=0
    #allocation2 [shape = 'u8[163840]{0}', space=vmem, size = 0x28000, scoped, tag = 'input window, operand 2, single buffered']
    #allocation3 [shape = 's32[1]{0}', space=sflag, size = 0x4, scoped, tag = 'scoped memory for tpu_custom_call.1']
    #allocation4 [shape = 's32[1]{0}', space=sflag, size = 0x4, scoped, tag = 'scoped memory for tpu_custom_call.1']
    #allocation5 [shape = 'u8[32768]{0}', space=vmem, size = 0x8000, scoped, tag = 'input window, operand 5, single buffered']
    #allocation6 [shape = 's32[1]{0}', space=sflag, size = 0x4, scoped, tag = 'scoped memory for tpu_custom_call.1']
    #allocation7 [shape = 'u8[12288]{0}', space=vmem, size = 0x3000, scoped, tag = 'output window, operand 0, single buffered']
    #allocation8 [shape = 'u8[12288]{0}', space=vmem, size = 0x3000, scoped, tag = 'output window, operand 1, single buffered']
    #allocation9 [shape = 's32[1]{0}', space=sflag, size = 0x4, scoped, tag = 'scoped memory for tpu_custom_call.1']
    %14 = vsyncpa [#allocation3], 0
    %15 = vsyncpa [#allocation6], 0
    %16 = vsyncpa [#allocation4], 0
    %17 = vsyncpa [#allocation9], 0
    // Predicated region
    $region2: #{tpu_custom_call.1} parent=1 // pred_check
      _
    $region3: #{tpu_custom_call.1} parent=1 // pred_check_branch
      %19 = sbr.rel (0) target = $region5
    $region4: #{tpu_custom_call.1} parent=1 // pred_region
      _
    $region5: #{tpu_custom_call.1} parent=1 // pred_fallthru
      _
    // Predicated region
    $region6: #{tpu_custom_call.1} parent=1 // pred_check
      _
    $region7: #{tpu_custom_call.1} parent=1 // pred_check_branch
      %21 = sbr.rel (0) target = $region9
    $region8: #{tpu_custom_call.1} parent=1 // pred_region
      _
    $region9: #{tpu_custom_call.1} parent=1 // pred_fallthru
      _
    // Predicated region
    $region10: #{tpu_custom_call.1} parent=1 // pred_check
      _
    $region11: #{tpu_custom_call.1} parent=1 // pred_check_branch
      %23 = sbr.rel (0) target = $region13
    $region12: #{tpu_custom_call.1} parent=1 // pred_region
      %s25 = ssub.s32 5120, 5120
      %26 = vsyncadd [#allocation3], %s25
      %s27 = sshll.u32 [#allocation2], 4
      %s28 = int_to_ptr.vmem [resolvable:$true] %s27
      %33 = dma.hbm_to_vmem [thread:$0]  %s2, 5120, %s28, [#allocation3], 640, 640, 40
    $region13: #{tpu_custom_call.1} parent=1 // pred_fallthru
      _
    // Predicated region
    $region14: #{tpu_custom_call.1} parent=1 // pred_check
      _
    $region15: #{tpu_custom_call.1} parent=1 // pred_check_branch
      %35 = sbr.rel (0) target = $region17
    $region16: #{tpu_custom_call.1} parent=1 // pred_region
      _
    $region17: #{tpu_custom_call.1} parent=1 // pred_fallthru
      _
    // Predicated region
    $region18: #{tpu_custom_call.1} parent=1 // pred_check
      _
    $region19: #{tpu_custom_call.1} parent=1 // pred_check_branch
      %37 = sbr.rel (0) target = $region21
    $region20: #{tpu_custom_call.1} parent=1 // pred_region
      _
    $region21: #{tpu_custom_call.1} parent=1 // pred_fallthru
      _
    // Predicated region
    $region22: #{tpu_custom_call.1} parent=1 // pred_check
      _
    $region23: #{tpu_custom_call.1} parent=1 // pred_check_branch
      %39 = sbr.rel (0) target = $region25
    $region24: #{tpu_custom_call.1} parent=1 // pred_region
      %s41 = ssub.s32 1024, 1024
      %42 = vsyncadd [#allocation6], %s41
      %s43 = sshll.u32 [#allocation5], 4
      %s44 = int_to_ptr.vmem [resolvable:$true] %s43
      %49 = dma.hbm_to_vmem [thread:$0]  %s5, 1024, %s44, [#allocation6], 128, 128, 8
    $region25: #{tpu_custom_call.1} parent=1 // pred_fallthru
      _
    // Predicated region
    $region26: #{tpu_custom_call.1} parent=1 // pred_check
      _
    $region27: #{tpu_custom_call.1} parent=1 // pred_check_branch
      %51 = sbr.rel (0) target = $region29
    $region28: #{tpu_custom_call.1} parent=1 // pred_region
      _
    $region29: #{tpu_custom_call.1} parent=1 // pred_fallthru
      _
    // Predicated region
    $region30: #{tpu_custom_call.1} parent=1 // pred_check
      _
    $region31: #{tpu_custom_call.1} parent=1 // pred_check_branch
      %53 = sbr.rel (0) target = $region33
    $region32: #{tpu_custom_call.1} parent=1 // pred_region
      %54 = dma.done [#allocation3], 5120
    $region33: #{tpu_custom_call.1} parent=1 // pred_fallthru
      _
    // Predicated region
    $region34: #{tpu_custom_call.1} parent=1 // pred_check
      _
    $region35: #{tpu_custom_call.1} parent=1 // pred_check_branch
      %56 = sbr.rel (0) target = $region37
    $region36: #{tpu_custom_call.1} parent=1 // pred_region
      %57 = dma.done [#allocation6], 1024
    $region37: #{tpu_custom_call.1} parent=1 // pred_fallthru
      _
    %v58 = vld [vmem:[%s0] sm:$0xff]
    %v59 = vld [vmem:[%s0 + $0x8] sm:$0xff]
    %v60 = vld [vmem:[%s0 + $0x10] sm:$0xff]
    %v61 = vld [vmem:[%s0 + $0x18] sm:$0xff]
    %v62 = vld [vmem:[%s0 + $0x20] sm:$0xff]
    %v63 = vld [vmem:[%s0 + $0x28] sm:$0xff]
    %v64 = vld [vmem:[%s0 + $0x30] sm:$0xff]
    %v65 = vld [vmem:[%s0 + $0x38] sm:$0xff]
    %v66 = vld [vmem:[%s0 + $0x40] sm:$0xff]
    %v67 = vld [vmem:[%s0 + $0x48] sm:$0xff]
    %v68 = vld [vmem:[%s0 + $0x50] sm:$0xff]
    %v69 = vld [vmem:[%s0 + $0x58] sm:$0xff]
    %v70 = vld [vmem:[%s0 + $0x60] sm:$0xff]
    %v71 = vld [vmem:[%s0 + $0x68] sm:$0xff]
    %v72 = vld [vmem:[%s0 + $0x70] sm:$0xff]
    %v73 = vld [vmem:[%s0 + $0x78] sm:$0xff]
    %v74 = vld [vmem:[%s1 + $0x4] ss:$0 sm:$0xff]
    %76 = vset.pattern.permute.xlu0 0
    %77 = vperm.xlu0 %76, %v58
    %v78 = vpop.permute.xlu0 %77
    %81 = vset.pattern.permute.xlu0 0
    %82 = vperm.xlu0 %81, %v59
    %v83 = vpop.permute.xlu0 %82
    %86 = vset.pattern.permute.xlu0 0
    %87 = vperm.xlu0 %86, %v60
    %v88 = vpop.permute.xlu0 %87
    %91 = vset.pattern.permute.xlu0 0
    %92 = vperm.xlu0 %91, %v61
    %v93 = vpop.permute.xlu0 %92
    %96 = vset.pattern.permute.xlu0 0
    %97 = vperm.xlu0 %96, %v62
    %v98 = vpop.permute.xlu0 %97
    %101 = vset.pattern.permute.xlu0 0
    %102 = vperm.xlu0 %101, %v63
    %v103 = vpop.permute.xlu0 %102
    %106 = vset.pattern.permute.xlu0 0
    %107 = vperm.xlu0 %106, %v64
    %v108 = vpop.permute.xlu0 %107
    %111 = vset.pattern.permute.xlu0 0
    %112 = vperm.xlu0 %111, %v65
    %v113 = vpop.permute.xlu0 %112
    %116 = vset.pattern.permute.xlu0 0
    %117 = vperm.xlu0 %116, %v66
    %v118 = vpop.permute.xlu0 %117
    %121 = vset.pattern.permute.xlu0 0
    %122 = vperm.xlu0 %121, %v67
    %v123 = vpop.permute.xlu0 %122
    %126 = vset.pattern.permute.xlu0 0
    %127 = vperm.xlu0 %126, %v68
    %v128 = vpop.permute.xlu0 %127
    %131 = vset.pattern.permute.xlu0 0
    %132 = vperm.xlu0 %131, %v69
    %v133 = vpop.permute.xlu0 %132
    %136 = vset.pattern.permute.xlu0 0
    %137 = vperm.xlu0 %136, %v70
    %v138 = vpop.permute.xlu0 %137
    %141 = vset.pattern.permute.xlu0 0
    %142 = vperm.xlu0 %141, %v71
    %v143 = vpop.permute.xlu0 %142
    %146 = vset.pattern.permute.xlu0 0
    %147 = vperm.xlu0 %146, %v72
    %v148 = vpop.permute.xlu0 %147
    %151 = vset.pattern.permute.xlu0 0
    %152 = vperm.xlu0 %151, %v73
    %v153 = vpop.permute.xlu0 %152
    %v155 = vmul.f32 %v78, %v74
    %v156 = vmul.f32 %v83, %v74
    %v157 = vmul.f32 %v88, %v74
    %v158 = vmul.f32 %v93, %v74
    %v159 = vmul.f32 %v98, %v74
    %v160 = vmul.f32 %v103, %v74
    %v161 = vmul.f32 %v108, %v74
    %v162 = vmul.f32 %v113, %v74
    %v163 = vmul.f32 %v118, %v74
    %v164 = vmul.f32 %v123, %v74
    %v165 = vmul.f32 %v128, %v74
    %v166 = vmul.f32 %v133, %v74
    %v167 = vmul.f32 %v138, %v74
    %v168 = vmul.f32 %v143, %v74
    %v169 = vmul.f32 %v148, %v74
    %v170 = vmul.f32 %v153, %v74
    %v171 = vld [vmem:[%s1 + $0x5] ss:$0 sm:$0xff]
    %172 = vset.pattern.permute.xlu0 1
    %173 = vperm.xlu0 %172, %v58
    %v174 = vpop.permute.xlu0 %173
    %176 = vset.pattern.permute.xlu0 1
    %177 = vperm.xlu0 %176, %v59
    %v178 = vpop.permute.xlu0 %177
    %180 = vset.pattern.permute.xlu0 1
    %181 = vperm.xlu0 %180, %v60
    %v182 = vpop.permute.xlu0 %181
    %184 = vset.pattern.permute.xlu0 1
    %185 = vperm.xlu0 %184, %v61
    %v186 = vpop.permute.xlu0 %185
    %188 = vset.pattern.permute.xlu0 1
    %189 = vperm.xlu0 %188, %v62
    %v190 = vpop.permute.xlu0 %189
    %192 = vset.pattern.permute.xlu0 1
    %193 = vperm.xlu0 %192, %v63
    %v194 = vpop.permute.xlu0 %193
    %196 = vset.pattern.permute.xlu0 1
    %197 = vperm.xlu0 %196, %v64
    %v198 = vpop.permute.xlu0 %197
    %200 = vset.pattern.permute.xlu0 1
    %201 = vperm.xlu0 %200, %v65
    %v202 = vpop.permute.xlu0 %201
    %204 = vset.pattern.permute.xlu0 1
    %205 = vperm.xlu0 %204, %v66
    %v206 = vpop.permute.xlu0 %205
    %208 = vset.pattern.permute.xlu0 1
    %209 = vperm.xlu0 %208, %v67
    %v210 = vpop.permute.xlu0 %209
    %212 = vset.pattern.permute.xlu0 1
    %213 = vperm.xlu0 %212, %v68
    %v214 = vpop.permute.xlu0 %213
    %216 = vset.pattern.permute.xlu0 1
    %217 = vperm.xlu0 %216, %v69
    %v218 = vpop.permute.xlu0 %217
    %220 = vset.pattern.permute.xlu0 1
    %221 = vperm.xlu0 %220, %v70
    %v222 = vpop.permute.xlu0 %221
    %224 = vset.pattern.permute.xlu0 1
    %225 = vperm.xlu0 %224, %v71
    %v226 = vpop.permute.xlu0 %225
    %228 = vset.pattern.permute.xlu0 1
    %229 = vperm.xlu0 %228, %v72
    %v230 = vpop.permute.xlu0 %229
    %232 = vset.pattern.permute.xlu0 1
    %233 = vperm.xlu0 %232, %v73
    %v234 = vpop.permute.xlu0 %233
    %v236 = vmul.f32 %v174, %v171
    %v237 = vmul.f32 %v178, %v171
    %v238 = vmul.f32 %v182, %v171
    %v239 = vmul.f32 %v186, %v171
    %v240 = vmul.f32 %v190, %v171
    %v241 = vmul.f32 %v194, %v171
    %v242 = vmul.f32 %v198, %v171
    %v243 = vmul.f32 %v202, %v171
    %v244 = vmul.f32 %v206, %v171
    %v245 = vmul.f32 %v210, %v171
    %v246 = vmul.f32 %v214, %v171
    %v247 = vmul.f32 %v218, %v171
    %v248 = vmul.f32 %v222, %v171
    %v249 = vmul.f32 %v226, %v171
    %v250 = vmul.f32 %v230, %v171
    %v251 = vmul.f32 %v234, %v171
    %v252 = vadd.f32 %v155, %v236
    %v253 = vadd.f32 %v156, %v237
    %v254 = vadd.f32 %v157, %v238
    %v255 = vadd.f32 %v158, %v239
    %v256 = vadd.f32 %v159, %v240
    %v257 = vadd.f32 %v160, %v241
    %v258 = vadd.f32 %v161, %v242
    %v259 = vadd.f32 %v162, %v243
    %v260 = vadd.f32 %v163, %v244
    %v261 = vadd.f32 %v164, %v245
    %v262 = vadd.f32 %v165, %v246
    %v263 = vadd.f32 %v166, %v247
    %v264 = vadd.f32 %v167, %v248
    %v265 = vadd.f32 %v168, %v249
    %v266 = vadd.f32 %v169, %v250
    %v267 = vadd.f32 %v170, %v251
    %v268 = vld [vmem:[%s1 + $0x6] ss:$0 sm:$0xff]
    %269 = vset.pattern.permute.xlu0 2
    %270 = vperm.xlu0 %269, %v58
    %v271 = vpop.permute.xlu0 %270
    %273 = vset.pattern.permute.xlu0 2
    %274 = vperm.xlu0 %273, %v59
    %v275 = vpop.permute.xlu0 %274
    %277 = vset.pattern.permute.xlu0 2
    %278 = vperm.xlu0 %277, %v60
    %v279 = vpop.permute.xlu0 %278
    %281 = vset.pattern.permute.xlu0 2
    %282 = vperm.xlu0 %281, %v61
    %v283 = vpop.permute.xlu0 %282
    %285 = vset.pattern.permute.xlu0 2
    %286 = vperm.xlu0 %285, %v62
    %v287 = vpop.permute.xlu0 %286
    %289 = vset.pattern.permute.xlu0 2
    %290 = vperm.xlu0 %289, %v63
    %v291 = vpop.permute.xlu0 %290
    %293 = vset.pattern.permute.xlu0 2
    %294 = vperm.xlu0 %293, %v64
    %v295 = vpop.permute.xlu0 %294
    %297 = vset.pattern.permute.xlu0 2
    %298 = vperm.xlu0 %297, %v65
    %v299 = vpop.permute.xlu0 %298
    %301 = vset.pattern.permute.xlu0 2
    %302 = vperm.xlu0 %301, %v66
    %v303 = vpop.permute.xlu0 %302
    %305 = vset.pattern.permute.xlu0 2
    %306 = vperm.xlu0 %305, %v67
    %v307 = vpop.permute.xlu0 %306
    %309 = vset.pattern.permute.xlu0 2
    %310 = vperm.xlu0 %309, %v68
    %v311 = vpop.permute.xlu0 %310
    %313 = vset.pattern.permute.xlu0 2
    %314 = vperm.xlu0 %313, %v69
    %v315 = vpop.permute.xlu0 %314
    %317 = vset.pattern.permute.xlu0 2
    %318 = vperm.xlu0 %317, %v70
    %v319 = vpop.permute.xlu0 %318
    %321 = vset.pattern.permute.xlu0 2
    %322 = vperm.xlu0 %321, %v71
    %v323 = vpop.permute.xlu0 %322
    %325 = vset.pattern.permute.xlu0 2
    %326 = vperm.xlu0 %325, %v72
    %v327 = vpop.permute.xlu0 %326
    %329 = vset.pattern.permute.xlu0 2
    %330 = vperm.xlu0 %329, %v73
    %v331 = vpop.permute.xlu0 %330
    %v333 = vmul.f32 %v271, %v268
    %v334 = vmul.f32 %v275, %v268
    %v335 = vmul.f32 %v279, %v268
    %v336 = vmul.f32 %v283, %v268
    %v337 = vmul.f32 %v287, %v268
    %v338 = vmul.f32 %v291, %v268
    %v339 = vmul.f32 %v295, %v268
    %v340 = vmul.f32 %v299, %v268
    %v341 = vmul.f32 %v303, %v268
    %v342 = vmul.f32 %v307, %v268
    %v343 = vmul.f32 %v311, %v268
    %v344 = vmul.f32 %v315, %v268
    %v345 = vmul.f32 %v319, %v268
    %v346 = vmul.f32 %v323, %v268
    %v347 = vmul.f32 %v327, %v268
    %v348 = vmul.f32 %v331, %v268
    %v349 = vadd.f32 %v252, %v333
    %v350 = vadd.f32 %v253, %v334
    %v351 = vadd.f32 %v254, %v335
    %v352 = vadd.f32 %v255, %v336
    %v353 = vadd.f32 %v256, %v337
    %v354 = vadd.f32 %v257, %v338
    %v355 = vadd.f32 %v258, %v339
    %v356 = vadd.f32 %v259, %v340
    %v357 = vadd.f32 %v260, %v341
    %v358 = vadd.f32 %v261, %v342
    %v359 = vadd.f32 %v262, %v343
    %v360 = vadd.f32 %v263, %v344
    %v361 = vadd.f32 %v264, %v345
    %v362 = vadd.f32 %v265, %v346
    %v363 = vadd.f32 %v266, %v347
    %v364 = vadd.f32 %v267, %v348
    %v365 = vld [vmem:[%s1 + $0x2] ss:$0 sm:$0xff]
    %v366 = vadd.f32 %v349, %v365
    %v367 = vadd.f32 %v350, %v365
    %v368 = vadd.f32 %v351, %v365
    %v369 = vadd.f32 %v352, %v365
    %v370 = vadd.f32 %v353, %v365
    %v371 = vadd.f32 %v354, %v365
    %v372 = vadd.f32 %v355, %v365
    %v373 = vadd.f32 %v356, %v365
    %v374 = vadd.f32 %v357, %v365
    %v375 = vadd.f32 %v358, %v365
    %v376 = vadd.f32 %v359, %v365
    %v377 = vadd.f32 %v360, %v365
    %v378 = vadd.f32 %v361, %v365
    %v379 = vadd.f32 %v362, %v365
    %v380 = vadd.f32 %v363, %v365
    %v381 = vadd.f32 %v364, %v365
    %v382 = vmax.f32 %v366, 0.0
    %v383 = vmax.f32 %v367, 0.0
    %v384 = vmax.f32 %v368, 0.0
    %v385 = vmax.f32 %v369, 0.0
    %v386 = vmax.f32 %v370, 0.0
    %v387 = vmax.f32 %v371, 0.0
    %v388 = vmax.f32 %v372, 0.0
    %v389 = vmax.f32 %v373, 0.0
    %v390 = vmax.f32 %v374, 0.0
    %v391 = vmax.f32 %v375, 0.0
    %v392 = vmax.f32 %v376, 0.0
    %v393 = vmax.f32 %v377, 0.0
    %v394 = vmax.f32 %v378, 0.0
    %v395 = vmax.f32 %v379, 0.0
    %v396 = vmax.f32 %v380, 0.0
    %v397 = vmax.f32 %v381, 0.0
    %v398 = vld [vmem:[%s3] sm:$0xf]
    %v399 = vld [vmem:[%s3 + $0x4] sm:$0xf]
    %v400 = vld [vmem:[%s3 + $0x8] sm:$0xf]
    %v401 = vld [vmem:[%s3 + $0xc] sm:$0xf]
    %v402 = vld [vmem:[%s3 + $0x10] sm:$0xf]
    %v403 = vld [vmem:[%s3 + $0x14] sm:$0xf]
    %v404 = vld [vmem:[%s3 + $0x18] sm:$0xf]
    %v405 = vld [vmem:[%s3 + $0x1c] sm:$0xf]
    %v406 = vunpack.c.l.bf16 %v398
    %v407 = vunpack.c.l.bf16 %v399
    %v408 = vunpack.c.l.bf16 %v400
    %v409 = vunpack.c.l.bf16 %v401
    %v410 = vunpack.c.l.bf16 %v402
    %v411 = vunpack.c.l.bf16 %v403
    %v412 = vunpack.c.l.bf16 %v404
    %v413 = vunpack.c.l.bf16 %v405
    %v414 = vld [vmem:[%s1 + $0xa] ss:$0 sm:$0xff]
    %vm415 = vcmask 523264
    %v417 = vsel %vm415, %v382, 0
    %v420 = vsel %vm415, %v383, 0
    %v423 = vsel %vm415, %v384, 0
    %v426 = vsel %vm415, %v385, 0
    %v429 = vsel %vm415, %v386, 0
    %v432 = vsel %vm415, %v387, 0
    %v435 = vsel %vm415, %v388, 0
    %v438 = vsel %vm415, %v389, 0
    %v441 = vsel %vm415, %v390, 0
    %v444 = vsel %vm415, %v391, 0
    %v447 = vsel %vm415, %v392, 0
    %v450 = vsel %vm415, %v393, 0
    %v453 = vsel %vm415, %v394, 0
    %v456 = vsel %vm415, %v395, 0
    %v459 = vsel %vm415, %v396, 0
    %v462 = vsel %vm415, %v397, 0
    %464 = vmatprep.subr.mxu0 0.0
    %465 = vmatpush1.msra.mxu0 0.0
    %466 = vmatprep.subr.mxu0 0.0
    %467 = vmatpush1.msra.mxu0 0.0
    %468 = vmatprep.subr.mxu0 0.0
    %469 = vmatpush1.msra.mxu0 0.0
    %470 = vmatprep.subr.mxu0 0.0
    %471 = vmatpush1.msra.mxu0 0.0
    %472 = vmatprep.subr.mxu0 0.0
    %473 = vmatpush1.msra.mxu0 0.0
    %474 = vmatprep.subr.mxu0 0.0
    %475 = vmatpush1.msra.mxu0 0.0
    %476 = vmatprep.subr.mxu0 0.0
    %477 = vmatpush1.msra.mxu0 0.0
    %478 = vmatprep.subr.mxu0 0.0
    %479 = vmatpush1.msra.mxu0 0.0
    %480 = vmatprep.subr.mxu0 0.0
    %481 = vmatpush1.msra.mxu0 %v413
    %482 = vmatprep.subr.mxu0 0.0
    %483 = vmatpush1.msra.mxu0 %v412
    %484 = vmatprep.subr.mxu0 0.0
    %485 = vmatpush1.msra.mxu0 %v411
    %486 = vmatprep.subr.mxu0 0.0
    %487 = vmatpush1.msra.mxu0 %v410
    %488 = vmatprep.subr.mxu0 0.0
    %489 = vmatpush1.msra.mxu0 %v409
    %490 = vmatprep.subr.mxu0 0.0
    %491 = vmatpush1.msra.mxu0 %v408
    %492 = vmatprep.subr.mxu0 0.0
    %493 = vmatpush1.msra.mxu0 %v407
    %494 = vmatprep.subr.mxu0 0.0
    %495 = vmatpush1.msra.mxu0 %v406
    %496 = vmatprep.subr.mxu0 0.0
    %497 = vmatpush2.msra.mxu0 0.0
    %498 = vmatprep.subr.mxu0 0.0
    %499 = vmatpush2.msra.mxu0 0.0
    %500 = vmatprep.subr.mxu0 0.0
    %501 = vmatpush2.msra.mxu0 0.0
    %502 = vmatprep.subr.mxu0 0.0
    %503 = vmatpush2.msra.mxu0 0.0
    %504 = vmatprep.subr.mxu0 0.0
    %505 = vmatpush2.msra.mxu0 0.0
    %506 = vmatprep.subr.mxu0 0.0
    %507 = vmatpush2.msra.mxu0 0.0
    %508 = vmatprep.subr.mxu0 0.0
    %509 = vmatpush2.msra.mxu0 0.0
    %510 = vmatprep.subr.mxu0 0.0
    %511 = vmatpush2.msra.mxu0 0.0
    %512 = vmatprep.subr.mxu0 0.0
    %513 = vmatpush2.msra.mxu0 0.0
    %514 = vmatprep.subr.mxu0 0.0
    %515 = vmatpush2.msra.mxu0 0.0
    %516 = vmatprep.subr.mxu0 0.0
    %517 = vmatpush2.msra.mxu0 0.0
    %518 = vmatprep.subr.mxu0 0.0
    %519 = vmatpush2.msra.mxu0 0.0
    %520 = vmatprep.subr.mxu0 0.0
    %521 = vmatpush2.msra.mxu0 0.0
    %522 = vmatprep.subr.mxu0 0.0
    %523 = vmatpush2.msra.mxu0 0.0
    %524 = vmatprep.subr.mxu0 0.0
    %525 = vmatpush2.msra.mxu0 0.0
    %526 = vmatprep.subr.mxu0 0.0
    %527 = vmatpush2.msra.mxu0 0.0
    %528 = vmatprep.mubr.f32.mxu0 0.0
    %529 = vmatmul.mubr.f32.gmra.mxu0 %v417
    %v530 = vpop.f32.mrf.mxu0
    %v531 = vadd.f32 %v414, %v530
    %v532 = vpop.f32.mrf.mxu0
    %533 = vmatprep.mubr.f32.mxu0 0.0
    %534 = vmatmul.mubr.f32.gmra.mxu0 %v420
    %v535 = vpop.f32.mrf.mxu0
    %v536 = vadd.f32 %v414, %v535
    %v537 = vpop.f32.mrf.mxu0
    %538 = vmatprep.mubr.f32.mxu0 0.0
    %539 = vmatmul.mubr.f32.gmra.mxu0 %v423
    %v540 = vpop.f32.mrf.mxu0
    %v541 = vadd.f32 %v414, %v540
    %v542 = vpop.f32.mrf.mxu0
    %543 = vmatprep.mubr.f32.mxu0 0.0
    %544 = vmatmul.mubr.f32.gmra.mxu0 %v426
    %v545 = vpop.f32.mrf.mxu0
    %v546 = vadd.f32 %v414, %v545
    %v547 = vpop.f32.mrf.mxu0
    %548 = vmatprep.mubr.f32.mxu0 0.0
    %549 = vmatmul.mubr.f32.gmra.mxu0 %v429
    %v550 = vpop.f32.mrf.mxu0
    %v551 = vadd.f32 %v414, %v550
    %v552 = vpop.f32.mrf.mxu0
    %553 = vmatprep.mubr.f32.mxu0 0.0
    %554 = vmatmul.mubr.f32.gmra.mxu0 %v432
    %v555 = vpop.f32.mrf.mxu0
    %v556 = vadd.f32 %v414, %v555
    %v557 = vpop.f32.mrf.mxu0
    %558 = vmatprep.mubr.f32.mxu0 0.0
    %559 = vmatmul.mubr.f32.gmra.mxu0 %v435
    %v560 = vpop.f32.mrf.mxu0
    %v561 = vadd.f32 %v414, %v560
    %v562 = vpop.f32.mrf.mxu0
    %563 = vmatprep.mubr.f32.mxu0 0.0
    %564 = vmatmul.mubr.f32.gmra.mxu0 %v438
    %v565 = vpop.f32.mrf.mxu0
    %v566 = vadd.f32 %v414, %v565
    %v567 = vpop.f32.mrf.mxu0
    %568 = vmatprep.mubr.f32.mxu0 0.0
    %569 = vmatmul.mubr.f32.gmra.mxu0 %v441
    %v570 = vpop.f32.mrf.mxu0
    %v571 = vadd.f32 %v414, %v570
    %v572 = vpop.f32.mrf.mxu0
    %573 = vmatprep.mubr.f32.mxu0 0.0
    %574 = vmatmul.mubr.f32.gmra.mxu0 %v444
    %v575 = vpop.f32.mrf.mxu0
    %v576 = vadd.f32 %v414, %v575
    %v577 = vpop.f32.mrf.mxu0
    %578 = vmatprep.mubr.f32.mxu0 0.0
    %579 = vmatmul.mubr.f32.gmra.mxu0 %v447
    %v580 = vpop.f32.mrf.mxu0
    %v581 = vadd.f32 %v414, %v580
    %v582 = vpop.f32.mrf.mxu0
    %583 = vmatprep.mubr.f32.mxu0 0.0
    %584 = vmatmul.mubr.f32.gmra.mxu0 %v450
    %v585 = vpop.f32.mrf.mxu0
    %v586 = vadd.f32 %v414, %v585
    %v587 = vpop.f32.mrf.mxu0
    %588 = vmatprep.mubr.f32.mxu0 0.0
    %589 = vmatmul.mubr.f32.gmra.mxu0 %v453
    %v590 = vpop.f32.mrf.mxu0
    %v591 = vadd.f32 %v414, %v590
    %v592 = vpop.f32.mrf.mxu0
    %593 = vmatprep.mubr.f32.mxu0 0.0
    %594 = vmatmul.mubr.f32.gmra.mxu0 %v456
    %v595 = vpop.f32.mrf.mxu0
    %v596 = vadd.f32 %v414, %v595
    %v597 = vpop.f32.mrf.mxu0
    %598 = vmatprep.mubr.f32.mxu0 0.0
    %599 = vmatmul.mubr.f32.gmra.mxu0 %v459
    %v600 = vpop.f32.mrf.mxu0
    %v601 = vadd.f32 %v414, %v600
    %v602 = vpop.f32.mrf.mxu0
    %603 = vmatprep.mubr.f32.mxu0 0.0
    %604 = vmatmul.mubr.f32.gmra.mxu0 %v462
    %v605 = vpop.f32.mrf.mxu0
    %v606 = vadd.f32 %v414, %v605
    %v607 = vpop.f32.mrf.mxu0
    %608 = vdwg.mxu0
    %v609 = vmax.f32 %v531, 0.0
    %v610 = vmax.f32 %v536, 0.0
    %v611 = vmax.f32 %v541, 0.0
    %v612 = vmax.f32 %v546, 0.0
    %v613 = vmax.f32 %v551, 0.0
    %v614 = vmax.f32 %v556, 0.0
    %v615 = vmax.f32 %v561, 0.0
    %v616 = vmax.f32 %v566, 0.0
    %v617 = vmax.f32 %v571, 0.0
    %v618 = vmax.f32 %v576, 0.0
    %v619 = vmax.f32 %v581, 0.0
    %v620 = vmax.f32 %v586, 0.0
    %v621 = vmax.f32 %v591, 0.0
    %v622 = vmax.f32 %v596, 0.0
    %v623 = vmax.f32 %v601, 0.0
    %v624 = vmax.f32 %v606, 0.0
    %v625 = vld [vmem:[%s4] sm:$0xf]
    %v626 = vld [vmem:[%s4 + $0x4] sm:$0xf]
    %v627 = vld [vmem:[%s4 + $0x8] sm:$0xf]
    %v628 = vld [vmem:[%s4 + $0xc] sm:$0xf]
    %v629 = vld [vmem:[%s4 + $0x10] sm:$0xf]
    %v630 = vld [vmem:[%s4 + $0x14] sm:$0xf]
    %v631 = vld [vmem:[%s4 + $0x18] sm:$0xf]
    %v632 = vld [vmem:[%s4 + $0x1c] sm:$0xf]
    %v633 = vld [vmem:[%s4 + $0x20] sm:$0xf]
    %v634 = vld [vmem:[%s4 + $0x24] sm:$0xf]
    %v635 = vld [vmem:[%s4 + $0x28] sm:$0xf]
    %v636 = vld [vmem:[%s4 + $0x2c] sm:$0xf]
    %v637 = vld [vmem:[%s4 + $0x30] sm:$0xf]
    %v638 = vld [vmem:[%s4 + $0x34] sm:$0xf]
    %v639 = vld [vmem:[%s4 + $0x38] sm:$0xf]
    %v640 = vld [vmem:[%s4 + $0x3c] sm:$0xf]
    %v641 = vunpack.c.l.bf16 %v625
    %v642 = vunpack.c.l.bf16 %v626
    %v643 = vunpack.c.l.bf16 %v627
    %v644 = vunpack.c.l.bf16 %v628
    %v645 = vunpack.c.l.bf16 %v629
    %v646 = vunpack.c.l.bf16 %v630
    %v647 = vunpack.c.l.bf16 %v631
    %v648 = vunpack.c.l.bf16 %v632
    %v649 = vunpack.c.l.bf16 %v633
    %v650 = vunpack.c.l.bf16 %v634
    %v651 = vunpack.c.l.bf16 %v635
    %v652 = vunpack.c.l.bf16 %v636
    %v653 = vunpack.c.l.bf16 %v637
    %v654 = vunpack.c.l.bf16 %v638
    %v655 = vunpack.c.l.bf16 %v639
    %v656 = vunpack.c.l.bf16 %v640
    %v657 = vld [vmem:[%s1 + $0x12] ss:$0 sm:$0xff]
    %658 = vmatprep.subr.mxu0 0.0
    %659 = vmatpush1.msra.mxu0 %v656
    %660 = vmatprep.subr.mxu0 0.0
    %661 = vmatpush1.msra.mxu0 %v655
    %662 = vmatprep.subr.mxu0 0.0
    %663 = vmatpush1.msra.mxu0 %v654
    %664 = vmatprep.subr.mxu0 0.0
    %665 = vmatpush1.msra.mxu0 %v653
    %666 = vmatprep.subr.mxu0 0.0
    %667 = vmatpush1.msra.mxu0 %v652
    %668 = vmatprep.subr.mxu0 0.0
    %669 = vmatpush1.msra.mxu0 %v651
    %670 = vmatprep.subr.mxu0 0.0
    %671 = vmatpush1.msra.mxu0 %v650
    %672 = vmatprep.subr.mxu0 0.0
    %673 = vmatpush1.msra.mxu0 %v649
    %674 = vmatprep.subr.mxu0 0.0
    %675 = vmatpush1.msra.mxu0 %v648
    %676 = vmatprep.subr.mxu0 0.0
    %677 = vmatpush1.msra.mxu0 %v647
    %678 = vmatprep.subr.mxu0 0.0
    %679 = vmatpush1.msra.mxu0 %v646
    %680 = vmatprep.subr.mxu0 0.0
    %681 = vmatpush1.msra.mxu0 %v645
    %682 = vmatprep.subr.mxu0 0.0
    %683 = vmatpush1.msra.mxu0 %v644
    %684 = vmatprep.subr.mxu0 0.0
    %685 = vmatpush1.msra.mxu0 %v643
    %686 = vmatprep.subr.mxu0 0.0
    %687 = vmatpush1.msra.mxu0 %v642
    %688 = vmatprep.subr.mxu0 0.0
    %689 = vmatpush1.msra.mxu0 %v641
    %690 = vmatprep.subr.mxu0 0.0
    %691 = vmatpush2.msra.mxu0 0.0
    %692 = vmatprep.subr.mxu0 0.0
    %693 = vmatpush2.msra.mxu0 0.0
    %694 = vmatprep.subr.mxu0 0.0
    %695 = vmatpush2.msra.mxu0 0.0
    %696 = vmatprep.subr.mxu0 0.0
    %697 = vmatpush2.msra.mxu0 0.0
    %698 = vmatprep.subr.mxu0 0.0
    %699 = vmatpush2.msra.mxu0 0.0
    %700 = vmatprep.subr.mxu0 0.0
    %701 = vmatpush2.msra.mxu0 0.0
    %702 = vmatprep.subr.mxu0 0.0
    %703 = vmatpush2.msra.mxu0 0.0
    %704 = vmatprep.subr.mxu0 0.0
    %705 = vmatpush2.msra.mxu0 0.0
    %706 = vmatprep.subr.mxu0 0.0
    %707 = vmatpush2.msra.mxu0 0.0
    %708 = vmatprep.subr.mxu0 0.0
    %709 = vmatpush2.msra.mxu0 0.0
    %710 = vmatprep.subr.mxu0 0.0
    %711 = vmatpush2.msra.mxu0 0.0
    %712 = vmatprep.subr.mxu0 0.0
    %713 = vmatpush2.msra.mxu0 0.0
    %714 = vmatprep.subr.mxu0 0.0
    %715 = vmatpush2.msra.mxu0 0.0
    %716 = vmatprep.subr.mxu0 0.0
    %717 = vmatpush2.msra.mxu0 0.0
    %718 = vmatprep.subr.mxu0 0.0
    %719 = vmatpush2.msra.mxu0 0.0
    %720 = vmatprep.subr.mxu0 0.0
    %721 = vmatpush2.msra.mxu0 0.0
    %722 = vmatprep.mubr.f32.mxu0 0.0
    %723 = vmatmul.mubr.f32.gmra.mxu0 %v609
    %v724 = vpop.f32.mrf.mxu0
    %v725 = vadd.f32 %v657, %v724
    %v726 = vpop.f32.mrf.mxu0
    %727 = vmatprep.mubr.f32.mxu0 0.0
    %728 = vmatmul.mubr.f32.gmra.mxu0 %v610
    %v729 = vpop.f32.mrf.mxu0
    %v730 = vadd.f32 %v657, %v729
    %v731 = vpop.f32.mrf.mxu0
    %732 = vmatprep.mubr.f32.mxu0 0.0
    %733 = vmatmul.mubr.f32.gmra.mxu0 %v611
    %v734 = vpop.f32.mrf.mxu0
    %v735 = vadd.f32 %v657, %v734
    %v736 = vpop.f32.mrf.mxu0
    %737 = vmatprep.mubr.f32.mxu0 0.0
    %738 = vmatmul.mubr.f32.gmra.mxu0 %v612
    %v739 = vpop.f32.mrf.mxu0
    %v740 = vadd.f32 %v657, %v739
    %v741 = vpop.f32.mrf.mxu0
    %742 = vmatprep.mubr.f32.mxu0 0.0
    %743 = vmatmul.mubr.f32.gmra.mxu0 %v613
    %v744 = vpop.f32.mrf.mxu0
    %v745 = vadd.f32 %v657, %v744
    %v746 = vpop.f32.mrf.mxu0
    %747 = vmatprep.mubr.f32.mxu0 0.0
    %748 = vmatmul.mubr.f32.gmra.mxu0 %v614
    %v749 = vpop.f32.mrf.mxu0
    %v750 = vadd.f32 %v657, %v749
    %v751 = vpop.f32.mrf.mxu0
    %752 = vmatprep.mubr.f32.mxu0 0.0
    %753 = vmatmul.mubr.f32.gmra.mxu0 %v615
    %v754 = vpop.f32.mrf.mxu0
    %v755 = vadd.f32 %v657, %v754
    %v756 = vpop.f32.mrf.mxu0
    %757 = vmatprep.mubr.f32.mxu0 0.0
    %758 = vmatmul.mubr.f32.gmra.mxu0 %v616
    %v759 = vpop.f32.mrf.mxu0
    %v760 = vadd.f32 %v657, %v759
    %v761 = vpop.f32.mrf.mxu0
    %762 = vmatprep.mubr.f32.mxu0 0.0
    %763 = vmatmul.mubr.f32.gmra.mxu0 %v617
    %v764 = vpop.f32.mrf.mxu0
    %v765 = vadd.f32 %v657, %v764
    %v766 = vpop.f32.mrf.mxu0
    %767 = vmatprep.mubr.f32.mxu0 0.0
    %768 = vmatmul.mubr.f32.gmra.mxu0 %v618
    %v769 = vpop.f32.mrf.mxu0
    %v770 = vadd.f32 %v657, %v769
    %v771 = vpop.f32.mrf.mxu0
    %772 = vmatprep.mubr.f32.mxu0 0.0
    %773 = vmatmul.mubr.f32.gmra.mxu0 %v619
    %v774 = vpop.f32.mrf.mxu0
    %v775 = vadd.f32 %v657, %v774
    %v776 = vpop.f32.mrf.mxu0
    %777 = vmatprep.mubr.f32.mxu0 0.0
    %778 = vmatmul.mubr.f32.gmra.mxu0 %v620
    %v779 = vpop.f32.mrf.mxu0
    %v780 = vadd.f32 %v657, %v779
    %v781 = vpop.f32.mrf.mxu0
    %782 = vmatprep.mubr.f32.mxu0 0.0
    %783 = vmatmul.mubr.f32.gmra.mxu0 %v621
    %v784 = vpop.f32.mrf.mxu0
    %v785 = vadd.f32 %v657, %v784
    %v786 = vpop.f32.mrf.mxu0
    %787 = vmatprep.mubr.f32.mxu0 0.0
    %788 = vmatmul.mubr.f32.gmra.mxu0 %v622
    %v789 = vpop.f32.mrf.mxu0
    %v790 = vadd.f32 %v657, %v789
    %v791 = vpop.f32.mrf.mxu0
    %792 = vmatprep.mubr.f32.mxu0 0.0
    %793 = vmatmul.mubr.f32.gmra.mxu0 %v623
    %v794 = vpop.f32.mrf.mxu0
    %v795 = vadd.f32 %v657, %v794
    %v796 = vpop.f32.mrf.mxu0
    %797 = vmatprep.mubr.f32.mxu0 0.0
    %798 = vmatmul.mubr.f32.gmra.mxu0 %v624
    %v799 = vpop.f32.mrf.mxu0
    %v800 = vadd.f32 %v657, %v799
    %v801 = vpop.f32.mrf.mxu0
    %802 = vdwg.mxu0
    %v803 = vld [vmem:[#allocation2] sm:$0xff]
    %v804 = vld [vmem:[#allocation2 + $0x8] sm:$0xff]
    %v805 = vld [vmem:[#allocation2 + $0x10] sm:$0xff]
    %v806 = vld [vmem:[#allocation2 + $0x18] sm:$0xff]
    %v807 = vld [vmem:[#allocation2 + $0x20] sm:$0xff]
    %v808 = vld [vmem:[#allocation2 + $0x28] sm:$0xff]
    %v809 = vld [vmem:[#allocation2 + $0x30] sm:$0xff]
    %v810 = vld [vmem:[#allocation2 + $0x38] sm:$0xff]
    %v811 = vld [vmem:[#allocation2 + $0x40] sm:$0xff]
    %v812 = vld [vmem:[#allocation2 + $0x48] sm:$0xff]
    %v813 = vld [vmem:[#allocation2 + $0x50] sm:$0xff]
    %v814 = vld [vmem:[#allocation2 + $0x58] sm:$0xff]
    %v815 = vld [vmem:[#allocation2 + $0x60] sm:$0xff]
    %v816 = vld [vmem:[#allocation2 + $0x68] sm:$0xff]
    %v817 = vld [vmem:[#allocation2 + $0x70] sm:$0xff]
    %v818 = vld [vmem:[#allocation2 + $0x78] sm:$0xff]
    %v819 = vld [vmem:[#allocation2 + $0x80] sm:$0xff]
    %v820 = vld [vmem:[#allocation2 + $0x88] sm:$0xff]
    %v821 = vld [vmem:[#allocation2 + $0x90] sm:$0xff]
    %v822 = vld [vmem:[#allocation2 + $0x98] sm:$0xff]
    %v823 = vld [vmem:[#allocation2 + $0xa0] sm:$0xff]
    %v824 = vld [vmem:[#allocation2 + $0xa8] sm:$0xff]
    %v825 = vld [vmem:[#allocation2 + $0xb0] sm:$0xff]
    %v826 = vld [vmem:[#allocation2 + $0xb8] sm:$0xff]
    %v827 = vld [vmem:[#allocation2 + $0xc0] sm:$0xff]
    %v828 = vld [vmem:[#allocation2 + $0xc8] sm:$0xff]
    %v829 = vld [vmem:[#allocation2 + $0xd0] sm:$0xff]
    %v830 = vld [vmem:[#allocation2 + $0xd8] sm:$0xff]
    %v831 = vld [vmem:[#allocation2 + $0xe0] sm:$0xff]
    %v832 = vld [vmem:[#allocation2 + $0xe8] sm:$0xff]
    %v833 = vld [vmem:[#allocation2 + $0xf0] sm:$0xff]
    %v834 = vld [vmem:[#allocation2 + $0xf8] sm:$0xff]
    %v835 = vld [vmem:[#allocation2 + $0x100] sm:$0xff]
    %v836 = vld [vmem:[#allocation2 + $0x108] sm:$0xff]
    %v837 = vld [vmem:[#allocation2 + $0x110] sm:$0xff]
    %v838 = vld [vmem:[#allocation2 + $0x118] sm:$0xff]
    %v839 = vld [vmem:[#allocation2 + $0x120] sm:$0xff]
    %v840 = vld [vmem:[#allocation2 + $0x128] sm:$0xff]
    %v841 = vld [vmem:[#allocation2 + $0x130] sm:$0xff]
    %v842 = vld [vmem:[#allocation2 + $0x138] sm:$0xff]
    %v843 = vunpack.c.l.bf16 %v803
    %v844 = vunpack.c.h.bf16 %v803
    %v845 = vunpack.c.l.bf16 %v804
    %v846 = vunpack.c.h.bf16 %v804
    %v847 = vunpack.c.l.bf16 %v805
    %v848 = vunpack.c.h.bf16 %v805
    %v849 = vunpack.c.l.bf16 %v806
    %v850 = vunpack.c.h.bf16 %v806
    %v851 = vunpack.c.l.bf16 %v807
    %v852 = vunpack.c.h.bf16 %v807
    %v853 = vunpack.c.l.bf16 %v808
    %v854 = vunpack.c.h.bf16 %v808
    %v855 = vunpack.c.l.bf16 %v809
    %v856 = vunpack.c.h.bf16 %v809
    %v857 = vunpack.c.l.bf16 %v810
    %v858 = vunpack.c.h.bf16 %v810
    %v859 = vunpack.c.l.bf16 %v811
    %v860 = vunpack.c.h.bf16 %v811
    %v861 = vunpack.c.l.bf16 %v812
    %v862 = vunpack.c.h.bf16 %v812
    %v863 = vunpack.c.l.bf16 %v813
    %v864 = vunpack.c.h.bf16 %v813
    %v865 = vunpack.c.l.bf16 %v814
    %v866 = vunpack.c.h.bf16 %v814
    %v867 = vunpack.c.l.bf16 %v815
    %v868 = vunpack.c.h.bf16 %v815
    %v869 = vunpack.c.l.bf16 %v816
    %v870 = vunpack.c.h.bf16 %v816
    %v871 = vunpack.c.l.bf16 %v817
    %v872 = vunpack.c.h.bf16 %v817
    %v873 = vunpack.c.l.bf16 %v818
    %v874 = vunpack.c.h.bf16 %v818
    %v875 = vunpack.c.l.bf16 %v819
    %v876 = vunpack.c.h.bf16 %v819
    %v877 = vunpack.c.l.bf16 %v820
    %v878 = vunpack.c.h.bf16 %v820
    %v879 = vunpack.c.l.bf16 %v821
    %v880 = vunpack.c.h.bf16 %v821
    %v881 = vunpack.c.l.bf16 %v822
    %v882 = vunpack.c.h.bf16 %v822
    %v883 = vunpack.c.l.bf16 %v823
    %v884 = vunpack.c.h.bf16 %v823
    %v885 = vunpack.c.l.bf16 %v824
    %v886 = vunpack.c.h.bf16 %v824
    %v887 = vunpack.c.l.bf16 %v825
    %v888 = vunpack.c.h.bf16 %v825
    %v889 = vunpack.c.l.bf16 %v826
    %v890 = vunpack.c.h.bf16 %v826
    %v891 = vunpack.c.l.bf16 %v827
    %v892 = vunpack.c.h.bf16 %v827
    %v893 = vunpack.c.l.bf16 %v828
    %v894 = vunpack.c.h.bf16 %v828
    %v895 = vunpack.c.l.bf16 %v829
    %v896 = vunpack.c.h.bf16 %v829
    %v897 = vunpack.c.l.bf16 %v830
    %v898 = vunpack.c.h.bf16 %v830
    %v899 = vunpack.c.l.bf16 %v831
    %v900 = vunpack.c.h.bf16 %v831
    %v901 = vunpack.c.l.bf16 %v832
    %v902 = vunpack.c.h.bf16 %v832
    %v903 = vunpack.c.l.bf16 %v833
    %v904 = vunpack.c.h.bf16 %v833
    %v905 = vunpack.c.l.bf16 %v834
    %v906 = vunpack.c.h.bf16 %v834
    %v907 = vunpack.c.l.bf16 %v835
    %v908 = vunpack.c.h.bf16 %v835
    %v909 = vunpack.c.l.bf16 %v836
    %v910 = vunpack.c.h.bf16 %v836
    %v911 = vunpack.c.l.bf16 %v837
    %v912 = vunpack.c.h.bf16 %v837
    %v913 = vunpack.c.l.bf16 %v838
    %v914 = vunpack.c.h.bf16 %v838
    %v915 = vunpack.c.l.bf16 %v839
    %v916 = vunpack.c.h.bf16 %v839
    %v917 = vunpack.c.l.bf16 %v840
    %v918 = vunpack.c.h.bf16 %v840
    %v919 = vunpack.c.l.bf16 %v841
    %v920 = vunpack.c.h.bf16 %v841
    %v921 = vunpack.c.l.bf16 %v842
    %v922 = vunpack.c.h.bf16 %v842
    %v923 = vld [vmem:[%s1] ss:$8 sm:$0xf]
    %v924 = vld [vmem:[%s1] ss:$8 sm:$0xf0]
    %v925 = vor.u32 %v923, %v924
    %s926 = scalar_lea.vmem %s1, 64
    %v927 = vld [vmem:[%s926] ss:$8 sm:$0x3]
    %v930 = vlaneseq
    %v931 = vshrl.u32 %v930, 7
    %v932 = vsub.s32 0, %v931
    %v933 = vrot.slane %v925, %v932
    %v934 = vlaneseq
    %v935 = vshrl.u32 %v934, 7
    %v936 = vsub.s32 1, %v935
    %v937 = vrot.slane %v925, %v936
    %v938 = vlaneseq
    %v939 = vshrl.u32 %v938, 7
    %v940 = vsub.s32 2, %v939
    %v941 = vrot.slane %v925, %v940
    %v942 = vlaneseq
    %v943 = vshrl.u32 %v942, 7
    %v944 = vsub.s32 3, %v943
    %v945 = vrot.slane %v925, %v944
    %v946 = vlaneseq
    %v947 = vshrl.u32 %v946, 7
    %v948 = vsub.s32 4, %v947
    %v949 = vrot.slane %v925, %v948
    %v950 = vlaneseq
    %v951 = vshrl.u32 %v950, 7
    %v952 = vsub.s32 5, %v951
    %v953 = vrot.slane %v925, %v952
    %v954 = vlaneseq
    %v955 = vshrl.u32 %v954, 7
    %v956 = vsub.s32 6, %v955
    %v957 = vrot.slane %v925, %v956
    %v958 = vlaneseq
    %v959 = vshrl.u32 %v958, 7
    %v960 = vsub.s32 7, %v959
    %v961 = vrot.slane %v925, %v960
    %v962 = vlaneseq
    %v963 = vshrl.u32 %v962, 7
    %v964 = vsub.s32 0, %v963
    %v965 = vrot.slane %v927, %v964
    %v966 = vlaneseq
    %v967 = vshrl.u32 %v966, 7
    %v968 = vsub.s32 1, %v967
    %v969 = vrot.slane %v927, %v968
    %v981 = vsel %vm415, %v725, 0
    %v984 = vsel %vm415, %v730, 0
    %v987 = vsel %vm415, %v735, 0
    %v990 = vsel %vm415, %v740, 0
    %v993 = vsel %vm415, %v745, 0
    %v996 = vsel %vm415, %v750, 0
    %v999 = vsel %vm415, %v755, 0
    %v1002 = vsel %vm415, %v760, 0
    %v1005 = vsel %vm415, %v765, 0
    %v1008 = vsel %vm415, %v770, 0
    %v1011 = vsel %vm415, %v775, 0
    %v1014 = vsel %vm415, %v780, 0
    %v1017 = vsel %vm415, %v785, 0
    %v1020 = vsel %vm415, %v790, 0
    %v1023 = vsel %vm415, %v795, 0
    %v1026 = vsel %vm415, %v800, 0
    %1028 = vmatprep.subr.mxu0 0.0
    %1029 = vmatpush1.msra.mxu0 0.0
    %1030 = vmatprep.subr.mxu0 0.0
    %1031 = vmatpush1.msra.mxu0 0.0
    %1032 = vmatprep.subr.mxu0 0.0
    %1033 = vmatpush1.msra.mxu0 0.0
    %1034 = vmatprep.subr.mxu0 0.0
    %1035 = vmatpush1.msra.mxu0 0.0
    %1036 = vmatprep.subr.mxu0 0.0
    %1037 = vmatpush1.msra.mxu0 0.0
    %1038 = vmatprep.subr.mxu0 0.0
    %1039 = vmatpush1.msra.mxu0 0.0
    %1040 = vmatprep.subr.mxu0 0.0
    %1041 = vmatpush1.msra.mxu0 0.0
    %1042 = vmatprep.subr.mxu0 0.0
    %1043 = vmatpush1.msra.mxu0 0.0
    %1044 = vmatprep.subr.mxu0 %v914
    %1045 = vmatpush1.msra.mxu0 %v913
    %1046 = vmatprep.subr.mxu0 %v904
    %1047 = vmatpush1.msra.mxu0 %v903
    %1048 = vmatprep.subr.mxu0 %v894
    %1049 = vmatpush1.msra.mxu0 %v893
    %1050 = vmatprep.subr.mxu0 %v884
    %1051 = vmatpush1.msra.mxu0 %v883
    %1052 = vmatprep.subr.mxu0 %v874
    %1053 = vmatpush1.msra.mxu0 %v873
    %1054 = vmatprep.subr.mxu0 %v864
    %1055 = vmatpush1.msra.mxu0 %v863
    %1056 = vmatprep.subr.mxu0 %v854
    %1057 = vmatpush1.msra.mxu0 %v853
    %1058 = vmatprep.subr.mxu0 %v844
    %1059 = vmatpush1.msra.mxu0 %v843
    %1060 = vmatprep.subr.mxu0 0.0
    %1061 = vmatpush2.msra.mxu0 0.0
    %1062 = vmatprep.subr.mxu0 0.0
    %1063 = vmatpush2.msra.mxu0 0.0
    %1064 = vmatprep.subr.mxu0 0.0
    %1065 = vmatpush2.msra.mxu0 0.0
    %1066 = vmatprep.subr.mxu0 0.0
    %1067 = vmatpush2.msra.mxu0 0.0
    %1068 = vmatprep.subr.mxu0 0.0
    %1069 = vmatpush2.msra.mxu0 0.0
    %1070 = vmatprep.subr.mxu0 0.0
    %1071 = vmatpush2.msra.mxu0 0.0
    %1072 = vmatprep.subr.mxu0 0.0
    %1073 = vmatpush2.msra.mxu0 0.0
    %1074 = vmatprep.subr.mxu0 0.0
    %1075 = vmatpush2.msra.mxu0 0.0
    %1076 = vmatprep.subr.mxu0 0.0
    %1077 = vmatpush2.msra.mxu0 0.0
    %1078 = vmatprep.subr.mxu0 0.0
    %1079 = vmatpush2.msra.mxu0 0.0
    %1080 = vmatprep.subr.mxu0 0.0
    %1081 = vmatpush2.msra.mxu0 0.0
    %1082 = vmatprep.subr.mxu0 0.0
    %1083 = vmatpush2.msra.mxu0 0.0
    %1084 = vmatprep.subr.mxu0 0.0
    %1085 = vmatpush2.msra.mxu0 0.0
    %1086 = vmatprep.subr.mxu0 0.0
    %1087 = vmatpush2.msra.mxu0 0.0
    %1088 = vmatprep.subr.mxu0 0.0
    %1089 = vmatpush2.msra.mxu0 0.0
    %1090 = vmatprep.subr.mxu0 0.0
    %1091 = vmatpush2.msra.mxu0 0.0
    %1092 = vmatprep.mubr.f32.mxu0 0.0
    %1093 = vmatmul.mubr.f32.gmra.mxu0 %v981
    %v1094 = vpop.f32.mrf.mxu0
    %v1095 = vadd.f32 %v933, %v1094
    %v1096 = vpop.f32.mrf.mxu0
    %v1097 = vadd.f32 %v937, %v1096
    %1098 = vmatprep.mubr.f32.mxu0 0.0
    %1099 = vmatmul.mubr.f32.gmra.mxu0 %v984
    %v1100 = vpop.f32.mrf.mxu0
    %v1101 = vadd.f32 %v933, %v1100
    %v1102 = vpop.f32.mrf.mxu0
    %v1103 = vadd.f32 %v937, %v1102
    %1104 = vmatprep.mubr.f32.mxu0 0.0
    %1105 = vmatmul.mubr.f32.gmra.mxu0 %v987
    %v1106 = vpop.f32.mrf.mxu0
    %v1107 = vadd.f32 %v933, %v1106
    %v1108 = vpop.f32.mrf.mxu0
    %v1109 = vadd.f32 %v937, %v1108
    %1110 = vmatprep.mubr.f32.mxu0 0.0
    %1111 = vmatmul.mubr.f32.gmra.mxu0 %v990
    %v1112 = vpop.f32.mrf.mxu0
    %v1113 = vadd.f32 %v933, %v1112
    %v1114 = vpop.f32.mrf.mxu0
    %v1115 = vadd.f32 %v937, %v1114
    %1116 = vmatprep.mubr.f32.mxu0 0.0
    %1117 = vmatmul.mubr.f32.gmra.mxu0 %v993
    %v1118 = vpop.f32.mrf.mxu0
    %v1119 = vadd.f32 %v933, %v1118
    %v1120 = vpop.f32.mrf.mxu0
    %v1121 = vadd.f32 %v937, %v1120
    %1122 = vmatprep.mubr.f32.mxu0 0.0
    %1123 = vmatmul.mubr.f32.gmra.mxu0 %v996
    %v1124 = vpop.f32.mrf.mxu0
    %v1125 = vadd.f32 %v933, %v1124
    %v1126 = vpop.f32.mrf.mxu0
    %v1127 = vadd.f32 %v937, %v1126
    %1128 = vmatprep.mubr.f32.mxu0 0.0
    %1129 = vmatmul.mubr.f32.gmra.mxu0 %v999
    %v1130 = vpop.f32.mrf.mxu0
    %v1131 = vadd.f32 %v933, %v1130
    %v1132 = vpop.f32.mrf.mxu0
    %v1133 = vadd.f32 %v937, %v1132
    %1134 = vmatprep.mubr.f32.mxu0 0.0
    %1135 = vmatmul.mubr.f32.gmra.mxu0 %v1002
    %v1136 = vpop.f32.mrf.mxu0
    %v1137 = vadd.f32 %v933, %v1136
    %v1138 = vpop.f32.mrf.mxu0
    %v1139 = vadd.f32 %v937, %v1138
    %1140 = vmatprep.mubr.f32.mxu0 0.0
    %1141 = vmatmul.mubr.f32.gmra.mxu0 %v1005
    %v1142 = vpop.f32.mrf.mxu0
    %v1143 = vadd.f32 %v933, %v1142
    %v1144 = vpop.f32.mrf.mxu0
    %v1145 = vadd.f32 %v937, %v1144
    %1146 = vmatprep.mubr.f32.mxu0 0.0
    %1147 = vmatmul.mubr.f32.gmra.mxu0 %v1008
    %v1148 = vpop.f32.mrf.mxu0
    %v1149 = vadd.f32 %v933, %v1148
    %v1150 = vpop.f32.mrf.mxu0
    %v1151 = vadd.f32 %v937, %v1150
    %1152 = vmatprep.mubr.f32.mxu0 0.0
    %1153 = vmatmul.mubr.f32.gmra.mxu0 %v1011
    %v1154 = vpop.f32.mrf.mxu0
    %v1155 = vadd.f32 %v933, %v1154
    %v1156 = vpop.f32.mrf.mxu0
    %v1157 = vadd.f32 %v937, %v1156
    %1158 = vmatprep.mubr.f32.mxu0 0.0
    %1159 = vmatmul.mubr.f32.gmra.mxu0 %v1014
    %v1160 = vpop.f32.mrf.mxu0
    %v1161 = vadd.f32 %v933, %v1160
    %v1162 = vpop.f32.mrf.mxu0
    %v1163 = vadd.f32 %v937, %v1162
    %1164 = vmatprep.mubr.f32.mxu0 0.0
    %1165 = vmatmul.mubr.f32.gmra.mxu0 %v1017
    %v1166 = vpop.f32.mrf.mxu0
    %v1167 = vadd.f32 %v933, %v1166
    %v1168 = vpop.f32.mrf.mxu0
    %v1169 = vadd.f32 %v937, %v1168
    %1170 = vmatprep.mubr.f32.mxu0 0.0
    %1171 = vmatmul.mubr.f32.gmra.mxu0 %v1020
    %v1172 = vpop.f32.mrf.mxu0
    %v1173 = vadd.f32 %v933, %v1172
    %v1174 = vpop.f32.mrf.mxu0
    %v1175 = vadd.f32 %v937, %v1174
    %1176 = vmatprep.mubr.f32.mxu0 0.0
    %1177 = vmatmul.mubr.f32.gmra.mxu0 %v1023
    %v1178 = vpop.f32.mrf.mxu0
    %v1179 = vadd.f32 %v933, %v1178
    %v1180 = vpop.f32.mrf.mxu0
    %v1181 = vadd.f32 %v937, %v1180
    %1182 = vmatprep.mubr.f32.mxu0 0.0
    %1183 = vmatmul.mubr.f32.gmra.mxu0 %v1026
    %v1184 = vpop.f32.mrf.mxu0
    %v1185 = vadd.f32 %v933, %v1184
    %v1186 = vpop.f32.mrf.mxu0
    %v1187 = vadd.f32 %v937, %v1186
    %1188 = vdwg.mxu0
    %1189 = vmatprep.subr.mxu0 0.0
    %1190 = vmatpush1.msra.mxu0 0.0
    %1191 = vmatprep.subr.mxu0 0.0
    %1192 = vmatpush1.msra.mxu0 0.0
    %1193 = vmatprep.subr.mxu0 0.0
    %1194 = vmatpush1.msra.mxu0 0.0
    %1195 = vmatprep.subr.mxu0 0.0
    %1196 = vmatpush1.msra.mxu0 0.0
    %1197 = vmatprep.subr.mxu0 0.0
    %1198 = vmatpush1.msra.mxu0 0.0
    %1199 = vmatprep.subr.mxu0 0.0
    %1200 = vmatpush1.msra.mxu0 0.0
    %1201 = vmatprep.subr.mxu0 0.0
    %1202 = vmatpush1.msra.mxu0 0.0
    %1203 = vmatprep.subr.mxu0 0.0
    %1204 = vmatpush1.msra.mxu0 0.0
    %1205 = vmatprep.subr.mxu0 %v916
    %1206 = vmatpush1.msra.mxu0 %v915
    %1207 = vmatprep.subr.mxu0 %v906
    %1208 = vmatpush1.msra.mxu0 %v905
    %1209 = vmatprep.subr.mxu0 %v896
    %1210 = vmatpush1.msra.mxu0 %v895
    %1211 = vmatprep.subr.mxu0 %v886
    %1212 = vmatpush1.msra.mxu0 %v885
    %1213 = vmatprep.subr.mxu0 %v876
    %1214 = vmatpush1.msra.mxu0 %v875
    %1215 = vmatprep.subr.mxu0 %v866
    %1216 = vmatpush1.msra.mxu0 %v865
    %1217 = vmatprep.subr.mxu0 %v856
    %1218 = vmatpush1.msra.mxu0 %v855
    %1219 = vmatprep.subr.mxu0 %v846
    %1220 = vmatpush1.msra.mxu0 %v845
    %1221 = vmatprep.subr.mxu0 0.0
    %1222 = vmatpush2.msra.mxu0 0.0
    %1223 = vmatprep.subr.mxu0 0.0
    %1224 = vmatpush2.msra.mxu0 0.0
    %1225 = vmatprep.subr.mxu0 0.0
    %1226 = vmatpush2.msra.mxu0 0.0
    %1227 = vmatprep.subr.mxu0 0.0
    %1228 = vmatpush2.msra.mxu0 0.0
    %1229 = vmatprep.subr.mxu0 0.0
    %1230 = vmatpush2.msra.mxu0 0.0
    %1231 = vmatprep.subr.mxu0 0.0
    %1232 = vmatpush2.msra.mxu0 0.0
    %1233 = vmatprep.subr.mxu0 0.0
    %1234 = vmatpush2.msra.mxu0 0.0
    %1235 = vmatprep.subr.mxu0 0.0
    %1236 = vmatpush2.msra.mxu0 0.0
    %1237 = vmatprep.subr.mxu0 0.0
    %1238 = vmatpush2.msra.mxu0 0.0
    %1239 = vmatprep.subr.mxu0 0.0
    %1240 = vmatpush2.msra.mxu0 0.0
    %1241 = vmatprep.subr.mxu0 0.0
    %1242 = vmatpush2.msra.mxu0 0.0
    %1243 = vmatprep.subr.mxu0 0.0
    %1244 = vmatpush2.msra.mxu0 0.0
    %1245 = vmatprep.subr.mxu0 0.0
    %1246 = vmatpush2.msra.mxu0 0.0
    %1247 = vmatprep.subr.mxu0 0.0
    %1248 = vmatpush2.msra.mxu0 0.0
    %1249 = vmatprep.subr.mxu0 0.0
    %1250 = vmatpush2.msra.mxu0 0.0
    %1251 = vmatprep.subr.mxu0 0.0
    %1252 = vmatpush2.msra.mxu0 0.0
    %1253 = vmatprep.mubr.f32.mxu0 0.0
    %1254 = vmatmul.mubr.f32.gmra.mxu0 %v981
    %v1255 = vpop.f32.mrf.mxu0
    %v1256 = vadd.f32 %v941, %v1255
    %v1257 = vpop.f32.mrf.mxu0
    %v1258 = vadd.f32 %v945, %v1257
    %1259 = vmatprep.mubr.f32.mxu0 0.0
    %1260 = vmatmul.mubr.f32.gmra.mxu0 %v984
    %v1261 = vpop.f32.mrf.mxu0
    %v1262 = vadd.f32 %v941, %v1261
    %v1263 = vpop.f32.mrf.mxu0
    %v1264 = vadd.f32 %v945, %v1263
    %1265 = vmatprep.mubr.f32.mxu0 0.0
    %1266 = vmatmul.mubr.f32.gmra.mxu0 %v987
    %v1267 = vpop.f32.mrf.mxu0
    %v1268 = vadd.f32 %v941, %v1267
    %v1269 = vpop.f32.mrf.mxu0
    %v1270 = vadd.f32 %v945, %v1269
    %1271 = vmatprep.mubr.f32.mxu0 0.0
    %1272 = vmatmul.mubr.f32.gmra.mxu0 %v990
    %v1273 = vpop.f32.mrf.mxu0
    %v1274 = vadd.f32 %v941, %v1273
    %v1275 = vpop.f32.mrf.mxu0
    %v1276 = vadd.f32 %v945, %v1275
    %1277 = vmatprep.mubr.f32.mxu0 0.0
    %1278 = vmatmul.mubr.f32.gmra.mxu0 %v993
    %v1279 = vpop.f32.mrf.mxu0
    %v1280 = vadd.f32 %v941, %v1279
    %v1281 = vpop.f32.mrf.mxu0
    %v1282 = vadd.f32 %v945, %v1281
    %1283 = vmatprep.mubr.f32.mxu0 0.0
    %1284 = vmatmul.mubr.f32.gmra.mxu0 %v996
    %v1285 = vpop.f32.mrf.mxu0
    %v1286 = vadd.f32 %v941, %v1285
    %v1287 = vpop.f32.mrf.mxu0
    %v1288 = vadd.f32 %v945, %v1287
    %1289 = vmatprep.mubr.f32.mxu0 0.0
    %1290 = vmatmul.mubr.f32.gmra.mxu0 %v999
    %v1291 = vpop.f32.mrf.mxu0
    %v1292 = vadd.f32 %v941, %v1291
    %v1293 = vpop.f32.mrf.mxu0
    %v1294 = vadd.f32 %v945, %v1293
    %1295 = vmatprep.mubr.f32.mxu0 0.0
    %1296 = vmatmul.mubr.f32.gmra.mxu0 %v1002
    %v1297 = vpop.f32.mrf.mxu0
    %v1298 = vadd.f32 %v941, %v1297
    %v1299 = vpop.f32.mrf.mxu0
    %v1300 = vadd.f32 %v945, %v1299
    %1301 = vmatprep.mubr.f32.mxu0 0.0
    %1302 = vmatmul.mubr.f32.gmra.mxu0 %v1005
    %v1303 = vpop.f32.mrf.mxu0
    %v1304 = vadd.f32 %v941, %v1303
    %v1305 = vpop.f32.mrf.mxu0
    %v1306 = vadd.f32 %v945, %v1305
    %1307 = vmatprep.mubr.f32.mxu0 0.0
    %1308 = vmatmul.mubr.f32.gmra.mxu0 %v1008
    %v1309 = vpop.f32.mrf.mxu0
    %v1310 = vadd.f32 %v941, %v1309
    %v1311 = vpop.f32.mrf.mxu0
    %v1312 = vadd.f32 %v945, %v1311
    %1313 = vmatprep.mubr.f32.mxu0 0.0
    %1314 = vmatmul.mubr.f32.gmra.mxu0 %v1011
    %v1315 = vpop.f32.mrf.mxu0
    %v1316 = vadd.f32 %v941, %v1315
    %v1317 = vpop.f32.mrf.mxu0
    %v1318 = vadd.f32 %v945, %v1317
    %1319 = vmatprep.mubr.f32.mxu0 0.0
    %1320 = vmatmul.mubr.f32.gmra.mxu0 %v1014
    %v1321 = vpop.f32.mrf.mxu0
    %v1322 = vadd.f32 %v941, %v1321
    %v1323 = vpop.f32.mrf.mxu0
    %v1324 = vadd.f32 %v945, %v1323
    %1325 = vmatprep.mubr.f32.mxu0 0.0
    %1326 = vmatmul.mubr.f32.gmra.mxu0 %v1017
    %v1327 = vpop.f32.mrf.mxu0
    %v1328 = vadd.f32 %v941, %v1327
    %v1329 = vpop.f32.mrf.mxu0
    %v1330 = vadd.f32 %v945, %v1329
    %1331 = vmatprep.mubr.f32.mxu0 0.0
    %1332 = vmatmul.mubr.f32.gmra.mxu0 %v1020
    %v1333 = vpop.f32.mrf.mxu0
    %v1334 = vadd.f32 %v941, %v1333
    %v1335 = vpop.f32.mrf.mxu0
    %v1336 = vadd.f32 %v945, %v1335
    %1337 = vmatprep.mubr.f32.mxu0 0.0
    %1338 = vmatmul.mubr.f32.gmra.mxu0 %v1023
    %v1339 = vpop.f32.mrf.mxu0
    %v1340 = vadd.f32 %v941, %v1339
    %v1341 = vpop.f32.mrf.mxu0
    %v1342 = vadd.f32 %v945, %v1341
    %1343 = vmatprep.mubr.f32.mxu0 0.0
    %1344 = vmatmul.mubr.f32.gmra.mxu0 %v1026
    %v1345 = vpop.f32.mrf.mxu0
    %v1346 = vadd.f32 %v941, %v1345
    %v1347 = vpop.f32.mrf.mxu0
    %v1348 = vadd.f32 %v945, %v1347
    %1349 = vdwg.mxu0
    %1350 = vmatprep.subr.mxu0 0.0
    %1351 = vmatpush1.msra.mxu0 0.0
    %1352 = vmatprep.subr.mxu0 0.0
    %1353 = vmatpush1.msra.mxu0 0.0
    %1354 = vmatprep.subr.mxu0 0.0
    %1355 = vmatpush1.msra.mxu0 0.0
    %1356 = vmatprep.subr.mxu0 0.0
    %1357 = vmatpush1.msra.mxu0 0.0
    %1358 = vmatprep.subr.mxu0 0.0
    %1359 = vmatpush1.msra.mxu0 0.0
    %1360 = vmatprep.subr.mxu0 0.0
    %1361 = vmatpush1.msra.mxu0 0.0
    %1362 = vmatprep.subr.mxu0 0.0
    %1363 = vmatpush1.msra.mxu0 0.0
    %1364 = vmatprep.subr.mxu0 0.0
    %1365 = vmatpush1.msra.mxu0 0.0
    %1366 = vmatprep.subr.mxu0 %v918
    %1367 = vmatpush1.msra.mxu0 %v917
    %1368 = vmatprep.subr.mxu0 %v908
    %1369 = vmatpush1.msra.mxu0 %v907
    %1370 = vmatprep.subr.mxu0 %v898
    %1371 = vmatpush1.msra.mxu0 %v897
    %1372 = vmatprep.subr.mxu0 %v888
    %1373 = vmatpush1.msra.mxu0 %v887
    %1374 = vmatprep.subr.mxu0 %v878
    %1375 = vmatpush1.msra.mxu0 %v877
    %1376 = vmatprep.subr.mxu0 %v868
    %1377 = vmatpush1.msra.mxu0 %v867
    %1378 = vmatprep.subr.mxu0 %v858
    %1379 = vmatpush1.msra.mxu0 %v857
    %1380 = vmatprep.subr.mxu0 %v848
    %1381 = vmatpush1.msra.mxu0 %v847
    %1382 = vmatprep.subr.mxu0 0.0
    %1383 = vmatpush2.msra.mxu0 0.0
    %1384 = vmatprep.subr.mxu0 0.0
    %1385 = vmatpush2.msra.mxu0 0.0
    %1386 = vmatprep.subr.mxu0 0.0
    %1387 = vmatpush2.msra.mxu0 0.0
    %1388 = vmatprep.subr.mxu0 0.0
    %1389 = vmatpush2.msra.mxu0 0.0
    %1390 = vmatprep.subr.mxu0 0.0
    %1391 = vmatpush2.msra.mxu0 0.0
    %1392 = vmatprep.subr.mxu0 0.0
    %1393 = vmatpush2.msra.mxu0 0.0
    %1394 = vmatprep.subr.mxu0 0.0
    %1395 = vmatpush2.msra.mxu0 0.0
    %1396 = vmatprep.subr.mxu0 0.0
    %1397 = vmatpush2.msra.mxu0 0.0
    %1398 = vmatprep.subr.mxu0 0.0
    %1399 = vmatpush2.msra.mxu0 0.0
    %1400 = vmatprep.subr.mxu0 0.0
    %1401 = vmatpush2.msra.mxu0 0.0
    %1402 = vmatprep.subr.mxu0 0.0
    %1403 = vmatpush2.msra.mxu0 0.0
    %1404 = vmatprep.subr.mxu0 0.0
    %1405 = vmatpush2.msra.mxu0 0.0
    %1406 = vmatprep.subr.mxu0 0.0
    %1407 = vmatpush2.msra.mxu0 0.0
    %1408 = vmatprep.subr.mxu0 0.0
    %1409 = vmatpush2.msra.mxu0 0.0
    %1410 = vmatprep.subr.mxu0 0.0
    %1411 = vmatpush2.msra.mxu0 0.0
    %1412 = vmatprep.subr.mxu0 0.0
    %1413 = vmatpush2.msra.mxu0 0.0
    %1414 = vmatprep.mubr.f32.mxu0 0.0
    %1415 = vmatmul.mubr.f32.gmra.mxu0 %v981
    %v1416 = vpop.f32.mrf.mxu0
    %v1417 = vadd.f32 %v949, %v1416
    %v1418 = vpop.f32.mrf.mxu0
    %v1419 = vadd.f32 %v953, %v1418
    %1420 = vmatprep.mubr.f32.mxu0 0.0
    %1421 = vmatmul.mubr.f32.gmra.mxu0 %v984
    %v1422 = vpop.f32.mrf.mxu0
    %v1423 = vadd.f32 %v949, %v1422
    %v1424 = vpop.f32.mrf.mxu0
    %v1425 = vadd.f32 %v953, %v1424
    %1426 = vmatprep.mubr.f32.mxu0 0.0
    %1427 = vmatmul.mubr.f32.gmra.mxu0 %v987
    %v1428 = vpop.f32.mrf.mxu0
    %v1429 = vadd.f32 %v949, %v1428
    %v1430 = vpop.f32.mrf.mxu0
    %v1431 = vadd.f32 %v953, %v1430
    %1432 = vmatprep.mubr.f32.mxu0 0.0
    %1433 = vmatmul.mubr.f32.gmra.mxu0 %v990
    %v1434 = vpop.f32.mrf.mxu0
    %v1435 = vadd.f32 %v949, %v1434
    %v1436 = vpop.f32.mrf.mxu0
    %v1437 = vadd.f32 %v953, %v1436
    %1438 = vmatprep.mubr.f32.mxu0 0.0
    %1439 = vmatmul.mubr.f32.gmra.mxu0 %v993
    %v1440 = vpop.f32.mrf.mxu0
    %v1441 = vadd.f32 %v949, %v1440
    %v1442 = vpop.f32.mrf.mxu0
    %v1443 = vadd.f32 %v953, %v1442
    %1444 = vmatprep.mubr.f32.mxu0 0.0
    %1445 = vmatmul.mubr.f32.gmra.mxu0 %v996
    %v1446 = vpop.f32.mrf.mxu0
    %v1447 = vadd.f32 %v949, %v1446
    %v1448 = vpop.f32.mrf.mxu0
    %v1449 = vadd.f32 %v953, %v1448
    %1450 = vmatprep.mubr.f32.mxu0 0.0
    %1451 = vmatmul.mubr.f32.gmra.mxu0 %v999
    %v1452 = vpop.f32.mrf.mxu0
    %v1453 = vadd.f32 %v949, %v1452
    %v1454 = vpop.f32.mrf.mxu0
    %v1455 = vadd.f32 %v953, %v1454
    %1456 = vmatprep.mubr.f32.mxu0 0.0
    %1457 = vmatmul.mubr.f32.gmra.mxu0 %v1002
    %v1458 = vpop.f32.mrf.mxu0
    %v1459 = vadd.f32 %v949, %v1458
    %v1460 = vpop.f32.mrf.mxu0
    %v1461 = vadd.f32 %v953, %v1460
    %1462 = vmatprep.mubr.f32.mxu0 0.0
    %1463 = vmatmul.mubr.f32.gmra.mxu0 %v1005
    %v1464 = vpop.f32.mrf.mxu0
    %v1465 = vadd.f32 %v949, %v1464
    %v1466 = vpop.f32.mrf.mxu0
    %v1467 = vadd.f32 %v953, %v1466
    %1468 = vmatprep.mubr.f32.mxu0 0.0
    %1469 = vmatmul.mubr.f32.gmra.mxu0 %v1008
    %v1470 = vpop.f32.mrf.mxu0
    %v1471 = vadd.f32 %v949, %v1470
    %v1472 = vpop.f32.mrf.mxu0
    %v1473 = vadd.f32 %v953, %v1472
    %1474 = vmatprep.mubr.f32.mxu0 0.0
    %1475 = vmatmul.mubr.f32.gmra.mxu0 %v1011
    %v1476 = vpop.f32.mrf.mxu0
    %v1477 = vadd.f32 %v949, %v1476
    %v1478 = vpop.f32.mrf.mxu0
    %v1479 = vadd.f32 %v953, %v1478
    %1480 = vmatprep.mubr.f32.mxu0 0.0
    %1481 = vmatmul.mubr.f32.gmra.mxu0 %v1014
    %v1482 = vpop.f32.mrf.mxu0
    %v1483 = vadd.f32 %v949, %v1482
    %v1484 = vpop.f32.mrf.mxu0
    %v1485 = vadd.f32 %v953, %v1484
    %1486 = vmatprep.mubr.f32.mxu0 0.0
    %1487 = vmatmul.mubr.f32.gmra.mxu0 %v1017
    %v1488 = vpop.f32.mrf.mxu0
    %v1489 = vadd.f32 %v949, %v1488
    %v1490 = vpop.f32.mrf.mxu0
    %v1491 = vadd.f32 %v953, %v1490
    %1492 = vmatprep.mubr.f32.mxu0 0.0
    %1493 = vmatmul.mubr.f32.gmra.mxu0 %v1020
    %v1494 = vpop.f32.mrf.mxu0
    %v1495 = vadd.f32 %v949, %v1494
    %v1496 = vpop.f32.mrf.mxu0
    %v1497 = vadd.f32 %v953, %v1496
    %1498 = vmatprep.mubr.f32.mxu0 0.0
    %1499 = vmatmul.mubr.f32.gmra.mxu0 %v1023
    %v1500 = vpop.f32.mrf.mxu0
    %v1501 = vadd.f32 %v949, %v1500
    %v1502 = vpop.f32.mrf.mxu0
    %v1503 = vadd.f32 %v953, %v1502
    %1504 = vmatprep.mubr.f32.mxu0 0.0
    %1505 = vmatmul.mubr.f32.gmra.mxu0 %v1026
    %v1506 = vpop.f32.mrf.mxu0
    %v1507 = vadd.f32 %v949, %v1506
    %v1508 = vpop.f32.mrf.mxu0
    %v1509 = vadd.f32 %v953, %v1508
    %1510 = vdwg.mxu0
    %1511 = vmatprep.subr.mxu0 0.0
    %1512 = vmatpush1.msra.mxu0 0.0
    %1513 = vmatprep.subr.mxu0 0.0
    %1514 = vmatpush1.msra.mxu0 0.0
    %1515 = vmatprep.subr.mxu0 0.0
    %1516 = vmatpush1.msra.mxu0 0.0
    %1517 = vmatprep.subr.mxu0 0.0
    %1518 = vmatpush1.msra.mxu0 0.0
    %1519 = vmatprep.subr.mxu0 0.0
    %1520 = vmatpush1.msra.mxu0 0.0
    %1521 = vmatprep.subr.mxu0 0.0
    %1522 = vmatpush1.msra.mxu0 0.0
    %1523 = vmatprep.subr.mxu0 0.0
    %1524 = vmatpush1.msra.mxu0 0.0
    %1525 = vmatprep.subr.mxu0 0.0
    %1526 = vmatpush1.msra.mxu0 0.0
    %1527 = vmatprep.subr.mxu0 %v920
    %1528 = vmatpush1.msra.mxu0 %v919
    %1529 = vmatprep.subr.mxu0 %v910
    %1530 = vmatpush1.msra.mxu0 %v909
    %1531 = vmatprep.subr.mxu0 %v900
    %1532 = vmatpush1.msra.mxu0 %v899
    %1533 = vmatprep.subr.mxu0 %v890
    %1534 = vmatpush1.msra.mxu0 %v889
    %1535 = vmatprep.subr.mxu0 %v880
    %1536 = vmatpush1.msra.mxu0 %v879
    %1537 = vmatprep.subr.mxu0 %v870
    %1538 = vmatpush1.msra.mxu0 %v869
    %1539 = vmatprep.subr.mxu0 %v860
    %1540 = vmatpush1.msra.mxu0 %v859
    %1541 = vmatprep.subr.mxu0 %v850
    %1542 = vmatpush1.msra.mxu0 %v849
    %1543 = vmatprep.subr.mxu0 0.0
    %1544 = vmatpush2.msra.mxu0 0.0
    %1545 = vmatprep.subr.mxu0 0.0
    %1546 = vmatpush2.msra.mxu0 0.0
    %1547 = vmatprep.subr.mxu0 0.0
    %1548 = vmatpush2.msra.mxu0 0.0
    %1549 = vmatprep.subr.mxu0 0.0
    %1550 = vmatpush2.msra.mxu0 0.0
    %1551 = vmatprep.subr.mxu0 0.0
    %1552 = vmatpush2.msra.mxu0 0.0
    %1553 = vmatprep.subr.mxu0 0.0
    %1554 = vmatpush2.msra.mxu0 0.0
    %1555 = vmatprep.subr.mxu0 0.0
    %1556 = vmatpush2.msra.mxu0 0.0
    %1557 = vmatprep.subr.mxu0 0.0
    %1558 = vmatpush2.msra.mxu0 0.0
    %1559 = vmatprep.subr.mxu0 0.0
    %1560 = vmatpush2.msra.mxu0 0.0
    %1561 = vmatprep.subr.mxu0 0.0
    %1562 = vmatpush2.msra.mxu0 0.0
    %1563 = vmatprep.subr.mxu0 0.0
    %1564 = vmatpush2.msra.mxu0 0.0
    %1565 = vmatprep.subr.mxu0 0.0
    %1566 = vmatpush2.msra.mxu0 0.0
    %1567 = vmatprep.subr.mxu0 0.0
    %1568 = vmatpush2.msra.mxu0 0.0
    %1569 = vmatprep.subr.mxu0 0.0
    %1570 = vmatpush2.msra.mxu0 0.0
    %1571 = vmatprep.subr.mxu0 0.0
    %1572 = vmatpush2.msra.mxu0 0.0
    %1573 = vmatprep.subr.mxu0 0.0
    %1574 = vmatpush2.msra.mxu0 0.0
    %1575 = vmatprep.mubr.f32.mxu0 0.0
    %1576 = vmatmul.mubr.f32.gmra.mxu0 %v981
    %v1577 = vpop.f32.mrf.mxu0
    %v1578 = vadd.f32 %v957, %v1577
    %v1579 = vpop.f32.mrf.mxu0
    %v1580 = vadd.f32 %v961, %v1579
    %1581 = vmatprep.mubr.f32.mxu0 0.0
    %1582 = vmatmul.mubr.f32.gmra.mxu0 %v984
    %v1583 = vpop.f32.mrf.mxu0
    %v1584 = vadd.f32 %v957, %v1583
    %v1585 = vpop.f32.mrf.mxu0
    %v1586 = vadd.f32 %v961, %v1585
    %1587 = vmatprep.mubr.f32.mxu0 0.0
    %1588 = vmatmul.mubr.f32.gmra.mxu0 %v987
    %v1589 = vpop.f32.mrf.mxu0
    %v1590 = vadd.f32 %v957, %v1589
    %v1591 = vpop.f32.mrf.mxu0
    %v1592 = vadd.f32 %v961, %v1591
    %1593 = vmatprep.mubr.f32.mxu0 0.0
    %1594 = vmatmul.mubr.f32.gmra.mxu0 %v990
    %v1595 = vpop.f32.mrf.mxu0
    %v1596 = vadd.f32 %v957, %v1595
    %v1597 = vpop.f32.mrf.mxu0
    %v1598 = vadd.f32 %v961, %v1597
    %1599 = vmatprep.mubr.f32.mxu0 0.0
    %1600 = vmatmul.mubr.f32.gmra.mxu0 %v993
    %v1601 = vpop.f32.mrf.mxu0
    %v1602 = vadd.f32 %v957, %v1601
    %v1603 = vpop.f32.mrf.mxu0
    %v1604 = vadd.f32 %v961, %v1603
    %1605 = vmatprep.mubr.f32.mxu0 0.0
    %1606 = vmatmul.mubr.f32.gmra.mxu0 %v996
    %v1607 = vpop.f32.mrf.mxu0
    %v1608 = vadd.f32 %v957, %v1607
    %v1609 = vpop.f32.mrf.mxu0
    %v1610 = vadd.f32 %v961, %v1609
    %1611 = vmatprep.mubr.f32.mxu0 0.0
    %1612 = vmatmul.mubr.f32.gmra.mxu0 %v999
    %v1613 = vpop.f32.mrf.mxu0
    %v1614 = vadd.f32 %v957, %v1613
    %v1615 = vpop.f32.mrf.mxu0
    %v1616 = vadd.f32 %v961, %v1615
    %1617 = vmatprep.mubr.f32.mxu0 0.0
    %1618 = vmatmul.mubr.f32.gmra.mxu0 %v1002
    %v1619 = vpop.f32.mrf.mxu0
    %v1620 = vadd.f32 %v957, %v1619
    %v1621 = vpop.f32.mrf.mxu0
    %v1622 = vadd.f32 %v961, %v1621
    %1623 = vmatprep.mubr.f32.mxu0 0.0
    %1624 = vmatmul.mubr.f32.gmra.mxu0 %v1005
    %v1625 = vpop.f32.mrf.mxu0
    %v1626 = vadd.f32 %v957, %v1625
    %v1627 = vpop.f32.mrf.mxu0
    %v1628 = vadd.f32 %v961, %v1627
    %1629 = vmatprep.mubr.f32.mxu0 0.0
    %1630 = vmatmul.mubr.f32.gmra.mxu0 %v1008
    %v1631 = vpop.f32.mrf.mxu0
    %v1632 = vadd.f32 %v957, %v1631
    %v1633 = vpop.f32.mrf.mxu0
    %v1634 = vadd.f32 %v961, %v1633
    %1635 = vmatprep.mubr.f32.mxu0 0.0
    %1636 = vmatmul.mubr.f32.gmra.mxu0 %v1011
    %v1637 = vpop.f32.mrf.mxu0
    %v1638 = vadd.f32 %v957, %v1637
    %v1639 = vpop.f32.mrf.mxu0
    %v1640 = vadd.f32 %v961, %v1639
    %1641 = vmatprep.mubr.f32.mxu0 0.0
    %1642 = vmatmul.mubr.f32.gmra.mxu0 %v1014
    %v1643 = vpop.f32.mrf.mxu0
    %v1644 = vadd.f32 %v957, %v1643
    %v1645 = vpop.f32.mrf.mxu0
    %v1646 = vadd.f32 %v961, %v1645
    %1647 = vmatprep.mubr.f32.mxu0 0.0
    %1648 = vmatmul.mubr.f32.gmra.mxu0 %v1017
    %v1649 = vpop.f32.mrf.mxu0
    %v1650 = vadd.f32 %v957, %v1649
    %v1651 = vpop.f32.mrf.mxu0
    %v1652 = vadd.f32 %v961, %v1651
    %1653 = vmatprep.mubr.f32.mxu0 0.0
    %1654 = vmatmul.mubr.f32.gmra.mxu0 %v1020
    %v1655 = vpop.f32.mrf.mxu0
    %v1656 = vadd.f32 %v957, %v1655
    %v1657 = vpop.f32.mrf.mxu0
    %v1658 = vadd.f32 %v961, %v1657
    %1659 = vmatprep.mubr.f32.mxu0 0.0
    %1660 = vmatmul.mubr.f32.gmra.mxu0 %v1023
    %v1661 = vpop.f32.mrf.mxu0
    %v1662 = vadd.f32 %v957, %v1661
    %v1663 = vpop.f32.mrf.mxu0
    %v1664 = vadd.f32 %v961, %v1663
    %1665 = vmatprep.mubr.f32.mxu0 0.0
    %1666 = vmatmul.mubr.f32.gmra.mxu0 %v1026
    %v1667 = vpop.f32.mrf.mxu0
    %v1668 = vadd.f32 %v957, %v1667
    %v1669 = vpop.f32.mrf.mxu0
    %v1670 = vadd.f32 %v961, %v1669
    %1671 = vdwg.mxu0
    %1672 = vmatprep.subr.mxu0 0.0
    %1673 = vmatpush1.msra.mxu0 0.0
    %1674 = vmatprep.subr.mxu0 0.0
    %1675 = vmatpush1.msra.mxu0 0.0
    %1676 = vmatprep.subr.mxu0 0.0
    %1677 = vmatpush1.msra.mxu0 0.0
    %1678 = vmatprep.subr.mxu0 0.0
    %1679 = vmatpush1.msra.mxu0 0.0
    %1680 = vmatprep.subr.mxu0 0.0
    %1681 = vmatpush1.msra.mxu0 0.0
    %1682 = vmatprep.subr.mxu0 0.0
    %1683 = vmatpush1.msra.mxu0 0.0
    %1684 = vmatprep.subr.mxu0 0.0
    %1685 = vmatpush1.msra.mxu0 0.0
    %1686 = vmatprep.subr.mxu0 0.0
    %1687 = vmatpush1.msra.mxu0 0.0
    %1688 = vmatprep.subr.mxu0 %v922
    %1689 = vmatpush1.msra.mxu0 %v921
    %1690 = vmatprep.subr.mxu0 %v912
    %1691 = vmatpush1.msra.mxu0 %v911
    %1692 = vmatprep.subr.mxu0 %v902
    %1693 = vmatpush1.msra.mxu0 %v901
    %1694 = vmatprep.subr.mxu0 %v892
    %1695 = vmatpush1.msra.mxu0 %v891
    %1696 = vmatprep.subr.mxu0 %v882
    %1697 = vmatpush1.msra.mxu0 %v881
    %1698 = vmatprep.subr.mxu0 %v872
    %1699 = vmatpush1.msra.mxu0 %v871
    %1700 = vmatprep.subr.mxu0 %v862
    %1701 = vmatpush1.msra.mxu0 %v861
    %1702 = vmatprep.subr.mxu0 %v852
    %1703 = vmatpush1.msra.mxu0 %v851
    %1704 = vmatprep.subr.mxu0 0.0
    %1705 = vmatpush2.msra.mxu0 0.0
    %1706 = vmatprep.subr.mxu0 0.0
    %1707 = vmatpush2.msra.mxu0 0.0
    %1708 = vmatprep.subr.mxu0 0.0
    %1709 = vmatpush2.msra.mxu0 0.0
    %1710 = vmatprep.subr.mxu0 0.0
    %1711 = vmatpush2.msra.mxu0 0.0
    %1712 = vmatprep.subr.mxu0 0.0
    %1713 = vmatpush2.msra.mxu0 0.0
    %1714 = vmatprep.subr.mxu0 0.0
    %1715 = vmatpush2.msra.mxu0 0.0
    %1716 = vmatprep.subr.mxu0 0.0
    %1717 = vmatpush2.msra.mxu0 0.0
    %1718 = vmatprep.subr.mxu0 0.0
    %1719 = vmatpush2.msra.mxu0 0.0
    %1720 = vmatprep.subr.mxu0 0.0
    %1721 = vmatpush2.msra.mxu0 0.0
    %1722 = vmatprep.subr.mxu0 0.0
    %1723 = vmatpush2.msra.mxu0 0.0
    %1724 = vmatprep.subr.mxu0 0.0
    %1725 = vmatpush2.msra.mxu0 0.0
    %1726 = vmatprep.subr.mxu0 0.0
    %1727 = vmatpush2.msra.mxu0 0.0
    %1728 = vmatprep.subr.mxu0 0.0
    %1729 = vmatpush2.msra.mxu0 0.0
    %1730 = vmatprep.subr.mxu0 0.0
    %1731 = vmatpush2.msra.mxu0 0.0
    %1732 = vmatprep.subr.mxu0 0.0
    %1733 = vmatpush2.msra.mxu0 0.0
    %1734 = vmatprep.subr.mxu0 0.0
    %1735 = vmatpush2.msra.mxu0 0.0
    %1736 = vmatprep.mubr.f32.mxu0 0.0
    %1737 = vmatmul.mubr.f32.gmra.mxu0 %v981
    %v1738 = vpop.f32.mrf.mxu0
    %v1739 = vadd.f32 %v965, %v1738
    %v1740 = vpop.f32.mrf.mxu0
    %v1741 = vadd.f32 %v969, %v1740
    %1742 = vmatprep.mubr.f32.mxu0 0.0
    %1743 = vmatmul.mubr.f32.gmra.mxu0 %v984
    %v1744 = vpop.f32.mrf.mxu0
    %v1745 = vadd.f32 %v965, %v1744
    %v1746 = vpop.f32.mrf.mxu0
    %v1747 = vadd.f32 %v969, %v1746
    %1748 = vmatprep.mubr.f32.mxu0 0.0
    %1749 = vmatmul.mubr.f32.gmra.mxu0 %v987
    %v1750 = vpop.f32.mrf.mxu0
    %v1751 = vadd.f32 %v965, %v1750
    %v1752 = vpop.f32.mrf.mxu0
    %v1753 = vadd.f32 %v969, %v1752
    %1754 = vmatprep.mubr.f32.mxu0 0.0
    %1755 = vmatmul.mubr.f32.gmra.mxu0 %v990
    %v1756 = vpop.f32.mrf.mxu0
    %v1757 = vadd.f32 %v965, %v1756
    %v1758 = vpop.f32.mrf.mxu0
    %v1759 = vadd.f32 %v969, %v1758
    %1760 = vmatprep.mubr.f32.mxu0 0.0
    %1761 = vmatmul.mubr.f32.gmra.mxu0 %v993
    %v1762 = vpop.f32.mrf.mxu0
    %v1763 = vadd.f32 %v965, %v1762
    %v1764 = vpop.f32.mrf.mxu0
    %v1765 = vadd.f32 %v969, %v1764
    %1766 = vmatprep.mubr.f32.mxu0 0.0
    %1767 = vmatmul.mubr.f32.gmra.mxu0 %v996
    %v1768 = vpop.f32.mrf.mxu0
    %v1769 = vadd.f32 %v965, %v1768
    %v1770 = vpop.f32.mrf.mxu0
    %v1771 = vadd.f32 %v969, %v1770
    %1772 = vmatprep.mubr.f32.mxu0 0.0
    %1773 = vmatmul.mubr.f32.gmra.mxu0 %v999
    %v1774 = vpop.f32.mrf.mxu0
    %v1775 = vadd.f32 %v965, %v1774
    %v1776 = vpop.f32.mrf.mxu0
    %v1777 = vadd.f32 %v969, %v1776
    %1778 = vmatprep.mubr.f32.mxu0 0.0
    %1779 = vmatmul.mubr.f32.gmra.mxu0 %v1002
    %v1780 = vpop.f32.mrf.mxu0
    %v1781 = vadd.f32 %v965, %v1780
    %v1782 = vpop.f32.mrf.mxu0
    %v1783 = vadd.f32 %v969, %v1782
    %1784 = vmatprep.mubr.f32.mxu0 0.0
    %1785 = vmatmul.mubr.f32.gmra.mxu0 %v1005
    %v1786 = vpop.f32.mrf.mxu0
    %v1787 = vadd.f32 %v965, %v1786
    %v1788 = vpop.f32.mrf.mxu0
    %v1789 = vadd.f32 %v969, %v1788
    %1790 = vmatprep.mubr.f32.mxu0 0.0
    %1791 = vmatmul.mubr.f32.gmra.mxu0 %v1008
    %v1792 = vpop.f32.mrf.mxu0
    %v1793 = vadd.f32 %v965, %v1792
    %v1794 = vpop.f32.mrf.mxu0
    %v1795 = vadd.f32 %v969, %v1794
    %1796 = vmatprep.mubr.f32.mxu0 0.0
    %1797 = vmatmul.mubr.f32.gmra.mxu0 %v1011
    %v1798 = vpop.f32.mrf.mxu0
    %v1799 = vadd.f32 %v965, %v1798
    %v1800 = vpop.f32.mrf.mxu0
    %v1801 = vadd.f32 %v969, %v1800
    %1802 = vmatprep.mubr.f32.mxu0 0.0
    %1803 = vmatmul.mubr.f32.gmra.mxu0 %v1014
    %v1804 = vpop.f32.mrf.mxu0
    %v1805 = vadd.f32 %v965, %v1804
    %v1806 = vpop.f32.mrf.mxu0
    %v1807 = vadd.f32 %v969, %v1806
    %1808 = vmatprep.mubr.f32.mxu0 0.0
    %1809 = vmatmul.mubr.f32.gmra.mxu0 %v1017
    %v1810 = vpop.f32.mrf.mxu0
    %v1811 = vadd.f32 %v965, %v1810
    %v1812 = vpop.f32.mrf.mxu0
    %v1813 = vadd.f32 %v969, %v1812
    %1814 = vmatprep.mubr.f32.mxu0 0.0
    %1815 = vmatmul.mubr.f32.gmra.mxu0 %v1020
    %v1816 = vpop.f32.mrf.mxu0
    %v1817 = vadd.f32 %v965, %v1816
    %v1818 = vpop.f32.mrf.mxu0
    %v1819 = vadd.f32 %v969, %v1818
    %1820 = vmatprep.mubr.f32.mxu0 0.0
    %1821 = vmatmul.mubr.f32.gmra.mxu0 %v1023
    %v1822 = vpop.f32.mrf.mxu0
    %v1823 = vadd.f32 %v965, %v1822
    %v1824 = vpop.f32.mrf.mxu0
    %v1825 = vadd.f32 %v969, %v1824
    %1826 = vmatprep.mubr.f32.mxu0 0.0
    %1827 = vmatmul.mubr.f32.gmra.mxu0 %v1026
    %v1828 = vpop.f32.mrf.mxu0
    %v1829 = vadd.f32 %v965, %v1828
    %v1830 = vpop.f32.mrf.mxu0
    %v1831 = vadd.f32 %v969, %v1830
    %1832 = vdwg.mxu0
    %v1833 = vmax.f32 %v1095, 0.0
    %v1834 = vmax.f32 %v1097, 0.0
    %v1835 = vmax.f32 %v1256, 0.0
    %v1836 = vmax.f32 %v1258, 0.0
    %v1837 = vmax.f32 %v1417, 0.0
    %v1838 = vmax.f32 %v1419, 0.0
    %v1839 = vmax.f32 %v1578, 0.0
    %v1840 = vmax.f32 %v1580, 0.0
    %v1841 = vmax.f32 %v1739, 0.0
    %v1842 = vmax.f32 %v1741, 0.0
    %v1843 = vmax.f32 %v1101, 0.0
    %v1844 = vmax.f32 %v1103, 0.0
    %v1845 = vmax.f32 %v1262, 0.0
    %v1846 = vmax.f32 %v1264, 0.0
    %v1847 = vmax.f32 %v1423, 0.0
    %v1848 = vmax.f32 %v1425, 0.0
    %v1849 = vmax.f32 %v1584, 0.0
    %v1850 = vmax.f32 %v1586, 0.0
    %v1851 = vmax.f32 %v1745, 0.0
    %v1852 = vmax.f32 %v1747, 0.0
    %v1853 = vmax.f32 %v1107, 0.0
    %v1854 = vmax.f32 %v1109, 0.0
    %v1855 = vmax.f32 %v1268, 0.0
    %v1856 = vmax.f32 %v1270, 0.0
    %v1857 = vmax.f32 %v1429, 0.0
    %v1858 = vmax.f32 %v1431, 0.0
    %v1859 = vmax.f32 %v1590, 0.0
    %v1860 = vmax.f32 %v1592, 0.0
    %v1861 = vmax.f32 %v1751, 0.0
    %v1862 = vmax.f32 %v1753, 0.0
    %v1863 = vmax.f32 %v1113, 0.0
    %v1864 = vmax.f32 %v1115, 0.0
    %v1865 = vmax.f32 %v1274, 0.0
    %v1866 = vmax.f32 %v1276, 0.0
    %v1867 = vmax.f32 %v1435, 0.0
    %v1868 = vmax.f32 %v1437, 0.0
    %v1869 = vmax.f32 %v1596, 0.0
    %v1870 = vmax.f32 %v1598, 0.0
    %v1871 = vmax.f32 %v1757, 0.0
    %v1872 = vmax.f32 %v1759, 0.0
    %v1873 = vmax.f32 %v1119, 0.0
    %v1874 = vmax.f32 %v1121, 0.0
    %v1875 = vmax.f32 %v1280, 0.0
    %v1876 = vmax.f32 %v1282, 0.0
    %v1877 = vmax.f32 %v1441, 0.0
    %v1878 = vmax.f32 %v1443, 0.0
    %v1879 = vmax.f32 %v1602, 0.0
    %v1880 = vmax.f32 %v1604, 0.0
    %v1881 = vmax.f32 %v1763, 0.0
    %v1882 = vmax.f32 %v1765, 0.0
    %v1883 = vmax.f32 %v1125, 0.0
    %v1884 = vmax.f32 %v1127, 0.0
    %v1885 = vmax.f32 %v1286, 0.0
    %v1886 = vmax.f32 %v1288, 0.0
    %v1887 = vmax.f32 %v1447, 0.0
    %v1888 = vmax.f32 %v1449, 0.0
    %v1889 = vmax.f32 %v1608, 0.0
    %v1890 = vmax.f32 %v1610, 0.0
    %v1891 = vmax.f32 %v1769, 0.0
    %v1892 = vmax.f32 %v1771, 0.0
    %v1893 = vmax.f32 %v1131, 0.0
    %v1894 = vmax.f32 %v1133, 0.0
    %v1895 = vmax.f32 %v1292, 0.0
    %v1896 = vmax.f32 %v1294, 0.0
    %v1897 = vmax.f32 %v1453, 0.0
    %v1898 = vmax.f32 %v1455, 0.0
    %v1899 = vmax.f32 %v1614, 0.0
    %v1900 = vmax.f32 %v1616, 0.0
    %v1901 = vmax.f32 %v1775, 0.0
    %v1902 = vmax.f32 %v1777, 0.0
    %v1903 = vmax.f32 %v1137, 0.0
    %v1904 = vmax.f32 %v1139, 0.0
    %v1905 = vmax.f32 %v1298, 0.0
    %v1906 = vmax.f32 %v1300, 0.0
    %v1907 = vmax.f32 %v1459, 0.0
    %v1908 = vmax.f32 %v1461, 0.0
    %v1909 = vmax.f32 %v1620, 0.0
    %v1910 = vmax.f32 %v1622, 0.0
    %v1911 = vmax.f32 %v1781, 0.0
    %v1912 = vmax.f32 %v1783, 0.0
    %v1913 = vmax.f32 %v1143, 0.0
    %v1914 = vmax.f32 %v1145, 0.0
    %v1915 = vmax.f32 %v1304, 0.0
    %v1916 = vmax.f32 %v1306, 0.0
    %v1917 = vmax.f32 %v1465, 0.0
    %v1918 = vmax.f32 %v1467, 0.0
    %v1919 = vmax.f32 %v1626, 0.0
    %v1920 = vmax.f32 %v1628, 0.0
    %v1921 = vmax.f32 %v1787, 0.0
    %v1922 = vmax.f32 %v1789, 0.0
    %v1923 = vmax.f32 %v1149, 0.0
    %v1924 = vmax.f32 %v1151, 0.0
    %v1925 = vmax.f32 %v1310, 0.0
    %v1926 = vmax.f32 %v1312, 0.0
    %v1927 = vmax.f32 %v1471, 0.0
    %v1928 = vmax.f32 %v1473, 0.0
    %v1929 = vmax.f32 %v1632, 0.0
    %v1930 = vmax.f32 %v1634, 0.0
    %v1931 = vmax.f32 %v1793, 0.0
    %v1932 = vmax.f32 %v1795, 0.0
    %v1933 = vmax.f32 %v1155, 0.0
    %v1934 = vmax.f32 %v1157, 0.0
    %v1935 = vmax.f32 %v1316, 0.0
    %v1936 = vmax.f32 %v1318, 0.0
    %v1937 = vmax.f32 %v1477, 0.0
    %v1938 = vmax.f32 %v1479, 0.0
    %v1939 = vmax.f32 %v1638, 0.0
    %v1940 = vmax.f32 %v1640, 0.0
    %v1941 = vmax.f32 %v1799, 0.0
    %v1942 = vmax.f32 %v1801, 0.0
    %v1943 = vmax.f32 %v1161, 0.0
    %v1944 = vmax.f32 %v1163, 0.0
    %v1945 = vmax.f32 %v1322, 0.0
    %v1946 = vmax.f32 %v1324, 0.0
    %v1947 = vmax.f32 %v1483, 0.0
    %v1948 = vmax.f32 %v1485, 0.0
    %v1949 = vmax.f32 %v1644, 0.0
    %v1950 = vmax.f32 %v1646, 0.0
    %v1951 = vmax.f32 %v1805, 0.0
    %v1952 = vmax.f32 %v1807, 0.0
    %v1953 = vmax.f32 %v1167, 0.0
    %v1954 = vmax.f32 %v1169, 0.0
    %v1955 = vmax.f32 %v1328, 0.0
    %v1956 = vmax.f32 %v1330, 0.0
    %v1957 = vmax.f32 %v1489, 0.0
    %v1958 = vmax.f32 %v1491, 0.0
    %v1959 = vmax.f32 %v1650, 0.0
    %v1960 = vmax.f32 %v1652, 0.0
    %v1961 = vmax.f32 %v1811, 0.0
    %v1962 = vmax.f32 %v1813, 0.0
    %v1963 = vmax.f32 %v1173, 0.0
    %v1964 = vmax.f32 %v1175, 0.0
    %v1965 = vmax.f32 %v1334, 0.0
    %v1966 = vmax.f32 %v1336, 0.0
    %v1967 = vmax.f32 %v1495, 0.0
    %v1968 = vmax.f32 %v1497, 0.0
    %v1969 = vmax.f32 %v1656, 0.0
    %v1970 = vmax.f32 %v1658, 0.0
    %v1971 = vmax.f32 %v1817, 0.0
    %v1972 = vmax.f32 %v1819, 0.0
    %v1973 = vmax.f32 %v1179, 0.0
    %v1974 = vmax.f32 %v1181, 0.0
    %v1975 = vmax.f32 %v1340, 0.0
    %v1976 = vmax.f32 %v1342, 0.0
    %v1977 = vmax.f32 %v1501, 0.0
    %v1978 = vmax.f32 %v1503, 0.0
    %v1979 = vmax.f32 %v1662, 0.0
    %v1980 = vmax.f32 %v1664, 0.0
    %v1981 = vmax.f32 %v1823, 0.0
    %v1982 = vmax.f32 %v1825, 0.0
    %v1983 = vmax.f32 %v1185, 0.0
    %v1984 = vmax.f32 %v1187, 0.0
    %v1985 = vmax.f32 %v1346, 0.0
    %v1986 = vmax.f32 %v1348, 0.0
    %v1987 = vmax.f32 %v1507, 0.0
    %v1988 = vmax.f32 %v1509, 0.0
    %v1989 = vmax.f32 %v1668, 0.0
    %v1990 = vmax.f32 %v1670, 0.0
    %v1991 = vmax.f32 %v1829, 0.0
    %v1992 = vmax.f32 %v1831, 0.0
    %v1993 = vlaneseq
    %v1994 = vand.u32 %v1993, 127
    %v1995 = vadd.s32 %v1994, 128
    %v1996 = vadd.s32 %v1994, 256
    %v1997 = vadd.s32 %v1994, 384
    %v1998 = vadd.s32 %v1994, 512
    %v1999 = vadd.s32 %v1994, 640
    %v2000 = vadd.s32 %v1994, 768
    %v2001 = vadd.s32 %v1994, 896
    %v2002 = vadd.s32 %v1994, 1024
    %v2003 = vadd.s32 %v1994, 1152
    %v2004 = vlaneseq
    %v2005 = vshrl.u32 %v2004, 7
    %v2006 = vadd.s32 %v2005, 8
    %v2007 = vadd.s32 %v2005, 16
    %v2008 = vmul.u32 %v2005, 64
    %v2009 = vmul.u32 %v2006, 64
    %v2010 = vmul.u32 %v2007, 64
    %vm2011 = vcmp.ge.s32.totalorder %v1994, %v2008
    %vm2012 = vcmp.ge.s32.totalorder %v1995, %v2008
    %vm2013 = vcmp.ge.s32.totalorder %v1996, %v2008
    %vm2014 = vcmp.ge.s32.totalorder %v1997, %v2008
    %vm2015 = vcmp.ge.s32.totalorder %v1998, %v2008
    %vm2016 = vcmp.ge.s32.totalorder %v1999, %v2008
    %vm2017 = vcmp.ge.s32.totalorder %v2000, %v2008
    %vm2018 = vcmp.ge.s32.totalorder %v2001, %v2008
    %vm2019 = vcmp.ge.s32.totalorder %v2002, %v2008
    %vm2020 = vcmp.ge.s32.totalorder %v2003, %v2008
    %vm2021 = vcmp.ge.s32.totalorder %v1994, %v2009
    %vm2022 = vcmp.ge.s32.totalorder %v1995, %v2009
    %vm2023 = vcmp.ge.s32.totalorder %v1996, %v2009
    %vm2024 = vcmp.ge.s32.totalorder %v1997, %v2009
    %vm2025 = vcmp.ge.s32.totalorder %v1998, %v2009
    %vm2026 = vcmp.ge.s32.totalorder %v1999, %v2009
    %vm2027 = vcmp.ge.s32.totalorder %v2000, %v2009
    %vm2028 = vcmp.ge.s32.totalorder %v2001, %v2009
    %vm2029 = vcmp.ge.s32.totalorder %v2002, %v2009
    %vm2030 = vcmp.ge.s32.totalorder %v2003, %v2009
    %vm2031 = vcmp.ge.s32.totalorder %v1994, %v2010
    %vm2032 = vcmp.ge.s32.totalorder %v1995, %v2010
    %vm2033 = vcmp.ge.s32.totalorder %v1996, %v2010
    %vm2034 = vcmp.ge.s32.totalorder %v1997, %v2010
    %vm2035 = vcmp.ge.s32.totalorder %v1998, %v2010
    %vm2036 = vcmp.ge.s32.totalorder %v1999, %v2010
    %vm2037 = vcmp.ge.s32.totalorder %v2000, %v2010
    %vm2038 = vcmp.ge.s32.totalorder %v2001, %v2010
    %vm2039 = vcmp.ge.s32.totalorder %v2002, %v2010
    %vm2040 = vcmp.ge.s32.totalorder %v2003, %v2010
    %v2041 = vadd.s32 %v2008, 64
    %v2042 = vadd.s32 %v2009, 64
    %v2043 = vadd.s32 %v2010, 64
    %vm2044 = vcmp.lt.s32.totalorder %v1994, %v2041
    %vm2045 = vcmp.lt.s32.totalorder %v1995, %v2041
    %vm2046 = vcmp.lt.s32.totalorder %v1996, %v2041
    %vm2047 = vcmp.lt.s32.totalorder %v1997, %v2041
    %vm2048 = vcmp.lt.s32.totalorder %v1998, %v2041
    %vm2049 = vcmp.lt.s32.totalorder %v1999, %v2041
    %vm2050 = vcmp.lt.s32.totalorder %v2000, %v2041
    %vm2051 = vcmp.lt.s32.totalorder %v2001, %v2041
    %vm2052 = vcmp.lt.s32.totalorder %v2002, %v2041
    %vm2053 = vcmp.lt.s32.totalorder %v2003, %v2041
    %vm2054 = vcmp.lt.s32.totalorder %v1994, %v2042
    %vm2055 = vcmp.lt.s32.totalorder %v1995, %v2042
    %vm2056 = vcmp.lt.s32.totalorder %v1996, %v2042
    %vm2057 = vcmp.lt.s32.totalorder %v1997, %v2042
    %vm2058 = vcmp.lt.s32.totalorder %v1998, %v2042
    %vm2059 = vcmp.lt.s32.totalorder %v1999, %v2042
    %vm2060 = vcmp.lt.s32.totalorder %v2000, %v2042
    %vm2061 = vcmp.lt.s32.totalorder %v2001, %v2042
    %vm2062 = vcmp.lt.s32.totalorder %v2002, %v2042
    %vm2063 = vcmp.lt.s32.totalorder %v2003, %v2042
    %vm2064 = vcmp.lt.s32.totalorder %v1994, %v2043
    %vm2065 = vcmp.lt.s32.totalorder %v1995, %v2043
    %vm2066 = vcmp.lt.s32.totalorder %v1996, %v2043
    %vm2067 = vcmp.lt.s32.totalorder %v1997, %v2043
    %vm2068 = vcmp.lt.s32.totalorder %v1998, %v2043
    %vm2069 = vcmp.lt.s32.totalorder %v1999, %v2043
    %vm2070 = vcmp.lt.s32.totalorder %v2000, %v2043
    %vm2071 = vcmp.lt.s32.totalorder %v2001, %v2043
    %vm2072 = vcmp.lt.s32.totalorder %v2002, %v2043
    %vm2073 = vcmp.lt.s32.totalorder %v2003, %v2043
    %vm2074 = vmand %vm2011, %vm2044
    %vm2075 = vmand %vm2012, %vm2045
    %vm2076 = vmand %vm2013, %vm2046
    %vm2077 = vmand %vm2014, %vm2047
    %vm2078 = vmand %vm2015, %vm2048
    %vm2079 = vmand %vm2016, %vm2049
    %vm2080 = vmand %vm2017, %vm2050
    %vm2081 = vmand %vm2018, %vm2051
    %vm2082 = vmand %vm2019, %vm2052
    %vm2083 = vmand %vm2020, %vm2053
    %vm2084 = vmand %vm2021, %vm2054
    %vm2085 = vmand %vm2022, %vm2055
    %vm2086 = vmand %vm2023, %vm2056
    %vm2087 = vmand %vm2024, %vm2057
    %vm2088 = vmand %vm2025, %vm2058
    %vm2089 = vmand %vm2026, %vm2059
    %vm2090 = vmand %vm2027, %vm2060
    %vm2091 = vmand %vm2028, %vm2061
    %vm2092 = vmand %vm2029, %vm2062
    %vm2093 = vmand %vm2030, %vm2063
    %vm2094 = vmand %vm2031, %vm2064
    %vm2095 = vmand %vm2032, %vm2065
    %vm2096 = vmand %vm2033, %vm2066
    %vm2097 = vmand %vm2034, %vm2067
    %vm2098 = vmand %vm2035, %vm2068
    %vm2099 = vmand %vm2036, %vm2069
    %vm2100 = vmand %vm2037, %vm2070
    %vm2101 = vmand %vm2038, %vm2071
    %vm2102 = vmand %vm2039, %vm2072
    %vm2103 = vmand %vm2040, %vm2073
    %s2104 = scalar_lea.vmem %s1, 1
    %v2105 = vld [vmem:[%s2104] ss:$8 sm:$0xf]
    %v2106 = vld [vmem:[%s2104] ss:$8 sm:$0xf0]
    %v2107 = vor.u32 %v2105, %v2106
    %s2108 = scalar_lea.vmem %s1, 65
    %v2109 = vld [vmem:[%s2108] ss:$8 sm:$0x3]
    %v2112 = vlaneseq
    %v2113 = vshrl.u32 %v2112, 7
    %v2114 = vsub.s32 0, %v2113
    %v2115 = vrot.slane %v2107, %v2114
    %v2116 = vlaneseq
    %v2117 = vshrl.u32 %v2116, 7
    %v2118 = vsub.s32 1, %v2117
    %v2119 = vrot.slane %v2107, %v2118
    %v2120 = vlaneseq
    %v2121 = vshrl.u32 %v2120, 7
    %v2122 = vsub.s32 2, %v2121
    %v2123 = vrot.slane %v2107, %v2122
    %v2124 = vlaneseq
    %v2125 = vshrl.u32 %v2124, 7
    %v2126 = vsub.s32 3, %v2125
    %v2127 = vrot.slane %v2107, %v2126
    %v2128 = vlaneseq
    %v2129 = vshrl.u32 %v2128, 7
    %v2130 = vsub.s32 4, %v2129
    %v2131 = vrot.slane %v2107, %v2130
    %v2132 = vlaneseq
    %v2133 = vshrl.u32 %v2132, 7
    %v2134 = vsub.s32 5, %v2133
    %v2135 = vrot.slane %v2107, %v2134
    %v2136 = vlaneseq
    %v2137 = vshrl.u32 %v2136, 7
    %v2138 = vsub.s32 6, %v2137
    %v2139 = vrot.slane %v2107, %v2138
    %v2140 = vlaneseq
    %v2141 = vshrl.u32 %v2140, 7
    %v2142 = vsub.s32 7, %v2141
    %v2143 = vrot.slane %v2107, %v2142
    %v2144 = vlaneseq
    %v2145 = vshrl.u32 %v2144, 7
    %v2146 = vsub.s32 0, %v2145
    %v2147 = vrot.slane %v2109, %v2146
    %v2148 = vlaneseq
    %v2149 = vshrl.u32 %v2148, 7
    %v2150 = vsub.s32 1, %v2149
    %v2151 = vrot.slane %v2109, %v2150
    %v2162 = vsel %vm2074, %v2115, 0.0
    %v2163 = vsel %vm2075, %v2119, 0.0
    %v2164 = vsel %vm2076, %v2123, 0.0
    %v2165 = vsel %vm2077, %v2127, 0.0
    %v2166 = vsel %vm2078, %v2131, 0.0
    %v2167 = vsel %vm2079, %v2135, 0.0
    %v2168 = vsel %vm2080, %v2139, 0.0
    %v2169 = vsel %vm2081, %v2143, 0.0
    %v2170 = vsel %vm2082, %v2147, 0.0
    %v2171 = vsel %vm2083, %v2151, 0.0
    %v2172 = vsel %vm2084, %v2115, 0.0
    %v2173 = vsel %vm2085, %v2119, 0.0
    %v2174 = vsel %vm2086, %v2123, 0.0
    %v2175 = vsel %vm2087, %v2127, 0.0
    %v2176 = vsel %vm2088, %v2131, 0.0
    %v2177 = vsel %vm2089, %v2135, 0.0
    %v2178 = vsel %vm2090, %v2139, 0.0
    %v2179 = vsel %vm2091, %v2143, 0.0
    %v2180 = vsel %vm2092, %v2147, 0.0
    %v2181 = vsel %vm2093, %v2151, 0.0
    %v2182 = vsel %vm2094, %v2115, 0.0
    %v2183 = vsel %vm2095, %v2119, 0.0
    %v2184 = vsel %vm2096, %v2123, 0.0
    %v2185 = vsel %vm2097, %v2127, 0.0
    %v2186 = vsel %vm2098, %v2131, 0.0
    %v2187 = vsel %vm2099, %v2135, 0.0
    %v2188 = vsel %vm2100, %v2139, 0.0
    %v2189 = vsel %vm2101, %v2143, 0.0
    %v2190 = vsel %vm2102, %v2147, 0.0
    %v2191 = vsel %vm2103, %v2151, 0.0
    %s2192 = scalar_lea.vmem %s1, 3
    %v2193 = vld [vmem:[%s2192] ss:$8 sm:$0xf]
    %v2194 = vld [vmem:[%s2192] ss:$8 sm:$0xf0]
    %v2195 = vor.u32 %v2193, %v2194
    %s2196 = scalar_lea.vmem %s1, 67
    %v2197 = vld [vmem:[%s2196] ss:$8 sm:$0x3]
    %v2200 = vlaneseq
    %v2201 = vshrl.u32 %v2200, 7
    %v2202 = vsub.s32 0, %v2201
    %v2203 = vrot.slane %v2195, %v2202
    %v2204 = vlaneseq
    %v2205 = vshrl.u32 %v2204, 7
    %v2206 = vsub.s32 1, %v2205
    %v2207 = vrot.slane %v2195, %v2206
    %v2208 = vlaneseq
    %v2209 = vshrl.u32 %v2208, 7
    %v2210 = vsub.s32 2, %v2209
    %v2211 = vrot.slane %v2195, %v2210
    %v2212 = vlaneseq
    %v2213 = vshrl.u32 %v2212, 7
    %v2214 = vsub.s32 3, %v2213
    %v2215 = vrot.slane %v2195, %v2214
    %v2216 = vlaneseq
    %v2217 = vshrl.u32 %v2216, 7
    %v2218 = vsub.s32 4, %v2217
    %v2219 = vrot.slane %v2195, %v2218
    %v2220 = vlaneseq
    %v2221 = vshrl.u32 %v2220, 7
    %v2222 = vsub.s32 5, %v2221
    %v2223 = vrot.slane %v2195, %v2222
    %v2224 = vlaneseq
    %v2225 = vshrl.u32 %v2224, 7
    %v2226 = vsub.s32 6, %v2225
    %v2227 = vrot.slane %v2195, %v2226
    %v2228 = vlaneseq
    %v2229 = vshrl.u32 %v2228, 7
    %v2230 = vsub.s32 7, %v2229
    %v2231 = vrot.slane %v2195, %v2230
    %v2232 = vlaneseq
    %v2233 = vshrl.u32 %v2232, 7
    %v2234 = vsub.s32 0, %v2233
    %v2235 = vrot.slane %v2197, %v2234
    %v2236 = vlaneseq
    %v2237 = vshrl.u32 %v2236, 7
    %v2238 = vsub.s32 1, %v2237
    %v2239 = vrot.slane %v2197, %v2238
    %v2250 = vsel %vm2074, %v2203, 0.0
    %v2251 = vsel %vm2075, %v2207, 0.0
    %v2252 = vsel %vm2076, %v2211, 0.0
    %v2253 = vsel %vm2077, %v2215, 0.0
    %v2254 = vsel %vm2078, %v2219, 0.0
    %v2255 = vsel %vm2079, %v2223, 0.0
    %v2256 = vsel %vm2080, %v2227, 0.0
    %v2257 = vsel %vm2081, %v2231, 0.0
    %v2258 = vsel %vm2082, %v2235, 0.0
    %v2259 = vsel %vm2083, %v2239, 0.0
    %v2260 = vsel %vm2084, %v2203, 0.0
    %v2261 = vsel %vm2085, %v2207, 0.0
    %v2262 = vsel %vm2086, %v2211, 0.0
    %v2263 = vsel %vm2087, %v2215, 0.0
    %v2264 = vsel %vm2088, %v2219, 0.0
    %v2265 = vsel %vm2089, %v2223, 0.0
    %v2266 = vsel %vm2090, %v2227, 0.0
    %v2267 = vsel %vm2091, %v2231, 0.0
    %v2268 = vsel %vm2092, %v2235, 0.0
    %v2269 = vsel %vm2093, %v2239, 0.0
    %v2270 = vsel %vm2094, %v2203, 0.0
    %v2271 = vsel %vm2095, %v2207, 0.0
    %v2272 = vsel %vm2096, %v2211, 0.0
    %v2273 = vsel %vm2097, %v2215, 0.0
    %v2274 = vsel %vm2098, %v2219, 0.0
    %v2275 = vsel %vm2099, %v2223, 0.0
    %v2276 = vsel %vm2100, %v2227, 0.0
    %v2277 = vsel %vm2101, %v2231, 0.0
    %v2278 = vsel %vm2102, %v2235, 0.0
    %v2279 = vsel %vm2103, %v2239, 0.0
    %v2280 = vadd.f32 %v2250, %v2251
    %v2281 = vadd.f32 %v2280, %v2252
    %v2282 = vadd.f32 %v2281, %v2253
    %v2283 = vadd.f32 %v2282, %v2254
    %v2284 = vadd.f32 %v2283, %v2255
    %v2285 = vadd.f32 %v2284, %v2256
    %v2286 = vadd.f32 %v2285, %v2257
    %v2287 = vadd.f32 %v2286, %v2258
    %v2288 = vadd.f32 %v2287, %v2259
    %2289 = vadd.xlane.f32.xlu0 %v2288
    %v2290 = vpop.xlane.xlu0 %2289
    %v2291 = vadd.f32 %v2260, %v2261
    %v2292 = vadd.f32 %v2291, %v2262
    %v2293 = vadd.f32 %v2292, %v2263
    %v2294 = vadd.f32 %v2293, %v2264
    %v2295 = vadd.f32 %v2294, %v2265
    %v2296 = vadd.f32 %v2295, %v2266
    %v2297 = vadd.f32 %v2296, %v2267
    %v2298 = vadd.f32 %v2297, %v2268
    %v2299 = vadd.f32 %v2298, %v2269
    %2300 = vadd.xlane.f32.xlu0 %v2299
    %v2301 = vpop.xlane.xlu0 %2300
    %vm2302 = vcmask 1043456
    %v2303 = vsel %vm2302, %v2270, 0.0
    %v2304 = vsel %vm2302, %v2271, 0.0
    %v2305 = vadd.f32 %v2303, %v2304
    %v2306 = vsel %vm2302, %v2272, 0.0
    %v2307 = vadd.f32 %v2305, %v2306
    %v2308 = vsel %vm2302, %v2273, 0.0
    %v2309 = vadd.f32 %v2307, %v2308
    %v2310 = vsel %vm2302, %v2274, 0.0
    %v2311 = vadd.f32 %v2309, %v2310
    %v2312 = vsel %vm2302, %v2275, 0.0
    %v2313 = vadd.f32 %v2311, %v2312
    %v2314 = vsel %vm2302, %v2276, 0.0
    %v2315 = vadd.f32 %v2313, %v2314
    %v2316 = vsel %vm2302, %v2277, 0.0
    %v2317 = vadd.f32 %v2315, %v2316
    %v2318 = vsel %vm2302, %v2278, 0.0
    %v2319 = vadd.f32 %v2317, %v2318
    %v2320 = vsel %vm2302, %v2279, 0.0
    %v2321 = vadd.f32 %v2319, %v2320
    %2322 = vadd.xlane.f32.xlu0 %v2321
    %v2323 = vpop.xlane.xlu0 %2322
    %2324 = vmatprep.subr.mxu0 %v1984
    %2325 = vmatpush1.xpose.msra.mxu0 %v1983
    %2326 = vmatprep.subr.mxu0 %v1974
    %2327 = vmatpush1.xpose.msra.mxu0 %v1973
    %2328 = vmatprep.subr.mxu0 %v1964
    %2329 = vmatpush1.xpose.msra.mxu0 %v1963
    %2330 = vmatprep.subr.mxu0 %v1954
    %2331 = vmatpush1.xpose.msra.mxu0 %v1953
    %2332 = vmatprep.subr.mxu0 %v1944
    %2333 = vmatpush1.xpose.msra.mxu0 %v1943
    %2334 = vmatprep.subr.mxu0 %v1934
    %2335 = vmatpush1.xpose.msra.mxu0 %v1933
    %2336 = vmatprep.subr.mxu0 %v1924
    %2337 = vmatpush1.xpose.msra.mxu0 %v1923
    %2338 = vmatprep.subr.mxu0 %v1914
    %2339 = vmatpush1.xpose.msra.mxu0 %v1913
    %2340 = vmatprep.subr.mxu0 %v1904
    %2341 = vmatpush1.xpose.msra.mxu0 %v1903
    %2342 = vmatprep.subr.mxu0 %v1894
    %2343 = vmatpush1.xpose.msra.mxu0 %v1893
    %2344 = vmatprep.subr.mxu0 %v1884
    %2345 = vmatpush1.xpose.msra.mxu0 %v1883
    %2346 = vmatprep.subr.mxu0 %v1874
    %2347 = vmatpush1.xpose.msra.mxu0 %v1873
    %2348 = vmatprep.subr.mxu0 %v1864
    %2349 = vmatpush1.xpose.msra.mxu0 %v1863
    %2350 = vmatprep.subr.mxu0 %v1854
    %2351 = vmatpush1.xpose.msra.mxu0 %v1853
    %2352 = vmatprep.subr.mxu0 %v1844
    %2353 = vmatpush1.xpose.msra.mxu0 %v1843
    %2354 = vmatprep.subr.mxu0 %v1834
    %2355 = vmatpush1.xpose.msra.mxu0 %v1833
    %2356 = vmatprep.subr.mxu0 0.0
    %2357 = vmatpush2.xpose.msra.mxu0 0.0
    %2358 = vmatprep.subr.mxu0 0.0
    %2359 = vmatpush2.xpose.msra.mxu0 0.0
    %2360 = vmatprep.subr.mxu0 0.0
    %2361 = vmatpush2.xpose.msra.mxu0 0.0
    %2362 = vmatprep.subr.mxu0 0.0
    %2363 = vmatpush2.xpose.msra.mxu0 0.0
    %2364 = vmatprep.subr.mxu0 0.0
    %2365 = vmatpush2.xpose.msra.mxu0 0.0
    %2366 = vmatprep.subr.mxu0 0.0
    %2367 = vmatpush2.xpose.msra.mxu0 0.0
    %2368 = vmatprep.subr.mxu0 0.0
    %2369 = vmatpush2.xpose.msra.mxu0 0.0
    %2370 = vmatprep.subr.mxu0 0.0
    %2371 = vmatpush2.xpose.msra.mxu0 0.0
    %2372 = vmatprep.subr.mxu0 0.0
    %2373 = vmatpush2.xpose.msra.mxu0 0.0
    %2374 = vmatprep.subr.mxu0 0.0
    %2375 = vmatpush2.xpose.msra.mxu0 0.0
    %2376 = vmatprep.subr.mxu0 0.0
    %2377 = vmatpush2.xpose.msra.mxu0 0.0
    %2378 = vmatprep.subr.mxu0 0.0
    %2379 = vmatpush2.xpose.msra.mxu0 0.0
    %2380 = vmatprep.subr.mxu0 0.0
    %2381 = vmatpush2.xpose.msra.mxu0 0.0
    %2382 = vmatprep.subr.mxu0 0.0
    %2383 = vmatpush2.xpose.msra.mxu0 0.0
    %2384 = vmatprep.subr.mxu0 0.0
    %2385 = vmatpush2.xpose.msra.mxu0 0.0
    %2386 = vmatprep.subr.mxu0 0.0
    %2387 = vmatpush2.xpose.msra.mxu0 0.0
    %2388 = vmatprep.mubr.f32.mxu0 %v2163
    %2389 = vmatmul.mubr.f32.gmra.mxu0 %v2162
    %v2390 = vpop.f32.mrf.mxu0
    %v2391 = vadd.f32 %v2290, %v2390
    %v2392 = vpop.f32.mrf.mxu0
    %2393 = vmatprep.mubr.f32.mxu0 %v2173
    %2394 = vmatmul.mubr.f32.gmra.mxu0 %v2172
    %v2395 = vpop.f32.mrf.mxu0
    %v2396 = vadd.f32 %v2301, %v2395
    %v2397 = vpop.f32.mrf.mxu0
    %2398 = vmatprep.mubr.f32.mxu0 %v2183
    %2399 = vmatmul.mubr.f32.gmra.mxu0 %v2182
    %v2400 = vpop.f32.mrf.mxu0
    %v2401 = vadd.f32 %v2323, %v2400
    %v2402 = vpop.f32.mrf.mxu0
    %2403 = vdwg.mxu0
    %2404 = vmatprep.subr.mxu0 %v1986
    %2405 = vmatpush1.xpose.msra.mxu0 %v1985
    %2406 = vmatprep.subr.mxu0 %v1976
    %2407 = vmatpush1.xpose.msra.mxu0 %v1975
    %2408 = vmatprep.subr.mxu0 %v1966
    %2409 = vmatpush1.xpose.msra.mxu0 %v1965
    %2410 = vmatprep.subr.mxu0 %v1956
    %2411 = vmatpush1.xpose.msra.mxu0 %v1955
    %2412 = vmatprep.subr.mxu0 %v1946
    %2413 = vmatpush1.xpose.msra.mxu0 %v1945
    %2414 = vmatprep.subr.mxu0 %v1936
    %2415 = vmatpush1.xpose.msra.mxu0 %v1935
    %2416 = vmatprep.subr.mxu0 %v1926
    %2417 = vmatpush1.xpose.msra.mxu0 %v1925
    %2418 = vmatprep.subr.mxu0 %v1916
    %2419 = vmatpush1.xpose.msra.mxu0 %v1915
    %2420 = vmatprep.subr.mxu0 %v1906
    %2421 = vmatpush1.xpose.msra.mxu0 %v1905
    %2422 = vmatprep.subr.mxu0 %v1896
    %2423 = vmatpush1.xpose.msra.mxu0 %v1895
    %2424 = vmatprep.subr.mxu0 %v1886
    %2425 = vmatpush1.xpose.msra.mxu0 %v1885
    %2426 = vmatprep.subr.mxu0 %v1876
    %2427 = vmatpush1.xpose.msra.mxu0 %v1875
    %2428 = vmatprep.subr.mxu0 %v1866
    %2429 = vmatpush1.xpose.msra.mxu0 %v1865
    %2430 = vmatprep.subr.mxu0 %v1856
    %2431 = vmatpush1.xpose.msra.mxu0 %v1855
    %2432 = vmatprep.subr.mxu0 %v1846
    %2433 = vmatpush1.xpose.msra.mxu0 %v1845
    %2434 = vmatprep.subr.mxu0 %v1836
    %2435 = vmatpush1.xpose.msra.mxu0 %v1835
    %2436 = vmatprep.subr.mxu0 0.0
    %2437 = vmatpush2.xpose.msra.mxu0 0.0
    %2438 = vmatprep.subr.mxu0 0.0
    %2439 = vmatpush2.xpose.msra.mxu0 0.0
    %2440 = vmatprep.subr.mxu0 0.0
    %2441 = vmatpush2.xpose.msra.mxu0 0.0
    %2442 = vmatprep.subr.mxu0 0.0
    %2443 = vmatpush2.xpose.msra.mxu0 0.0
    %2444 = vmatprep.subr.mxu0 0.0
    %2445 = vmatpush2.xpose.msra.mxu0 0.0
    %2446 = vmatprep.subr.mxu0 0.0
    %2447 = vmatpush2.xpose.msra.mxu0 0.0
    %2448 = vmatprep.subr.mxu0 0.0
    %2449 = vmatpush2.xpose.msra.mxu0 0.0
    %2450 = vmatprep.subr.mxu0 0.0
    %2451 = vmatpush2.xpose.msra.mxu0 0.0
    %2452 = vmatprep.subr.mxu0 0.0
    %2453 = vmatpush2.xpose.msra.mxu0 0.0
    %2454 = vmatprep.subr.mxu0 0.0
    %2455 = vmatpush2.xpose.msra.mxu0 0.0
    %2456 = vmatprep.subr.mxu0 0.0
    %2457 = vmatpush2.xpose.msra.mxu0 0.0
    %2458 = vmatprep.subr.mxu0 0.0
    %2459 = vmatpush2.xpose.msra.mxu0 0.0
    %2460 = vmatprep.subr.mxu0 0.0
    %2461 = vmatpush2.xpose.msra.mxu0 0.0
    %2462 = vmatprep.subr.mxu0 0.0
    %2463 = vmatpush2.xpose.msra.mxu0 0.0
    %2464 = vmatprep.subr.mxu0 0.0
    %2465 = vmatpush2.xpose.msra.mxu0 0.0
    %2466 = vmatprep.subr.mxu0 0.0
    %2467 = vmatpush2.xpose.msra.mxu0 0.0
    %2468 = vmatprep.mubr.f32.mxu0 %v2165
    %2469 = vmatmul.mubr.f32.gmra.mxu0 %v2164
    %v2470 = vpop.f32.mrf.mxu0
    %v2471 = vadd.f32 %v2391, %v2470
    %v2472 = vpop.f32.mrf.mxu0
    %2473 = vmatprep.mubr.f32.mxu0 %v2175
    %2474 = vmatmul.mubr.f32.gmra.mxu0 %v2174
    %v2475 = vpop.f32.mrf.mxu0
    %v2476 = vadd.f32 %v2396, %v2475
    %v2477 = vpop.f32.mrf.mxu0
    %2478 = vmatprep.mubr.f32.mxu0 %v2185
    %2479 = vmatmul.mubr.f32.gmra.mxu0 %v2184
    %v2480 = vpop.f32.mrf.mxu0
    %v2481 = vadd.f32 %v2401, %v2480
    %v2482 = vpop.f32.mrf.mxu0
    %2483 = vdwg.mxu0
    %2484 = vmatprep.subr.mxu0 %v1988
    %2485 = vmatpush1.xpose.msra.mxu0 %v1987
    %2486 = vmatprep.subr.mxu0 %v1978
    %2487 = vmatpush1.xpose.msra.mxu0 %v1977
    %2488 = vmatprep.subr.mxu0 %v1968
    %2489 = vmatpush1.xpose.msra.mxu0 %v1967
    %2490 = vmatprep.subr.mxu0 %v1958
    %2491 = vmatpush1.xpose.msra.mxu0 %v1957
    %2492 = vmatprep.subr.mxu0 %v1948
    %2493 = vmatpush1.xpose.msra.mxu0 %v1947
    %2494 = vmatprep.subr.mxu0 %v1938
    %2495 = vmatpush1.xpose.msra.mxu0 %v1937
    %2496 = vmatprep.subr.mxu0 %v1928
    %2497 = vmatpush1.xpose.msra.mxu0 %v1927
    %2498 = vmatprep.subr.mxu0 %v1918
    %2499 = vmatpush1.xpose.msra.mxu0 %v1917
    %2500 = vmatprep.subr.mxu0 %v1908
    %2501 = vmatpush1.xpose.msra.mxu0 %v1907
    %2502 = vmatprep.subr.mxu0 %v1898
    %2503 = vmatpush1.xpose.msra.mxu0 %v1897
    %2504 = vmatprep.subr.mxu0 %v1888
    %2505 = vmatpush1.xpose.msra.mxu0 %v1887
    %2506 = vmatprep.subr.mxu0 %v1878
    %2507 = vmatpush1.xpose.msra.mxu0 %v1877
    %2508 = vmatprep.subr.mxu0 %v1868
    %2509 = vmatpush1.xpose.msra.mxu0 %v1867
    %2510 = vmatprep.subr.mxu0 %v1858
    %2511 = vmatpush1.xpose.msra.mxu0 %v1857
    %2512 = vmatprep.subr.mxu0 %v1848
    %2513 = vmatpush1.xpose.msra.mxu0 %v1847
    %2514 = vmatprep.subr.mxu0 %v1838
    %2515 = vmatpush1.xpose.msra.mxu0 %v1837
    %2516 = vmatprep.subr.mxu0 0.0
    %2517 = vmatpush2.xpose.msra.mxu0 0.0
    %2518 = vmatprep.subr.mxu0 0.0
    %2519 = vmatpush2.xpose.msra.mxu0 0.0
    %2520 = vmatprep.subr.mxu0 0.0
    %2521 = vmatpush2.xpose.msra.mxu0 0.0
    %2522 = vmatprep.subr.mxu0 0.0
    %2523 = vmatpush2.xpose.msra.mxu0 0.0
    %2524 = vmatprep.subr.mxu0 0.0
    %2525 = vmatpush2.xpose.msra.mxu0 0.0
    %2526 = vmatprep.subr.mxu0 0.0
    %2527 = vmatpush2.xpose.msra.mxu0 0.0
    %2528 = vmatprep.subr.mxu0 0.0
    %2529 = vmatpush2.xpose.msra.mxu0 0.0
    %2530 = vmatprep.subr.mxu0 0.0
    %2531 = vmatpush2.xpose.msra.mxu0 0.0
    %2532 = vmatprep.subr.mxu0 0.0
    %2533 = vmatpush2.xpose.msra.mxu0 0.0
    %2534 = vmatprep.subr.mxu0 0.0
    %2535 = vmatpush2.xpose.msra.mxu0 0.0
    %2536 = vmatprep.subr.mxu0 0.0
    %2537 = vmatpush2.xpose.msra.mxu0 0.0
    %2538 = vmatprep.subr.mxu0 0.0
    %2539 = vmatpush2.xpose.msra.mxu0 0.0
    %2540 = vmatprep.subr.mxu0 0.0
    %2541 = vmatpush2.xpose.msra.mxu0 0.0
    %2542 = vmatprep.subr.mxu0 0.0
    %2543 = vmatpush2.xpose.msra.mxu0 0.0
    %2544 = vmatprep.subr.mxu0 0.0
    %2545 = vmatpush2.xpose.msra.mxu0 0.0
    %2546 = vmatprep.subr.mxu0 0.0
    %2547 = vmatpush2.xpose.msra.mxu0 0.0
    %2548 = vmatprep.mubr.f32.mxu0 %v2167
    %2549 = vmatmul.mubr.f32.gmra.mxu0 %v2166
    %v2550 = vpop.f32.mrf.mxu0
    %v2551 = vadd.f32 %v2471, %v2550
    %v2552 = vpop.f32.mrf.mxu0
    %2553 = vmatprep.mubr.f32.mxu0 %v2177
    %2554 = vmatmul.mubr.f32.gmra.mxu0 %v2176
    %v2555 = vpop.f32.mrf.mxu0
    %v2556 = vadd.f32 %v2476, %v2555
    %v2557 = vpop.f32.mrf.mxu0
    %2558 = vmatprep.mubr.f32.mxu0 %v2187
    %2559 = vmatmul.mubr.f32.gmra.mxu0 %v2186
    %v2560 = vpop.f32.mrf.mxu0
    %v2561 = vadd.f32 %v2481, %v2560
    %v2562 = vpop.f32.mrf.mxu0
    %2563 = vdwg.mxu0
    %2564 = vmatprep.subr.mxu0 %v1990
    %2565 = vmatpush1.xpose.msra.mxu0 %v1989
    %2566 = vmatprep.subr.mxu0 %v1980
    %2567 = vmatpush1.xpose.msra.mxu0 %v1979
    %2568 = vmatprep.subr.mxu0 %v1970
    %2569 = vmatpush1.xpose.msra.mxu0 %v1969
    %2570 = vmatprep.subr.mxu0 %v1960
    %2571 = vmatpush1.xpose.msra.mxu0 %v1959
    %2572 = vmatprep.subr.mxu0 %v1950
    %2573 = vmatpush1.xpose.msra.mxu0 %v1949
    %2574 = vmatprep.subr.mxu0 %v1940
    %2575 = vmatpush1.xpose.msra.mxu0 %v1939
    %2576 = vmatprep.subr.mxu0 %v1930
    %2577 = vmatpush1.xpose.msra.mxu0 %v1929
    %2578 = vmatprep.subr.mxu0 %v1920
    %2579 = vmatpush1.xpose.msra.mxu0 %v1919
    %2580 = vmatprep.subr.mxu0 %v1910
    %2581 = vmatpush1.xpose.msra.mxu0 %v1909
    %2582 = vmatprep.subr.mxu0 %v1900
    %2583 = vmatpush1.xpose.msra.mxu0 %v1899
    %2584 = vmatprep.subr.mxu0 %v1890
    %2585 = vmatpush1.xpose.msra.mxu0 %v1889
    %2586 = vmatprep.subr.mxu0 %v1880
    %2587 = vmatpush1.xpose.msra.mxu0 %v1879
    %2588 = vmatprep.subr.mxu0 %v1870
    %2589 = vmatpush1.xpose.msra.mxu0 %v1869
    %2590 = vmatprep.subr.mxu0 %v1860
    %2591 = vmatpush1.xpose.msra.mxu0 %v1859
    %2592 = vmatprep.subr.mxu0 %v1850
    %2593 = vmatpush1.xpose.msra.mxu0 %v1849
    %2594 = vmatprep.subr.mxu0 %v1840
    %2595 = vmatpush1.xpose.msra.mxu0 %v1839
    %2596 = vmatprep.subr.mxu0 0.0
    %2597 = vmatpush2.xpose.msra.mxu0 0.0
    %2598 = vmatprep.subr.mxu0 0.0
    %2599 = vmatpush2.xpose.msra.mxu0 0.0
    %2600 = vmatprep.subr.mxu0 0.0
    %2601 = vmatpush2.xpose.msra.mxu0 0.0
    %2602 = vmatprep.subr.mxu0 0.0
    %2603 = vmatpush2.xpose.msra.mxu0 0.0
    %2604 = vmatprep.subr.mxu0 0.0
    %2605 = vmatpush2.xpose.msra.mxu0 0.0
    %2606 = vmatprep.subr.mxu0 0.0
    %2607 = vmatpush2.xpose.msra.mxu0 0.0
    %2608 = vmatprep.subr.mxu0 0.0
    %2609 = vmatpush2.xpose.msra.mxu0 0.0
    %2610 = vmatprep.subr.mxu0 0.0
    %2611 = vmatpush2.xpose.msra.mxu0 0.0
    %2612 = vmatprep.subr.mxu0 0.0
    %2613 = vmatpush2.xpose.msra.mxu0 0.0
    %2614 = vmatprep.subr.mxu0 0.0
    %2615 = vmatpush2.xpose.msra.mxu0 0.0
    %2616 = vmatprep.subr.mxu0 0.0
    %2617 = vmatpush2.xpose.msra.mxu0 0.0
    %2618 = vmatprep.subr.mxu0 0.0
    %2619 = vmatpush2.xpose.msra.mxu0 0.0
    %2620 = vmatprep.subr.mxu0 0.0
    %2621 = vmatpush2.xpose.msra.mxu0 0.0
    %2622 = vmatprep.subr.mxu0 0.0
    %2623 = vmatpush2.xpose.msra.mxu0 0.0
    %2624 = vmatprep.subr.mxu0 0.0
    %2625 = vmatpush2.xpose.msra.mxu0 0.0
    %2626 = vmatprep.subr.mxu0 0.0
    %2627 = vmatpush2.xpose.msra.mxu0 0.0
    %2628 = vmatprep.mubr.f32.mxu0 %v2169
    %2629 = vmatmul.mubr.f32.gmra.mxu0 %v2168
    %v2630 = vpop.f32.mrf.mxu0
    %v2631 = vadd.f32 %v2551, %v2630
    %v2632 = vpop.f32.mrf.mxu0
    %2633 = vmatprep.mubr.f32.mxu0 %v2179
    %2634 = vmatmul.mubr.f32.gmra.mxu0 %v2178
    %v2635 = vpop.f32.mrf.mxu0
    %v2636 = vadd.f32 %v2556, %v2635
    %v2637 = vpop.f32.mrf.mxu0
    %2638 = vmatprep.mubr.f32.mxu0 %v2189
    %2639 = vmatmul.mubr.f32.gmra.mxu0 %v2188
    %v2640 = vpop.f32.mrf.mxu0
    %v2641 = vadd.f32 %v2561, %v2640
    %v2642 = vpop.f32.mrf.mxu0
    %2643 = vdwg.mxu0
    %2644 = vmatprep.subr.mxu0 %v1992
    %2645 = vmatpush1.xpose.msra.mxu0 %v1991
    %2646 = vmatprep.subr.mxu0 %v1982
    %2647 = vmatpush1.xpose.msra.mxu0 %v1981
    %2648 = vmatprep.subr.mxu0 %v1972
    %2649 = vmatpush1.xpose.msra.mxu0 %v1971
    %2650 = vmatprep.subr.mxu0 %v1962
    %2651 = vmatpush1.xpose.msra.mxu0 %v1961
    %2652 = vmatprep.subr.mxu0 %v1952
    %2653 = vmatpush1.xpose.msra.mxu0 %v1951
    %2654 = vmatprep.subr.mxu0 %v1942
    %2655 = vmatpush1.xpose.msra.mxu0 %v1941
    %2656 = vmatprep.subr.mxu0 %v1932
    %2657 = vmatpush1.xpose.msra.mxu0 %v1931
    %2658 = vmatprep.subr.mxu0 %v1922
    %2659 = vmatpush1.xpose.msra.mxu0 %v1921
    %2660 = vmatprep.subr.mxu0 %v1912
    %2661 = vmatpush1.xpose.msra.mxu0 %v1911
    %2662 = vmatprep.subr.mxu0 %v1902
    %2663 = vmatpush1.xpose.msra.mxu0 %v1901
    %2664 = vmatprep.subr.mxu0 %v1892
    %2665 = vmatpush1.xpose.msra.mxu0 %v1891
    %2666 = vmatprep.subr.mxu0 %v1882
    %2667 = vmatpush1.xpose.msra.mxu0 %v1881
    %2668 = vmatprep.subr.mxu0 %v1872
    %2669 = vmatpush1.xpose.msra.mxu0 %v1871
    %2670 = vmatprep.subr.mxu0 %v1862
    %2671 = vmatpush1.xpose.msra.mxu0 %v1861
    %2672 = vmatprep.subr.mxu0 %v1852
    %2673 = vmatpush1.xpose.msra.mxu0 %v1851
    %2674 = vmatprep.subr.mxu0 %v1842
    %2675 = vmatpush1.xpose.msra.mxu0 %v1841
    %2676 = vmatprep.subr.mxu0 0.0
    %2677 = vmatpush2.xpose.msra.mxu0 0.0
    %2678 = vmatprep.subr.mxu0 0.0
    %2679 = vmatpush2.xpose.msra.mxu0 0.0
    %2680 = vmatprep.subr.mxu0 0.0
    %2681 = vmatpush2.xpose.msra.mxu0 0.0
    %2682 = vmatprep.subr.mxu0 0.0
    %2683 = vmatpush2.xpose.msra.mxu0 0.0
    %2684 = vmatprep.subr.mxu0 0.0
    %2685 = vmatpush2.xpose.msra.mxu0 0.0
    %2686 = vmatprep.subr.mxu0 0.0
    %2687 = vmatpush2.xpose.msra.mxu0 0.0
    %2688 = vmatprep.subr.mxu0 0.0
    %2689 = vmatpush2.xpose.msra.mxu0 0.0
    %2690 = vmatprep.subr.mxu0 0.0
    %2691 = vmatpush2.xpose.msra.mxu0 0.0
    %2692 = vmatprep.subr.mxu0 0.0
    %2693 = vmatpush2.xpose.msra.mxu0 0.0
    %2694 = vmatprep.subr.mxu0 0.0
    %2695 = vmatpush2.xpose.msra.mxu0 0.0
    %2696 = vmatprep.subr.mxu0 0.0
    %2697 = vmatpush2.xpose.msra.mxu0 0.0
    %2698 = vmatprep.subr.mxu0 0.0
    %2699 = vmatpush2.xpose.msra.mxu0 0.0
    %2700 = vmatprep.subr.mxu0 0.0
    %2701 = vmatpush2.xpose.msra.mxu0 0.0
    %2702 = vmatprep.subr.mxu0 0.0
    %2703 = vmatpush2.xpose.msra.mxu0 0.0
    %2704 = vmatprep.subr.mxu0 0.0
    %2705 = vmatpush2.xpose.msra.mxu0 0.0
    %2706 = vmatprep.subr.mxu0 0.0
    %2707 = vmatpush2.xpose.msra.mxu0 0.0
    %2708 = vmatprep.mubr.f32.mxu0 %v2171
    %2709 = vmatmul.mubr.f32.gmra.mxu0 %v2170
    %v2710 = vpop.f32.mrf.mxu0
    %v2711 = vadd.f32 %v2631, %v2710
    %v2712 = vpop.f32.mrf.mxu0
    %2713 = vmatprep.mubr.f32.mxu0 %v2181
    %2714 = vmatmul.mubr.f32.gmra.mxu0 %v2180
    %v2715 = vpop.f32.mrf.mxu0
    %v2716 = vadd.f32 %v2636, %v2715
    %v2717 = vpop.f32.mrf.mxu0
    %2718 = vmatprep.mubr.f32.mxu0 %v2191
    %2719 = vmatmul.mubr.f32.gmra.mxu0 %v2190
    %v2720 = vpop.f32.mrf.mxu0
    %v2721 = vadd.f32 %v2641, %v2720
    %v2722 = vpop.f32.mrf.mxu0
    %2723 = vdwg.mxu0
    %2724 = vst [vmem:[#allocation7] sm:$0xff] %v2711
    %2725 = vst [vmem:[#allocation7 + $0x8] sm:$0xff] %v2716
    %2726 = vst [vmem:[#allocation7 + $0x10] sm:$0xf] %v2721
    %v2727 = vxor.u32 %v2711, 2147483648
    %v2728 = vxor.u32 %v2716, 2147483648
    %v2729 = vxor.u32 %v2721, 2147483648
    %v2730 = vmul.f32 %v2727, 1.442695
    %v2731 = vpow.pop %v2730
    %v2732 = vmul.f32 %v2728, 1.442695
    %v2733 = vpow.pop %v2732
    %v2734 = vmul.f32 %v2729, 1.442695
    %v2735 = vpow.pop %v2734
    %v2736 = vadd.f32 %v2731, 1.0
    %v2737 = vadd.f32 %v2733, 1.0
    %v2738 = vadd.f32 %v2735, 1.0
    %v2739 = vrcp.pop %v2736
    %v2740 = vmul.f32 1.0, %v2739
    %v2741 = vrcp.pop %v2737
    %v2742 = vmul.f32 1.0, %v2741
    %v2743 = vrcp.pop %v2738
    %v2744 = vmul.f32 1.0, %v2743
    %2745 = vadd.xlane.f32.xlu0 %v2740
    %v2746 = vpop.xlane.xlu0 %2745
    %2747 = vadd.xlane.f32.xlu0 %v2742
    %v2748 = vpop.xlane.xlu0 %2747
    %v2749 = vsel %vm2302, %v2744, 0.0
    %2750 = vadd.xlane.f32.xlu0 %v2749
    %v2751 = vpop.xlane.xlu0 %2750
    %v2752 = vadd.f32 %v2746, 1e-06
    %v2753 = vadd.f32 %v2748, 1e-06
    %v2754 = vadd.f32 %v2751, 1e-06
    %2755 = vmatprep.subr.mxu0 0.0
    %2756 = vmatpush1.msra.mxu0 %v800
    %2757 = vmatprep.subr.mxu0 0.0
    %2758 = vmatpush1.msra.mxu0 %v795
    %2759 = vmatprep.subr.mxu0 0.0
    %2760 = vmatpush1.msra.mxu0 %v790
    %2761 = vmatprep.subr.mxu0 0.0
    %2762 = vmatpush1.msra.mxu0 %v785
    %2763 = vmatprep.subr.mxu0 0.0
    %2764 = vmatpush1.msra.mxu0 %v780
    %2765 = vmatprep.subr.mxu0 0.0
    %2766 = vmatpush1.msra.mxu0 %v775
    %2767 = vmatprep.subr.mxu0 0.0
    %2768 = vmatpush1.msra.mxu0 %v770
    %2769 = vmatprep.subr.mxu0 0.0
    %2770 = vmatpush1.msra.mxu0 %v765
    %2771 = vmatprep.subr.mxu0 0.0
    %2772 = vmatpush1.msra.mxu0 %v760
    %2773 = vmatprep.subr.mxu0 0.0
    %2774 = vmatpush1.msra.mxu0 %v755
    %2775 = vmatprep.subr.mxu0 0.0
    %2776 = vmatpush1.msra.mxu0 %v750
    %2777 = vmatprep.subr.mxu0 0.0
    %2778 = vmatpush1.msra.mxu0 %v745
    %2779 = vmatprep.subr.mxu0 0.0
    %2780 = vmatpush1.msra.mxu0 %v740
    %2781 = vmatprep.subr.mxu0 0.0
    %2782 = vmatpush1.msra.mxu0 %v735
    %2783 = vmatprep.subr.mxu0 0.0
    %2784 = vmatpush1.msra.mxu0 %v730
    %2785 = vmatprep.subr.mxu0 0.0
    %2786 = vmatpush1.msra.mxu0 %v725
    %2787 = vmatprep.subr.mxu0 0.0
    %2788 = vmatpush2.msra.mxu0 0.0
    %2789 = vmatprep.subr.mxu0 0.0
    %2790 = vmatpush2.msra.mxu0 0.0
    %2791 = vmatprep.subr.mxu0 0.0
    %2792 = vmatpush2.msra.mxu0 0.0
    %2793 = vmatprep.subr.mxu0 0.0
    %2794 = vmatpush2.msra.mxu0 0.0
    %2795 = vmatprep.subr.mxu0 0.0
    %2796 = vmatpush2.msra.mxu0 0.0
    %2797 = vmatprep.subr.mxu0 0.0
    %2798 = vmatpush2.msra.mxu0 0.0
    %2799 = vmatprep.subr.mxu0 0.0
    %2800 = vmatpush2.msra.mxu0 0.0
    %2801 = vmatprep.subr.mxu0 0.0
    %2802 = vmatpush2.msra.mxu0 0.0
    %2803 = vmatprep.subr.mxu0 0.0
    %2804 = vmatpush2.msra.mxu0 0.0
    %2805 = vmatprep.subr.mxu0 0.0
    %2806 = vmatpush2.msra.mxu0 0.0
    %2807 = vmatprep.subr.mxu0 0.0
    %2808 = vmatpush2.msra.mxu0 0.0
    %2809 = vmatprep.subr.mxu0 0.0
    %2810 = vmatpush2.msra.mxu0 0.0
    %2811 = vmatprep.subr.mxu0 0.0
    %2812 = vmatpush2.msra.mxu0 0.0
    %2813 = vmatprep.subr.mxu0 0.0
    %2814 = vmatpush2.msra.mxu0 0.0
    %2815 = vmatprep.subr.mxu0 0.0
    %2816 = vmatpush2.msra.mxu0 0.0
    %2817 = vmatprep.subr.mxu0 0.0
    %2818 = vmatpush2.msra.mxu0 0.0
    %2819 = vmatprep.mubr.f32.mxu0 0.0
    %2820 = vmatmul.mubr.f32.gmra.mxu0 %v2740
    %v2821 = vpop.f32.mrf.mxu0
    %v2822 = vadd.f32 0.0, %v2821
    %v2823 = vpop.f32.mrf.mxu0
    %2824 = vmatprep.mubr.f32.mxu0 0.0
    %2825 = vmatmul.mubr.f32.gmra.mxu0 %v2742
    %v2826 = vpop.f32.mrf.mxu0
    %v2827 = vadd.f32 0.0, %v2826
    %v2828 = vpop.f32.mrf.mxu0
    %2829 = vmatprep.mubr.f32.mxu0 0.0
    %2830 = vmatmul.mubr.f32.gmra.mxu0 %v2744
    %v2831 = vpop.f32.mrf.mxu0
    %v2832 = vadd.f32 0.0, %v2831
    %v2833 = vpop.f32.mrf.mxu0
    %2834 = vdwg.mxu0
    %v2835 = vrcp.pop %v2752
    %v2836 = vrcp.pop %v2753
    %v2837 = vrcp.pop %v2754
    %v2838 = vmul.f32 %v2822, %v2835
    %v2839 = vmul.f32 %v2827, %v2836
    %v2840 = vmul.f32 %v2832, %v2837
    %v2841 = vld [vmem:[#allocation5] sm:$0xff]
    %v2842 = vld [vmem:[#allocation5 + $0x8] sm:$0xff]
    %v2843 = vld [vmem:[#allocation5 + $0x10] sm:$0xff]
    %v2844 = vld [vmem:[#allocation5 + $0x18] sm:$0xff]
    %v2845 = vld [vmem:[#allocation5 + $0x20] sm:$0xff]
    %v2846 = vld [vmem:[#allocation5 + $0x28] sm:$0xff]
    %v2847 = vld [vmem:[#allocation5 + $0x30] sm:$0xff]
    %v2848 = vld [vmem:[#allocation5 + $0x38] sm:$0xff]
    %v2849 = vunpack.c.l.bf16 %v2841
    %v2850 = vunpack.c.h.bf16 %v2841
    %v2851 = vunpack.c.l.bf16 %v2842
    %v2852 = vunpack.c.h.bf16 %v2842
    %v2853 = vunpack.c.l.bf16 %v2843
    %v2854 = vunpack.c.h.bf16 %v2843
    %v2855 = vunpack.c.l.bf16 %v2844
    %v2856 = vunpack.c.h.bf16 %v2844
    %v2857 = vunpack.c.l.bf16 %v2845
    %v2858 = vunpack.c.h.bf16 %v2845
    %v2859 = vunpack.c.l.bf16 %v2846
    %v2860 = vunpack.c.h.bf16 %v2846
    %v2861 = vunpack.c.l.bf16 %v2847
    %v2862 = vunpack.c.h.bf16 %v2847
    %v2863 = vunpack.c.l.bf16 %v2848
    %v2864 = vunpack.c.h.bf16 %v2848
    %s2865 = scalar_lea.vmem %s1, 26
    %v2866 = vld [vmem:[%s2865] ss:$8 sm:$0x3]
    %v2868 = vlaneseq
    %v2869 = vshrl.u32 %v2868, 7
    %v2870 = vsub.s32 0, %v2869
    %v2871 = vrot.slane %v2866, %v2870
    %v2872 = vlaneseq
    %v2873 = vshrl.u32 %v2872, 7
    %v2874 = vsub.s32 1, %v2873
    %v2875 = vrot.slane %v2866, %v2874
    %v2879 = vsel %vm415, %v2838, 0
    %v2882 = vsel %vm415, %v2839, 0
    %v2885 = vsel %vm415, %v2840, 0
    %2887 = vmatprep.subr.mxu0 0.0
    %2888 = vmatpush1.msra.mxu0 0.0
    %2889 = vmatprep.subr.mxu0 0.0
    %2890 = vmatpush1.msra.mxu0 0.0
    %2891 = vmatprep.subr.mxu0 0.0
    %2892 = vmatpush1.msra.mxu0 0.0
    %2893 = vmatprep.subr.mxu0 0.0
    %2894 = vmatpush1.msra.mxu0 0.0
    %2895 = vmatprep.subr.mxu0 0.0
    %2896 = vmatpush1.msra.mxu0 0.0
    %2897 = vmatprep.subr.mxu0 0.0
    %2898 = vmatpush1.msra.mxu0 0.0
    %2899 = vmatprep.subr.mxu0 0.0
    %2900 = vmatpush1.msra.mxu0 0.0
    %2901 = vmatprep.subr.mxu0 0.0
    %2902 = vmatpush1.msra.mxu0 0.0
    %2903 = vmatprep.subr.mxu0 %v2864
    %2904 = vmatpush1.msra.mxu0 %v2863
    %2905 = vmatprep.subr.mxu0 %v2862
    %2906 = vmatpush1.msra.mxu0 %v2861
    %2907 = vmatprep.subr.mxu0 %v2860
    %2908 = vmatpush1.msra.mxu0 %v2859
    %2909 = vmatprep.subr.mxu0 %v2858
    %2910 = vmatpush1.msra.mxu0 %v2857
    %2911 = vmatprep.subr.mxu0 %v2856
    %2912 = vmatpush1.msra.mxu0 %v2855
    %2913 = vmatprep.subr.mxu0 %v2854
    %2914 = vmatpush1.msra.mxu0 %v2853
    %2915 = vmatprep.subr.mxu0 %v2852
    %2916 = vmatpush1.msra.mxu0 %v2851
    %2917 = vmatprep.subr.mxu0 %v2850
    %2918 = vmatpush1.msra.mxu0 %v2849
    %2919 = vmatprep.subr.mxu0 0.0
    %2920 = vmatpush2.msra.mxu0 0.0
    %2921 = vmatprep.subr.mxu0 0.0
    %2922 = vmatpush2.msra.mxu0 0.0
    %2923 = vmatprep.subr.mxu0 0.0
    %2924 = vmatpush2.msra.mxu0 0.0
    %2925 = vmatprep.subr.mxu0 0.0
    %2926 = vmatpush2.msra.mxu0 0.0
    %2927 = vmatprep.subr.mxu0 0.0
    %2928 = vmatpush2.msra.mxu0 0.0
    %2929 = vmatprep.subr.mxu0 0.0
    %2930 = vmatpush2.msra.mxu0 0.0
    %2931 = vmatprep.subr.mxu0 0.0
    %2932 = vmatpush2.msra.mxu0 0.0
    %2933 = vmatprep.subr.mxu0 0.0
    %2934 = vmatpush2.msra.mxu0 0.0
    %2935 = vmatprep.subr.mxu0 0.0
    %2936 = vmatpush2.msra.mxu0 0.0
    %2937 = vmatprep.subr.mxu0 0.0
    %2938 = vmatpush2.msra.mxu0 0.0
    %2939 = vmatprep.subr.mxu0 0.0
    %2940 = vmatpush2.msra.mxu0 0.0
    %2941 = vmatprep.subr.mxu0 0.0
    %2942 = vmatpush2.msra.mxu0 0.0
    %2943 = vmatprep.subr.mxu0 0.0
    %2944 = vmatpush2.msra.mxu0 0.0
    %2945 = vmatprep.subr.mxu0 0.0
    %2946 = vmatpush2.msra.mxu0 0.0
    %2947 = vmatprep.subr.mxu0 0.0
    %2948 = vmatpush2.msra.mxu0 0.0
    %2949 = vmatprep.subr.mxu0 0.0
    %2950 = vmatpush2.msra.mxu0 0.0
    %2951 = vmatprep.mubr.f32.mxu0 0.0
    %2952 = vmatmul.mubr.f32.gmra.mxu0 %v2879
    %v2953 = vpop.f32.mrf.mxu0
    %v2954 = vadd.f32 %v2871, %v2953
    %v2955 = vpop.f32.mrf.mxu0
    %v2956 = vadd.f32 %v2875, %v2955
    %2957 = vmatprep.mubr.f32.mxu0 0.0
    %2958 = vmatmul.mubr.f32.gmra.mxu0 %v2882
    %v2959 = vpop.f32.mrf.mxu0
    %v2960 = vadd.f32 %v2871, %v2959
    %v2961 = vpop.f32.mrf.mxu0
    %v2962 = vadd.f32 %v2875, %v2961
    %2963 = vmatprep.mubr.f32.mxu0 0.0
    %2964 = vmatmul.mubr.f32.gmra.mxu0 %v2885
    %v2965 = vpop.f32.mrf.mxu0
    %v2966 = vadd.f32 %v2871, %v2965
    %v2967 = vpop.f32.mrf.mxu0
    %v2968 = vadd.f32 %v2875, %v2967
    %2969 = vdwg.mxu0
    %v2970 = vmax.f32 %v2954, 0.0
    %v2971 = vmax.f32 %v2956, 0.0
    %v2972 = vmax.f32 %v2960, 0.0
    %v2973 = vmax.f32 %v2962, 0.0
    %v2974 = vmax.f32 %v2966, 0.0
    %v2975 = vmax.f32 %v2968, 0.0
    %v2976 = vld [vmem:[%s6] sm:$0xf]
    %v2977 = vld [vmem:[%s6 + $0x4] sm:$0xf]
    %v2978 = vld [vmem:[%s6 + $0x8] sm:$0xf]
    %v2979 = vld [vmem:[%s6 + $0xc] sm:$0xf]
    %v2980 = vld [vmem:[%s6 + $0x10] sm:$0xf]
    %v2981 = vld [vmem:[%s6 + $0x14] sm:$0xf]
    %v2982 = vld [vmem:[%s6 + $0x18] sm:$0xf]
    %v2983 = vld [vmem:[%s6 + $0x1c] sm:$0xf]
    %v2984 = vld [vmem:[%s6 + $0x20] sm:$0xf]
    %v2985 = vld [vmem:[%s6 + $0x24] sm:$0xf]
    %v2986 = vld [vmem:[%s6 + $0x28] sm:$0xf]
    %v2987 = vld [vmem:[%s6 + $0x2c] sm:$0xf]
    %v2988 = vld [vmem:[%s6 + $0x30] sm:$0xf]
    %v2989 = vld [vmem:[%s6 + $0x34] sm:$0xf]
    %v2990 = vld [vmem:[%s6 + $0x38] sm:$0xf]
    %v2991 = vld [vmem:[%s6 + $0x3c] sm:$0xf]
    %v2992 = vld [vmem:[%s6 + $0x40] sm:$0xf]
    %v2993 = vld [vmem:[%s6 + $0x44] sm:$0xf]
    %v2994 = vld [vmem:[%s6 + $0x48] sm:$0xf]
    %v2995 = vld [vmem:[%s6 + $0x4c] sm:$0xf]
    %v2996 = vld [vmem:[%s6 + $0x50] sm:$0xf]
    %v2997 = vld [vmem:[%s6 + $0x54] sm:$0xf]
    %v2998 = vld [vmem:[%s6 + $0x58] sm:$0xf]
    %v2999 = vld [vmem:[%s6 + $0x5c] sm:$0xf]
    %v3000 = vunpack.c.l.bf16 %v2976
    %v3001 = vunpack.c.l.bf16 %v2977
    %v3002 = vunpack.c.l.bf16 %v2978
    %v3003 = vunpack.c.l.bf16 %v2979
    %v3004 = vunpack.c.l.bf16 %v2980
    %v3005 = vunpack.c.l.bf16 %v2981
    %v3006 = vunpack.c.l.bf16 %v2982
    %v3007 = vunpack.c.l.bf16 %v2983
    %v3008 = vunpack.c.l.bf16 %v2984
    %v3009 = vunpack.c.l.bf16 %v2985
    %v3010 = vunpack.c.l.bf16 %v2986
    %v3011 = vunpack.c.l.bf16 %v2987
    %v3012 = vunpack.c.l.bf16 %v2988
    %v3013 = vunpack.c.l.bf16 %v2989
    %v3014 = vunpack.c.l.bf16 %v2990
    %v3015 = vunpack.c.l.bf16 %v2991
    %v3016 = vunpack.c.l.bf16 %v2992
    %v3017 = vunpack.c.l.bf16 %v2993
    %v3018 = vunpack.c.l.bf16 %v2994
    %v3019 = vunpack.c.l.bf16 %v2995
    %v3020 = vunpack.c.l.bf16 %v2996
    %v3021 = vunpack.c.l.bf16 %v2997
    %v3022 = vunpack.c.l.bf16 %v2998
    %v3023 = vunpack.c.l.bf16 %v2999
    %v3024 = vld [vmem:[%s1 + $0x2a] ss:$0 sm:$0xff]
    %v3026 = vsel %vm415, %v2971, 0
    %v3029 = vsel %vm415, %v2973, 0
    %v3032 = vsel %vm415, %v2975, 0
    %3034 = vmatprep.subr.mxu0 0.0
    %3035 = vmatpush1.msra.mxu0 %v3015
    %3036 = vmatprep.subr.mxu0 0.0
    %3037 = vmatpush1.msra.mxu0 %v3014
    %3038 = vmatprep.subr.mxu0 0.0
    %3039 = vmatpush1.msra.mxu0 %v3013
    %3040 = vmatprep.subr.mxu0 0.0
    %3041 = vmatpush1.msra.mxu0 %v3012
    %3042 = vmatprep.subr.mxu0 0.0
    %3043 = vmatpush1.msra.mxu0 %v3011
    %3044 = vmatprep.subr.mxu0 0.0
    %3045 = vmatpush1.msra.mxu0 %v3010
    %3046 = vmatprep.subr.mxu0 0.0
    %3047 = vmatpush1.msra.mxu0 %v3009
    %3048 = vmatprep.subr.mxu0 0.0
    %3049 = vmatpush1.msra.mxu0 %v3008
    %3050 = vmatprep.subr.mxu0 0.0
    %3051 = vmatpush1.msra.mxu0 %v3007
    %3052 = vmatprep.subr.mxu0 0.0
    %3053 = vmatpush1.msra.mxu0 %v3006
    %3054 = vmatprep.subr.mxu0 0.0
    %3055 = vmatpush1.msra.mxu0 %v3005
    %3056 = vmatprep.subr.mxu0 0.0
    %3057 = vmatpush1.msra.mxu0 %v3004
    %3058 = vmatprep.subr.mxu0 0.0
    %3059 = vmatpush1.msra.mxu0 %v3003
    %3060 = vmatprep.subr.mxu0 0.0
    %3061 = vmatpush1.msra.mxu0 %v3002
    %3062 = vmatprep.subr.mxu0 0.0
    %3063 = vmatpush1.msra.mxu0 %v3001
    %3064 = vmatprep.subr.mxu0 0.0
    %3065 = vmatpush1.msra.mxu0 %v3000
    %3066 = vmatprep.subr.mxu0 0.0
    %3067 = vmatpush2.msra.mxu0 0.0
    %3068 = vmatprep.subr.mxu0 0.0
    %3069 = vmatpush2.msra.mxu0 0.0
    %3070 = vmatprep.subr.mxu0 0.0
    %3071 = vmatpush2.msra.mxu0 0.0
    %3072 = vmatprep.subr.mxu0 0.0
    %3073 = vmatpush2.msra.mxu0 0.0
    %3074 = vmatprep.subr.mxu0 0.0
    %3075 = vmatpush2.msra.mxu0 0.0
    %3076 = vmatprep.subr.mxu0 0.0
    %3077 = vmatpush2.msra.mxu0 0.0
    %3078 = vmatprep.subr.mxu0 0.0
    %3079 = vmatpush2.msra.mxu0 0.0
    %3080 = vmatprep.subr.mxu0 0.0
    %3081 = vmatpush2.msra.mxu0 0.0
    %3082 = vmatprep.subr.mxu0 0.0
    %3083 = vmatpush2.msra.mxu0 %v3023
    %3084 = vmatprep.subr.mxu0 0.0
    %3085 = vmatpush2.msra.mxu0 %v3022
    %3086 = vmatprep.subr.mxu0 0.0
    %3087 = vmatpush2.msra.mxu0 %v3021
    %3088 = vmatprep.subr.mxu0 0.0
    %3089 = vmatpush2.msra.mxu0 %v3020
    %3090 = vmatprep.subr.mxu0 0.0
    %3091 = vmatpush2.msra.mxu0 %v3019
    %3092 = vmatprep.subr.mxu0 0.0
    %3093 = vmatpush2.msra.mxu0 %v3018
    %3094 = vmatprep.subr.mxu0 0.0
    %3095 = vmatpush2.msra.mxu0 %v3017
    %3096 = vmatprep.subr.mxu0 0.0
    %3097 = vmatpush2.msra.mxu0 %v3016
    %3098 = vmatprep.mubr.f32.mxu0 %v3026
    %3099 = vmatmul.mubr.f32.gmra.mxu0 %v2970
    %v3100 = vpop.f32.mrf.mxu0
    %v3101 = vadd.f32 %v3024, %v3100
    %v3102 = vpop.f32.mrf.mxu0
    %3103 = vmatprep.mubr.f32.mxu0 %v3029
    %3104 = vmatmul.mubr.f32.gmra.mxu0 %v2972
    %v3105 = vpop.f32.mrf.mxu0
    %v3106 = vadd.f32 %v3024, %v3105
    %v3107 = vpop.f32.mrf.mxu0
    %3108 = vmatprep.mubr.f32.mxu0 %v3032
    %3109 = vmatmul.mubr.f32.gmra.mxu0 %v2974
    %v3110 = vpop.f32.mrf.mxu0
    %v3111 = vadd.f32 %v3024, %v3110
    %v3112 = vpop.f32.mrf.mxu0
    %3113 = vdwg.mxu0
    %3114 = vst [vmem:[#allocation8] sm:$0xff] %v3101
    %3115 = vst [vmem:[#allocation8 + $0x8] sm:$0xff] %v3106
    %3116 = vst [vmem:[#allocation8 + $0x10] sm:$0xf] %v3111
    // Predicated region
    $region38: #{tpu_custom_call.1} parent=1 // pred_check
      _
    $region39: #{tpu_custom_call.1} parent=1 // pred_check_branch
      %3118 = sbr.rel (0) target = $region41
    $region40: #{tpu_custom_call.1} parent=1 // pred_region
      %s3120 = ssub.s32 384, 384
      %3121 = vsyncadd [#allocation4], %s3120
      %s3122 = sshll.u32 [#allocation7], 4
      %s3123 = int_to_ptr.vmem [resolvable:$true] %s3122
      %3128 = dma.vmem_to_hbm [thread:$0]  %s3123, 384, %s7, [#allocation4], 128, 128, 8
    $region41: #{tpu_custom_call.1} parent=1 // pred_fallthru
      _
    // Predicated region
    $region42: #{tpu_custom_call.1} parent=1 // pred_check
      _
    $region43: #{tpu_custom_call.1} parent=1 // pred_check_branch
      %3130 = sbr.rel (0) target = $region45
    $region44: #{tpu_custom_call.1} parent=1 // pred_region
      %s3132 = ssub.s32 384, 384
      %3133 = vsyncadd [#allocation9], %s3132
      %s3134 = sshll.u32 [#allocation8], 4
      %s3135 = int_to_ptr.vmem [resolvable:$true] %s3134
      %3140 = dma.vmem_to_hbm [thread:$0]  %s3135, 384, %s8, [#allocation9], 128, 128, 8
    $region45: #{tpu_custom_call.1} parent=1 // pred_fallthru
      _
    // Predicated region
    $region46: #{tpu_custom_call.1} parent=1 // pred_check
      _
    $region47: #{tpu_custom_call.1} parent=1 // pred_check_branch
      %3142 = sbr.rel (0) target = $region49
    $region48: #{tpu_custom_call.1} parent=1 // pred_region
      %3143 = dma.done [#allocation4], 384
    $region49: #{tpu_custom_call.1} parent=1 // pred_fallthru
      _
    // Predicated region
    $region50: #{tpu_custom_call.1} parent=1 // pred_check
      _
    $region51: #{tpu_custom_call.1} parent=1 // pred_check_branch
      %3145 = sbr.rel (0) target = $region53
    $region52: #{tpu_custom_call.1} parent=1 // pred_region
      %3146 = dma.done [#allocation9], 384
    $region53: #{tpu_custom_call.1} parent=1 // pred_fallthru
      _
    %3147 = vsyncpa [#allocation3], 1
    %3148 = vsyncpa [#allocation6], 1
    %3149 = vsyncpa [#allocation4], 1
    %3150 = vsyncpa [#allocation9], 1

</llo_original>
